<compile_context>
chip_gen: v7x
topology: tpu7x:2x2x1
jax: 0.10.0
libtpu: 0.0.40
codegen_flags: <defaults>
</compile_context>

<pallas_src>
import functools

import jax
import jax.numpy as jnp
from jax.experimental import pallas as pl
from jax.experimental.pallas import tpu as pltpu

NEG_INF = -1e30  # finite stand-in for -inf; exp underflows to exactly 0 in f32


def _const_spec(shape):
    """Whole-array block whose block index never changes across the grid
    (Pallas fetches it once and keeps it resident in VMEM)."""
    return pl.BlockSpec(shape, lambda t: (0,) * len(shape))


# ----------------------------- kernel helpers ------------------------------

def _lstm_cell(x, h, c, wih_t, whh_t, b, hidden):
    """One LSTM cell step, PyTorch gate order (i, f, g, o). 4H lanes == 128."""
    gates = (jnp.dot(x, wih_t, preferred_element_type=jnp.float32)
             + jnp.dot(h, whh_t, preferred_element_type=jnp.float32)
             + b)
    H = hidden
    i = jax.nn.sigmoid(gates[:, 0 * H:1 * H])
    f = jax.nn.sigmoid(gates[:, 1 * H:2 * H])
    g = jnp.tanh(gates[:, 2 * H:3 * H])
    o = jax.nn.sigmoid(gates[:, 3 * H:4 * H])
    c_new = f * c + i * g
    h_new = o * jnp.tanh(c_new)
    return h_new, c_new


# ----------------------------- encoder kernel ------------------------------

def _encoder_seq_kernel(embf_ref, embb_ref,
                        wihf_ref, whhf_ref, bf_ref,
                        wihb_ref, whhb_ref, bb_ref,
                        outf_ref, outb_ref, hf_o, cf_o, hb_o, cb_o,
                        hf_s, cf_s, hb_s, cb_s, *, hidden):
    t = pl.program_id(0)

    @pl.when(t == 0)
    def _():
        for s in (hf_s, cf_s, hb_s, cb_s):
            s[...] = jnp.zeros(s.shape, s.dtype)

    # forward direction (reads time step t)
    hf, cf = _lstm_cell(embf_ref[0], hf_s[...], cf_s[...],
                        wihf_ref[...], whhf_ref[...], bf_ref[...], hidden)
    # backward direction (reads time step S-1-t via its BlockSpec index_map)
    hb, cb = _lstm_cell(embb_ref[0], hb_s[...], cb_s[...],
                        wihb_ref[...], whhb_ref[...], bb_ref[...], hidden)

    hf_s[...] = hf
    cf_s[...] = cf
    hb_s[...] = hb
    cb_s[...] = cb

    outf_ref[0] = hf
    outb_ref[0] = hb            # stored in processing order; glue flips it back
    hf_o[...] = hf              # constant-index outputs: last step's value lands
    cf_o[...] = cf
    hb_o[...] = hb
    cb_o[...] = cb


def encoder_forward(p, src_seq):
    emb = p["enc_embedding"][src_seq]                            # (B, S, E)
    B, S, E = emb.shape
    H = p["enc_whh_f_t"].shape[0]
    emb_t = jnp.transpose(emb, (1, 0, 2)).astype(jnp.float32)    # (S, B, E)

    step_spec = pl.BlockSpec((1, B, E), lambda t: (t, 0, 0))
    rev_spec = pl.BlockSpec((1, B, E), lambda t: (S - 1 - t, 0, 0))
    out_spec = pl.BlockSpec((1, B, H), lambda t: (t, 0, 0))

    kernel = functools.partial(_encoder_seq_kernel, hidden=H)
    outf, outb_proc, hf, cf, hb, cb = pl.pallas_call(
        kernel,
        out_shape=(jax.ShapeDtypeStruct((S, B, H), jnp.float32),
                   jax.ShapeDtypeStruct((S, B, H), jnp.float32),
                   jax.ShapeDtypeStruct((B, H), jnp.float32),
                   jax.ShapeDtypeStruct((B, H), jnp.float32),
                   jax.ShapeDtypeStruct((B, H), jnp.float32),
                   jax.ShapeDtypeStruct((B, H), jnp.float32)),
        grid=(S,),
        in_specs=[step_spec, rev_spec,
                  _const_spec((E, 4 * H)), _const_spec((H, 4 * H)),
                  _const_spec((1, 4 * H)),
                  _const_spec((E, 4 * H)), _const_spec((H, 4 * H)),
                  _const_spec((1, 4 * H))],
        out_specs=(out_spec, out_spec,
                   _const_spec((B, H)), _const_spec((B, H)),
                   _const_spec((B, H)), _const_spec((B, H))),
        scratch_shapes=[pltpu.VMEM((B, H), jnp.float32),
                        pltpu.VMEM((B, H), jnp.float32),
                        pltpu.VMEM((B, H), jnp.float32),
                        pltpu.VMEM((B, H), jnp.float32)],
        compiler_params=pltpu.CompilerParams(
            dimension_semantics=("arbitrary",)),   # sequential recurrence
    )(emb_t, emb_t,
      p["enc_wih_f_t"], p["enc_whh_f_t"], p["enc_b_f"],
      p["enc_wih_b_t"], p["enc_whh_b_t"], p["enc_b_b"])

    outb = outb_proc[::-1]                                       # sequence order
    enc_out = jnp.concatenate([jnp.transpose(outf, (1, 0, 2)),
                               jnp.transpose(outb, (1, 0, 2))], axis=-1)  # (B,S,2H)
    enc_h = jnp.concatenate([hf, hb], axis=-1)                   # (B, 2H)
    enc_c = jnp.concatenate([cf, cb], axis=-1)                   # (B, 2H)
    return enc_out, enc_h, enc_c


# ----------------------------- decoder kernel ------------------------------

def _decoder_seq_kernel(emb_ref, val_ref, mask_ref, ench_ref, encc_ref,
                        brh_w_ref, brh_b_ref, brc_w_ref, brc_b_ref,
                        key_w_ref, wq_ref, we_ref,
                        wie_ref, wic_ref, whh_ref, b_ref,
                        pe_ref, ph_ref, pc_ref,
                        out_ref,
                        h_s, c_s, pk_s, *, hidden):
    t = pl.program_id(0)
    B, S, D2 = val_ref.shape
    H = hidden

    @pl.when(t == 0)
    def _():
        # bridge: h0/c0 = tanh(Linear(2H -> H)) of the final encoder states
        h_s[...] = jnp.tanh(
            jnp.dot(ench_ref[...], brh_w_ref[...],
                    preferred_element_type=jnp.float32) + brh_b_ref[...])
        c_s[...] = jnp.tanh(
            jnp.dot(encc_ref[...], brc_w_ref[...],
                    preferred_element_type=jnp.float32) + brc_b_ref[...])
        # proj_key = key_layer(encoder_output), computed once, kept in VMEM
        val2 = val_ref[...].reshape(B * S, D2)
        pk_s[...] = jnp.dot(val2, key_w_ref[...],
                            preferred_element_type=jnp.float32).reshape(B, S, H)

    h = h_s[...]
    c = c_s[...]
    prev = emb_ref[0]                                            # (B, E)

    # ---- Bahdanau attention (query proj, tanh energy, masked softmax, context)
    q = jnp.dot(h, wq_ref[...], preferred_element_type=jnp.float32)   # (B, H)
    e = jnp.tanh(q[:, None, :] + pk_s[...])                           # (B, S, H)
    scores = jnp.sum(e * we_ref[...][None, :, :], axis=-1)            # (B, S)
    scores = jnp.where(mask_ref[...] > 0.5, scores, NEG_INF)
    m = jnp.max(scores, axis=-1, keepdims=True)
    pexp = jnp.exp(scores - m)
    alphas = pexp / jnp.sum(pexp, axis=-1, keepdims=True)
    ctx = jnp.sum(alphas[:, :, None] * val_ref[...], axis=1)          # (B, 2H)

    # ---- decoder LSTM step on [prev_embed, context] (concat avoided: split W_ih)
    gates = (jnp.dot(prev, wie_ref[...], preferred_element_type=jnp.float32)
             + jnp.dot(ctx, wic_ref[...], preferred_element_type=jnp.float32)
             + jnp.dot(h, whh_ref[...], preferred_element_type=jnp.float32)
             + b_ref[...])
    i = jax.nn.sigmoid(gates[:, 0 * H:1 * H])
    f = jax.nn.sigmoid(gates[:, 1 * H:2 * H])
    g = jnp.tanh(gates[:, 2 * H:3 * H])
    o = jax.nn.sigmoid(gates[:, 3 * H:4 * H])
    c_new = f * c + i * g
    h_new = o * jnp.tanh(c_new)
    h_s[...] = h_new
    c_s[...] = c_new

    # ---- pre_output_layer on [prev_embed, h_new, context] (split W, no bias)
    # TODO(synk): nn.Dropout is identity here (deterministic / eval-mode semantics).
    out_ref[0] = (jnp.dot(prev, pe_ref[...], preferred_element_type=jnp.float32)
                  + jnp.dot(h_new, ph_ref[...], preferred_element_type=jnp.float32)
                  + jnp.dot(ctx, pc_ref[...], preferred_element_type=jnp.float32))


def decoder_forward(p, tgt_seq, enc_out, enc_h, enc_c, src_pos):
    B, T = tgt_seq.shape
    S = enc_out.shape[1]
    D2 = enc_out.shape[-1]
    H = p["dec_whh_t"].shape[0]
    E = p["dec_embedding"].shape[1]

    tgt_emb = p["dec_embedding"][tgt_seq]                          # (B, T, E)
    emb_t = jnp.transpose(tgt_emb, (1, 0, 2)).astype(jnp.float32)  # (T, B, E)
    mask_f = (src_pos != 0).astype(jnp.float32)                    # (B, S)

    kernel = functools.partial(_decoder_seq_kernel, hidden=H)
    dec_out = pl.pallas_call(
        kernel,
        out_shape=jax.ShapeDtypeStruct((T, B, H), jnp.float32),
        grid=(T,),
        in_specs=[pl.BlockSpec((1, B, E), lambda t: (t, 0, 0)),
                  _const_spec((B, S, D2)), _const_spec((B, S)),
                  _const_spec((B, D2)), _const_spec((B, D2)),
                  _const_spec((D2, H)), _const_spec((1, H)),
                  _const_spec((D2, H)), _const_spec((1, H)),
                  _const_spec((D2, H)),
                  _const_spec((H, H)), _const_spec((1, H)),
                  _const_spec((E, 4 * H)), _const_spec((D2, 4 * H)),
                  _const_spec((H, 4 * H)), _const_spec((1, 4 * H)),
                  _const_spec((E, H)), _const_spec((H, H)), _const_spec((D2, H))],
        out_specs=pl.BlockSpec((1, B, H), lambda t: (t, 0, 0)),
        scratch_shapes=[pltpu.VMEM((B, H), jnp.float32),
                        pltpu.VMEM((B, H), jnp.float32),
                        pltpu.VMEM((B, S, H), jnp.float32)],
        compiler_params=pltpu.CompilerParams(
            dimension_semantics=("arbitrary",)),   # sequential recurrence
    )(emb_t, enc_out, mask_f, enc_h, enc_c,
      p["bridge_h_wt"], p["bridge_h_b"], p["bridge_c_wt"], p["bridge_c_b"],
      p["attn_key_wt"], p["attn_query_wt"], p["attn_energy"],
      p["dec_wih_e_t"], p["dec_wih_c_t"], p["dec_whh_t"], p["dec_b"],
      p["pre_e_t"], p["pre_h_t"], p["pre_c_t"])

    return jnp.transpose(dec_out, (1, 0, 2))                       # (B, T, H)


# ------------------------- fc + log_softmax kernel --------------------------

def _fc_logsoftmax_kernel(x_ref, wt_ref, o_ref, *, valid):
    logits = jnp.dot(x_ref[...], wt_ref[...], preferred_element_type=jnp.float32)
    col = jax.lax.broadcasted_iota(jnp.int32, logits.shape, 1)
    logits = jnp.where(col < valid, logits, NEG_INF)   # mask lane padding
    m = jnp.max(logits, axis=-1, keepdims=True)
    z = logits - m
    lse = jnp.log(jnp.sum(jnp.exp(z), axis=-1, keepdims=True))
    o_ref[...] = z - lse


def fc_log_softmax(x, fc_wt_pad, valid):
    M, H = x.shape
    Vp = fc_wt_pad.shape[1]
    kernel = functools.partial(_fc_logsoftmax_kernel, valid=valid)
    out = pl.pallas_call(
        kernel,
        out_shape=jax.ShapeDtypeStruct((M, Vp), jnp.float32),
        grid=(1,),
        in_specs=[pl.BlockSpec((M, H), lambda i: (0, 0)),
                  pl.BlockSpec((H, Vp), lambda i: (0, 0))],
        out_specs=pl.BlockSpec((M, Vp), lambda i: (0, 0)),
    )(x.astype(jnp.float32), fc_wt_pad)
    return out[:, :valid]


# ----------------------------- full forward (jitted) ------------------------

@jax.jit
def encoder_decoder_forward(p, src_seq, src_pos, tgt_seq, tgt_pos):
    tgt_in = tgt_seq[:, :-1]
    del tgt_pos  # tgt_pos[:, :-1] is unused by the forward compute
    enc_out, enc_h, enc_c = encoder_forward(p, src_seq)
    dec_out = decoder_forward(p, tgt_in, enc_out, enc_h, enc_c, src_pos)  # (B,T-1,H)
    B, Tm1, H = dec_out.shape
    V = p["dec_embedding"].shape[0]
    return fc_log_softmax(dec_out.reshape(B * Tm1, H), p["fc_wt_pad"], V)


# ----------------------------- parameter handling ---------------------------

def init_params(key, src_vocab, tgt_vocab, embedding_size, hidden_size):
    E, H = embedding_size, hidden_size
    names_shapes = [
        ("attn_query_w", (H, H)),
        ("attn_key_w", (H, 2 * H)),
        ("attn_energy_w", (1, H)),
        ("enc_embedding", (src_vocab, E)),
        ("enc_w_ih_f", (4 * H, E)), ("enc_w_hh_f", (4 * H, H)),
        ("enc_b_ih_f", (4 * H,)), ("enc_b_hh_f", (4 * H,)),
        ("enc_w_ih_b", (4 * H, E)), ("enc_w_hh_b", (4 * H, H)),
        ("enc_b_ih_b", (4 * H,)), ("enc_b_hh_b", (4 * H,)),
        ("dec_embedding", (tgt_vocab, E)),
        ("dec_w_ih", (4 * H, E + 2 * H)), ("dec_w_hh", (4 * H, H)),
        ("dec_b_ih", (4 * H,)), ("dec_b_hh", (4 * H,)),
        ("bridge_h_w", (H, 2 * H)), ("bridge_h_b", (H,)),
        ("bridge_c_w", (H, 2 * H)), ("bridge_c_b", (H,)),
        ("pre_output_w", (H, E + H + 2 * H)),
        ("fc_w", (tgt_vocab, H)),
    ]
    keys = jax.random.split(key, len(names_shapes))
    params = {
        name: 0.1 * jax.random.normal(k, shape, dtype=jnp.float32)
        for (name, shape), k in zip(names_shapes, keys)
    }
    params["hidden_size"] = H
    params["embedding_size"] = E
    return params


def prepare_params(raw):
    """One-time prep: transpose to MXU-ready layout, fuse LSTM biases, split
    concat-weights so kernels avoid in-kernel lane concatenation, pad fc to a
    lane-dense (multiple-of-128) vocab."""
    H = raw["hidden_size"]
    E = raw["embedding_size"]
    V = raw["dec_embedding"].shape[0]
    Vp = ((V + 127) // 128) * 128
    f32 = jnp.float32
    p = {
        "enc_embedding": raw["enc_embedding"].astype(f32),
        "dec_embedding": raw["dec_embedding"].astype(f32),
        "enc_wih_f_t": raw["enc_w_ih_f"].T.astype(f32),
        "enc_whh_f_t": raw["enc_w_hh_f"].T.astype(f32),
        "enc_b_f": (raw["enc_b_ih_f"] + raw["enc_b_hh_f"]).reshape(1, 4 * H).astype(f32),
        "enc_wih_b_t": raw["enc_w_ih_b"].T.astype(f32),
        "enc_whh_b_t": raw["enc_w_hh_b"].T.astype(f32),
        "enc_b_b": (raw["enc_b_ih_b"] + raw["enc_b_hh_b"]).reshape(1, 4 * H).astype(f32),
        "bridge_h_wt": raw["bridge_h_w"].T.astype(f32),
        "bridge_h_b": raw["bridge_h_b"].reshape(1, H).astype(f32),
        "bridge_c_wt": raw["bridge_c_w"].T.astype(f32),
        "bridge_c_b": raw["bridge_c_b"].reshape(1, H).astype(f32),
        "attn_key_wt": raw["attn_key_w"].T.astype(f32),              # (2H, H)
        "attn_query_wt": raw["attn_query_w"].T.astype(f32),          # (H, H)
        "attn_energy": raw["attn_energy_w"].reshape(1, H).astype(f32),
        "dec_wih_e_t": raw["dec_w_ih"][:, :E].T.astype(f32),         # (E, 4H)
        "dec_wih_c_t": raw["dec_w_ih"][:, E:].T.astype(f32),         # (2H, 4H)
        "dec_whh_t": raw["dec_w_hh"].T.astype(f32),                  # (H, 4H)
        "dec_b": (raw["dec_b_ih"] + raw["dec_b_hh"]).reshape(1, 4 * H).astype(f32),
        "pre_e_t": raw["pre_output_w"][:, :E].T.astype(f32),         # (E, H)
        "pre_h_t": raw["pre_output_w"][:, E:E + H].T.astype(f32),    # (H, H)
        "pre_c_t": raw["pre_output_w"][:, E + H:].T.astype(f32),     # (2H, H)
        "fc_wt_pad": jnp.zeros((H, Vp), f32).at[:, :V].set(raw["fc_w"].T.astype(f32)),
    }
    return p


# ----------------------------- main ----------------------------------------

if __name__ == "__main__":
    B, S_SRC, T_TGT = 2, 8, 9
    E, H = 32, 32
    V_SRC, V_TGT = 50, 40

    root = jax.random.PRNGKey(0)
    k_params, k_src, k_tgt = jax.random.split(root, 3)
    raw_params = init_params(k_params, V_SRC, V_TGT, E, H)
    params = prepare_params(raw_params)

    src_seq = jax.random.randint(k_src, (B, S_SRC), 0, V_SRC, dtype=jnp.int32)
    # src_pos: 1-based positions, 0 = padding (row 1 has length 6)
    lengths = jnp.array([S_SRC, 6], dtype=jnp.int32)
    pos = jnp.arange(1, S_SRC + 1, dtype=jnp.int32)[None, :]
    src_pos = jnp.where(pos <= lengths[:, None], pos, 0)

    tgt_seq = jax.random.randint(k_tgt, (B, T_TGT), 0, V_TGT, dtype=jnp.int32)
    tgt_pos = jnp.broadcast_to(
        jnp.arange(1, T_TGT + 1, dtype=jnp.int32)[None, :], (B, T_TGT))

    out = encoder_decoder_forward(params, src_seq, src_pos, tgt_seq, tgt_pos)
    out = jax.block_until_ready(out)

    assert out.shape == (B * (T_TGT - 1), V_TGT), out.shape
    assert bool(jnp.isfinite(out).all()), "non-finite values in output"
    # rows of log_softmax should sum (in prob space) to ~1
    probs_sum = jnp.exp(out).sum(axis=-1)
    assert bool(jnp.allclose(probs_sum, 1.0, atol=1e-4)), probs_sum

    print("KERNEL_OK")
</pallas_src>

<mosaic_0001>
module attributes {stable_mosaic.version = 11 : i64} {
  func.func @_decoder_seq_kernel(%arg0: i32, %arg1: memref<1x2x32xf32, #tpu.memory_space<vmem>>, %arg2: memref<2x8x64xf32, #tpu.memory_space<vmem>>, %arg3: memref<2x8xf32, #tpu.memory_space<vmem>>, %arg4: memref<2x64xf32, #tpu.memory_space<vmem>>, %arg5: memref<2x64xf32, #tpu.memory_space<vmem>>, %arg6: memref<64x32xf32, #tpu.memory_space<vmem>>, %arg7: memref<1x32xf32, #tpu.memory_space<vmem>>, %arg8: memref<64x32xf32, #tpu.memory_space<vmem>>, %arg9: memref<1x32xf32, #tpu.memory_space<vmem>>, %arg10: memref<64x32xf32, #tpu.memory_space<vmem>>, %arg11: memref<32x32xf32, #tpu.memory_space<vmem>>, %arg12: memref<1x32xf32, #tpu.memory_space<vmem>>, %arg13: memref<32x128xf32, #tpu.memory_space<vmem>>, %arg14: memref<64x128xf32, #tpu.memory_space<vmem>>, %arg15: memref<32x128xf32, #tpu.memory_space<vmem>>, %arg16: memref<1x128xf32, #tpu.memory_space<vmem>>, %arg17: memref<32x32xf32, #tpu.memory_space<vmem>>, %arg18: memref<32x32xf32, #tpu.memory_space<vmem>>, %arg19: memref<64x32xf32, #tpu.memory_space<vmem>>, %arg20: memref<1x2x32xf32, #tpu.memory_space<vmem>>, %arg21: memref<2x32xf32, #tpu.memory_space<vmem>>, %arg22: memref<2x32xf32, #tpu.memory_space<vmem>>, %arg23: memref<2x8x32xf32, #tpu.memory_space<vmem>>) attributes {dimension_semantics = [#tpu.dimension_semantics<arbitrary>], iteration_bounds = array<i64: 8>, scalar_prefetch = 0 : i64, scratch_operands = 3 : i64, tpu.core_type = #tpu.core_type<tc>, window_params = [{transform_indices = @transform_0, window_bounds = array<i64: 1, 2, 32>}, {pipeline_mode = #tpu.pipeline_mode<synchronous>, transform_indices = @transform_1, window_bounds = array<i64: 2, 8, 64>}, {pipeline_mode = #tpu.pipeline_mode<synchronous>, transform_indices = @transform_2, window_bounds = array<i64: 2, 8>}, {pipeline_mode = #tpu.pipeline_mode<synchronous>, transform_indices = @transform_3, window_bounds = array<i64: 2, 64>}, {pipeline_mode = #tpu.pipeline_mode<synchronous>, transform_indices = @transform_4, window_bounds = array<i64: 2, 64>}, {pipeline_mode = #tpu.pipeline_mode<synchronous>, transform_indices = @transform_5, window_bounds = array<i64: 64, 32>}, {pipeline_mode = #tpu.pipeline_mode<synchronous>, transform_indices = @transform_6, window_bounds = array<i64: 1, 32>}, {pipeline_mode = #tpu.pipeline_mode<synchronous>, transform_indices = @transform_7, window_bounds = array<i64: 64, 32>}, {pipeline_mode = #tpu.pipeline_mode<synchronous>, transform_indices = @transform_8, window_bounds = array<i64: 1, 32>}, {pipeline_mode = #tpu.pipeline_mode<synchronous>, transform_indices = @transform_9, window_bounds = array<i64: 64, 32>}, {pipeline_mode = #tpu.pipeline_mode<synchronous>, transform_indices = @transform_10, window_bounds = array<i64: 32, 32>}, {pipeline_mode = #tpu.pipeline_mode<synchronous>, transform_indices = @transform_11, window_bounds = array<i64: 1, 32>}, {pipeline_mode = #tpu.pipeline_mode<synchronous>, transform_indices = @transform_12, window_bounds = array<i64: 32, 128>}, {pipeline_mode = #tpu.pipeline_mode<synchronous>, transform_indices = @transform_13, window_bounds = array<i64: 64, 128>}, {pipeline_mode = #tpu.pipeline_mode<synchronous>, transform_indices = @transform_14, window_bounds = array<i64: 32, 128>}, {pipeline_mode = #tpu.pipeline_mode<synchronous>, transform_indices = @transform_15, window_bounds = array<i64: 1, 128>}, {pipeline_mode = #tpu.pipeline_mode<synchronous>, transform_indices = @transform_16, window_bounds = array<i64: 32, 32>}, {pipeline_mode = #tpu.pipeline_mode<synchronous>, transform_indices = @transform_17, window_bounds = array<i64: 32, 32>}, {pipeline_mode = #tpu.pipeline_mode<synchronous>, transform_indices = @transform_18, window_bounds = array<i64: 64, 32>}, {transform_indices = @transform_19, window_bounds = array<i64: 1, 2, 32>}]} {
    %c0_i32 = arith.constant 0 : i32
    %0 = arith.cmpi eq, %arg0, %c0_i32 : i32
    %1 = arith.extui %0 : i1 to i32
    %c0_i32_0 = arith.constant 0 : i32
    %2 = arith.cmpi ne, %1, %c0_i32_0 : i32
    scf.if %2 {
      %c0_55 = arith.constant 0 : index
      %c0_56 = arith.constant 0 : index
      %87 = vector.load %arg4[%c0_55, %c0_56] : memref<2x64xf32, #tpu.memory_space<vmem>>, vector<2x64xf32>
      %c0_57 = arith.constant 0 : index
      %c0_58 = arith.constant 0 : index
      %88 = vector.load %arg6[%c0_57, %c0_58] : memref<64x32xf32, #tpu.memory_space<vmem>>, vector<64x32xf32>
      %cst_59 = arith.constant dense<0.000000e+00> : vector<2x32xf32>
      %89 = tpu.matmul %87, %88, %cst_59 {dimension_numbers = #tpu.dot_dimension_numbers<[1], [0], [0], [1], [0, 0, 1, 1], [], []>} : vector<2x64xf32>, vector<64x32xf32>, vector<2x32xf32> -> vector<2x32xf32>
      %c0_60 = arith.constant 0 : index
      %c0_61 = arith.constant 0 : index
      %90 = vector.load %arg7[%c0_60, %c0_61] : memref<1x32xf32, #tpu.memory_space<vmem>>, vector<1x32xf32>
      %91 = vector.broadcast %90 : vector<1x32xf32> to vector<2x32xf32>
      %92 = arith.addf %89, %91 : vector<2x32xf32>
      %93 = math.tanh %92 : vector<2x32xf32>
      %c0_62 = arith.constant 0 : index
      %c0_63 = arith.constant 0 : index
      %94 = vector.load %arg21[%c0_62, %c0_63] : memref<2x32xf32, #tpu.memory_space<vmem>>, vector<2x32xf32>
      tpu.vector_store %arg21[%c0_62, %c0_63], %93 {strides = array<i32>} : memref<2x32xf32, #tpu.memory_space<vmem>>, vector<2x32xf32>,
      %c0_64 = arith.constant 0 : index
      %c0_65 = arith.constant 0 : index
      %95 = vector.load %arg5[%c0_64, %c0_65] : memref<2x64xf32, #tpu.memory_space<vmem>>, vector<2x64xf32>
      %c0_66 = arith.constant 0 : index
      %c0_67 = arith.constant 0 : index
      %96 = vector.load %arg8[%c0_66, %c0_67] : memref<64x32xf32, #tpu.memory_space<vmem>>, vector<64x32xf32>
      %cst_68 = arith.constant dense<0.000000e+00> : vector<2x32xf32>
      %97 = tpu.matmul %95, %96, %cst_68 {dimension_numbers = #tpu.dot_dimension_numbers<[1], [0], [0], [1], [0, 0, 1, 1], [], []>} : vector<2x64xf32>, vector<64x32xf32>, vector<2x32xf32> -> vector<2x32xf32>
      %c0_69 = arith.constant 0 : index
      %c0_70 = arith.constant 0 : index
      %98 = vector.load %arg9[%c0_69, %c0_70] : memref<1x32xf32, #tpu.memory_space<vmem>>, vector<1x32xf32>
      %99 = vector.broadcast %98 : vector<1x32xf32> to vector<2x32xf32>
      %100 = arith.addf %97, %99 : vector<2x32xf32>
      %101 = math.tanh %100 : vector<2x32xf32>
      %c0_71 = arith.constant 0 : index
      %c0_72 = arith.constant 0 : index
      %102 = vector.load %arg22[%c0_71, %c0_72] : memref<2x32xf32, #tpu.memory_space<vmem>>, vector<2x32xf32>
      tpu.vector_store %arg22[%c0_71, %c0_72], %101 {strides = array<i32>} : memref<2x32xf32, #tpu.memory_space<vmem>>, vector<2x32xf32>,
      %c0_73 = arith.constant 0 : index
      %c0_74 = arith.constant 0 : index
      %c0_75 = arith.constant 0 : index
      %103 = vector.load %arg2[%c0_73, %c0_74, %c0_75] : memref<2x8x64xf32, #tpu.memory_space<vmem>>, vector<2x8x64xf32>
      %104 = vector.shape_cast %103 : vector<2x8x64xf32> to vector<16x64xf32>
      %c0_76 = arith.constant 0 : index
      %c0_77 = arith.constant 0 : index
      %105 = vector.load %arg10[%c0_76, %c0_77] : memref<64x32xf32, #tpu.memory_space<vmem>>, vector<64x32xf32>
      %cst_78 = arith.constant dense<0.000000e+00> : vector<16x32xf32>
      %106 = tpu.matmul %104, %105, %cst_78 {dimension_numbers = #tpu.dot_dimension_numbers<[1], [0], [0], [1], [0, 0, 1, 1], [], []>} : vector<16x64xf32>, vector<64x32xf32>, vector<16x32xf32> -> vector<16x32xf32>
      %107 = vector.shape_cast %106 : vector<16x32xf32> to vector<2x8x32xf32>
      %c0_79 = arith.constant 0 : index
      %c0_80 = arith.constant 0 : index
      %c0_81 = arith.constant 0 : index
      %108 = vector.load %arg23[%c0_79, %c0_80, %c0_81] : memref<2x8x32xf32, #tpu.memory_space<vmem>>, vector<2x8x32xf32>
      tpu.vector_store %arg23[%c0_79, %c0_80, %c0_81], %107 {strides = array<i32>} : memref<2x8x32xf32, #tpu.memory_space<vmem>>, vector<2x8x32xf32>,
    } else {
    }
    %c0 = arith.constant 0 : index
    %c0_1 = arith.constant 0 : index
    %3 = vector.load %arg21[%c0, %c0_1] : memref<2x32xf32, #tpu.memory_space<vmem>>, vector<2x32xf32>
    %c0_2 = arith.constant 0 : index
    %c0_3 = arith.constant 0 : index
    %4 = vector.load %arg22[%c0_2, %c0_3] : memref<2x32xf32, #tpu.memory_space<vmem>>, vector<2x32xf32>
    %c0_4 = arith.constant 0 : index
    %c0_5 = arith.constant 0 : index
    %c0_6 = arith.constant 0 : index
    %5 = vector.load %arg1[%c0_4, %c0_5, %c0_6] : memref<1x2x32xf32, #tpu.memory_space<vmem>>, vector<1x2x32xf32>
    %6 = vector.shape_cast %5 : vector<1x2x32xf32> to vector<2x32xf32>
    %c0_7 = arith.constant 0 : index
    %c0_8 = arith.constant 0 : index
    %7 = vector.load %arg11[%c0_7, %c0_8] : memref<32x32xf32, #tpu.memory_space<vmem>>, vector<32x32xf32>
    %cst = arith.constant dense<0.000000e+00> : vector<2x32xf32>
    %8 = tpu.matmul %3, %7, %cst {dimension_numbers = #tpu.dot_dimension_numbers<[1], [0], [0], [1], [0, 0, 1, 1], [], []>} : vector<2x32xf32>, vector<32x32xf32>, vector<2x32xf32> -> vector<2x32xf32>
    %9 = vector.shape_cast %8 : vector<2x32xf32> to vector<2x1x32xf32>
    %c0_9 = arith.constant 0 : index
    %c0_10 = arith.constant 0 : index
    %c0_11 = arith.constant 0 : index
    %10 = vector.load %arg23[%c0_9, %c0_10, %c0_11] : memref<2x8x32xf32, #tpu.memory_space<vmem>>, vector<2x8x32xf32>
    %11 = vector.broadcast %9 : vector<2x1x32xf32> to vector<2x8x32xf32>
    %12 = arith.addf %11, %10 : vector<2x8x32xf32>
    %13 = math.tanh %12 : vector<2x8x32xf32>
    %c0_12 = arith.constant 0 : index
    %c0_13 = arith.constant 0 : index
    %14 = vector.load %arg12[%c0_12, %c0_13] : memref<1x32xf32, #tpu.memory_space<vmem>>, vector<1x32xf32>
    %15 = vector.shape_cast %14 : vector<1x32xf32> to vector<1x1x32xf32>
    %16 = vector.broadcast %15 : vector<1x1x32xf32> to vector<2x8x32xf32>
    %17 = arith.mulf %13, %16 : vector<2x8x32xf32>
    %cst_14 = arith.constant dense<0.000000e+00> : vector<2x8xf32>
    %18 = vector.multi_reduction <add>, %17, %cst_14 [2] : vector<2x8x32xf32> to vector<2x8xf32>
    %c0_15 = arith.constant 0 : index
    %c0_16 = arith.constant 0 : index
    %19 = vector.load %arg3[%c0_15, %c0_16] : memref<2x8xf32, #tpu.memory_space<vmem>>, vector<2x8xf32>
    %cst_17 = arith.constant 5.000000e-01 : f32
    %20 = vector.broadcast %cst_17 : f32 to vector<2x8xf32>
    %21 = arith.cmpf ogt, %19, %20 : vector<2x8xf32>
    %cst_18 = arith.constant -1.000000e+30 : f32
    %22 = vector.broadcast %cst_18 : f32 to vector<2x8xf32>
    %23 = arith.select %21, %18, %22 : vector<2x8xi1>, vector<2x8xf32>
    %cst_19 = arith.constant dense<0xFF800000> : vector<2xf32>
    %24 = vector.multi_reduction <maximumf>, %23, %cst_19 [1] : vector<2x8xf32> to vector<2xf32>
    %25 = vector.shape_cast %24 : vector<2xf32> to vector<2x1xf32>
    %26 = vector.broadcast %25 : vector<2x1xf32> to vector<2x8xf32>
    %27 = arith.subf %23, %26 : vector<2x8xf32>
    %28 = math.exp %27 : vector<2x8xf32>
    %cst_20 = arith.constant dense<0.000000e+00> : vector<2xf32>
    %29 = vector.multi_reduction <add>, %28, %cst_20 [1] : vector<2x8xf32> to vector<2xf32>
    %30 = vector.shape_cast %29 : vector<2xf32> to vector<2x1xf32>
    %31 = vector.broadcast %30 : vector<2x1xf32> to vector<2x8xf32>
    %32 = arith.divf %28, %31 : vector<2x8xf32>
    %33 = vector.shape_cast %32 : vector<2x8xf32> to vector<2x8x1xf32>
    %c0_21 = arith.constant 0 : index
    %c0_22 = arith.constant 0 : index
    %c0_23 = arith.constant 0 : index
    %34 = vector.load %arg2[%c0_21, %c0_22, %c0_23] : memref<2x8x64xf32, #tpu.memory_space<vmem>>, vector<2x8x64xf32>
    %35 = vector.broadcast %33 : vector<2x8x1xf32> to vector<2x8x64xf32>
    %36 = arith.mulf %35, %34 : vector<2x8x64xf32>
    %cst_24 = arith.constant dense<0.000000e+00> : vector<2x64xf32>
    %37 = vector.multi_reduction <add>, %36, %cst_24 [1] : vector<2x8x64xf32> to vector<2x64xf32>
    %c0_25 = arith.constant 0 : index
    %c0_26 = arith.constant 0 : index
    %38 = vector.load %arg13[%c0_25, %c0_26] : memref<32x128xf32, #tpu.memory_space<vmem>>, vector<32x128xf32>
    %cst_27 = arith.constant dense<0.000000e+00> : vector<2x128xf32>
    %39 = tpu.matmul %6, %38, %cst_27 {dimension_numbers = #tpu.dot_dimension_numbers<[1], [0], [0], [1], [0, 0, 1, 1], [], []>} : vector<2x32xf32>, vector<32x128xf32>, vector<2x128xf32> -> vector<2x128xf32>
    %c0_28 = arith.constant 0 : index
    %c0_29 = arith.constant 0 : index
    %40 = vector.load %arg14[%c0_28, %c0_29] : memref<64x128xf32, #tpu.memory_space<vmem>>, vector<64x128xf32>
    %cst_30 = arith.constant dense<0.000000e+00> : vector<2x128xf32>
    %41 = tpu.matmul %37, %40, %cst_30 {dimension_numbers = #tpu.dot_dimension_numbers<[1], [0], [0], [1], [0, 0, 1, 1], [], []>} : vector<2x64xf32>, vector<64x128xf32>, vector<2x128xf32> -> vector<2x128xf32>
    %42 = arith.addf %39, %41 : vector<2x128xf32>
    %c0_31 = arith.constant 0 : index
    %c0_32 = arith.constant 0 : index
    %43 = vector.load %arg15[%c0_31, %c0_32] : memref<32x128xf32, #tpu.memory_space<vmem>>, vector<32x128xf32>
    %cst_33 = arith.constant dense<0.000000e+00> : vector<2x128xf32>
    %44 = tpu.matmul %3, %43, %cst_33 {dimension_numbers = #tpu.dot_dimension_numbers<[1], [0], [0], [1], [0, 0, 1, 1], [], []>} : vector<2x32xf32>, vector<32x128xf32>, vector<2x128xf32> -> vector<2x128xf32>
    %45 = arith.addf %42, %44 : vector<2x128xf32>
    %c0_34 = arith.constant 0 : index
    %c0_35 = arith.constant 0 : index
    %46 = vector.load %arg16[%c0_34, %c0_35] : memref<1x128xf32, #tpu.memory_space<vmem>>, vector<1x128xf32>
    %47 = vector.broadcast %46 : vector<1x128xf32> to vector<2x128xf32>
    %48 = arith.addf %45, %47 : vector<2x128xf32>
    %49 = vector.extract_strided_slice %48 {offsets = [0, 0], sizes = [2, 32], strides = [1, 1]} : vector<2x128xf32> to vector<2x32xf32>
    %50 = arith.negf %49 : vector<2x32xf32>
    %51 = math.exp %50 : vector<2x32xf32>
    %cst_36 = arith.constant 1.000000e+00 : f32
    %52 = vector.broadcast %cst_36 : f32 to vector<2x32xf32>
    %53 = arith.addf %52, %51 : vector<2x32xf32>
    %54 = arith.divf %52, %53 : vector<2x32xf32>
    %55 = vector.extract_strided_slice %48 {offsets = [0, 32], sizes = [2, 32], strides = [1, 1]} : vector<2x128xf32> to vector<2x32xf32>
    %56 = arith.negf %55 : vector<2x32xf32>
    %57 = math.exp %56 : vector<2x32xf32>
    %cst_37 = arith.constant 1.000000e+00 : f32
    %58 = vector.broadcast %cst_37 : f32 to vector<2x32xf32>
    %59 = arith.addf %58, %57 : vector<2x32xf32>
    %60 = arith.divf %58, %59 : vector<2x32xf32>
    %61 = vector.extract_strided_slice %48 {offsets = [0, 64], sizes = [2, 32], strides = [1, 1]} : vector<2x128xf32> to vector<2x32xf32>
    %62 = math.tanh %61 : vector<2x32xf32>
    %63 = vector.extract_strided_slice %48 {offsets = [0, 96], sizes = [2, 32], strides = [1, 1]} : vector<2x128xf32> to vector<2x32xf32>
    %64 = arith.negf %63 : vector<2x32xf32>
    %65 = math.exp %64 : vector<2x32xf32>
    %cst_38 = arith.constant 1.000000e+00 : f32
    %66 = vector.broadcast %cst_38 : f32 to vector<2x32xf32>
    %67 = arith.addf %66, %65 : vector<2x32xf32>
    %68 = arith.divf %66, %67 : vector<2x32xf32>
    %69 = arith.mulf %60, %4 : vector<2x32xf32>
    %70 = arith.mulf %54, %62 : vector<2x32xf32>
    %71 = arith.addf %69, %70 : vector<2x32xf32>
    %72 = math.tanh %71 : vector<2x32xf32>
    %73 = arith.mulf %68, %72 : vector<2x32xf32>
    %c0_39 = arith.constant 0 : index
    %c0_40 = arith.constant 0 : index
    %74 = vector.load %arg21[%c0_39, %c0_40] : memref<2x32xf32, #tpu.memory_space<vmem>>, vector<2x32xf32>
    tpu.vector_store %arg21[%c0_39, %c0_40], %73 {strides = array<i32>} : memref<2x32xf32, #tpu.memory_space<vmem>>, vector<2x32xf32>,
    %c0_41 = arith.constant 0 : index
    %c0_42 = arith.constant 0 : index
    %75 = vector.load %arg22[%c0_41, %c0_42] : memref<2x32xf32, #tpu.memory_space<vmem>>, vector<2x32xf32>
    tpu.vector_store %arg22[%c0_41, %c0_42], %71 {strides = array<i32>} : memref<2x32xf32, #tpu.memory_space<vmem>>, vector<2x32xf32>,
    %c0_43 = arith.constant 0 : index
    %c0_44 = arith.constant 0 : index
    %76 = vector.load %arg17[%c0_43, %c0_44] : memref<32x32xf32, #tpu.memory_space<vmem>>, vector<32x32xf32>
    %cst_45 = arith.constant dense<0.000000e+00> : vector<2x32xf32>
    %77 = tpu.matmul %6, %76, %cst_45 {dimension_numbers = #tpu.dot_dimension_numbers<[1], [0], [0], [1], [0, 0, 1, 1], [], []>} : vector<2x32xf32>, vector<32x32xf32>, vector<2x32xf32> -> vector<2x32xf32>
    %c0_46 = arith.constant 0 : index
    %c0_47 = arith.constant 0 : index
    %78 = vector.load %arg18[%c0_46, %c0_47] : memref<32x32xf32, #tpu.memory_space<vmem>>, vector<32x32xf32>
    %cst_48 = arith.constant dense<0.000000e+00> : vector<2x32xf32>
    %79 = tpu.matmul %73, %78, %cst_48 {dimension_numbers = #tpu.dot_dimension_numbers<[1], [0], [0], [1], [0, 0, 1, 1], [], []>} : vector<2x32xf32>, vector<32x32xf32>, vector<2x32xf32> -> vector<2x32xf32>
    %80 = arith.addf %77, %79 : vector<2x32xf32>
    %c0_49 = arith.constant 0 : index
    %c0_50 = arith.constant 0 : index
    %81 = vector.load %arg19[%c0_49, %c0_50] : memref<64x32xf32, #tpu.memory_space<vmem>>, vector<64x32xf32>
    %cst_51 = arith.constant dense<0.000000e+00> : vector<2x32xf32>
    %82 = tpu.matmul %37, %81, %cst_51 {dimension_numbers = #tpu.dot_dimension_numbers<[1], [0], [0], [1], [0, 0, 1, 1], [], []>} : vector<2x64xf32>, vector<64x32xf32>, vector<2x32xf32> -> vector<2x32xf32>
    %83 = arith.addf %80, %82 : vector<2x32xf32>
    %c0_52 = arith.constant 0 : index
    %c0_53 = arith.constant 0 : index
    %c0_54 = arith.constant 0 : index
    %84 = vector.load %arg20[%c0_52, %c0_53, %c0_54] : memref<1x2x32xf32, #tpu.memory_space<vmem>>, vector<1x2x32xf32>
    %85 = vector.shape_cast %84 : vector<1x2x32xf32> to vector<2x32xf32>
    %86 = vector.shape_cast %83 : vector<2x32xf32> to vector<1x2x32xf32>
    tpu.vector_store %arg20[%c0_52, %c0_53, %c0_54], %86 {strides = array<i32>} : memref<1x2x32xf32, #tpu.memory_space<vmem>>, vector<1x2x32xf32>,
    return
  }
  func.func @transform_0(%arg0: i32) -> (i32, i32, i32) {
    %c0_i32 = arith.constant 0 : i32
    %c0_i32_0 = arith.constant 0 : i32
    %c0_i32_1 = arith.constant 0 : i32
    return %arg0, %c0_i32, %c0_i32_0 : i32, i32, i32
  }
  func.func @transform_1(%arg0: i32) -> (i32, i32, i32) {
    %c0_i32 = arith.constant 0 : i32
    %c0_i32_0 = arith.constant 0 : i32
    %c0_i32_1 = arith.constant 0 : i32
    %c0_i32_2 = arith.constant 0 : i32
    return %c0_i32, %c0_i32_0, %c0_i32_1 : i32, i32, i32
  }
  func.func @transform_2(%arg0: i32) -> (i32, i32) {
    %c0_i32 = arith.constant 0 : i32
    %c0_i32_0 = arith.constant 0 : i32
    %c0_i32_1 = arith.constant 0 : i32
    return %c0_i32, %c0_i32_0 : i32, i32
  }
  func.func @transform_3(%arg0: i32) -> (i32, i32) {
    %c0_i32 = arith.constant 0 : i32
    %c0_i32_0 = arith.constant 0 : i32
    %c0_i32_1 = arith.constant 0 : i32
    return %c0_i32, %c0_i32_0 : i32, i32
  }
  func.func @transform_4(%arg0: i32) -> (i32, i32) {
    %c0_i32 = arith.constant 0 : i32
    %c0_i32_0 = arith.constant 0 : i32
    %c0_i32_1 = arith.constant 0 : i32
    return %c0_i32, %c0_i32_0 : i32, i32
  }
  func.func @transform_5(%arg0: i32) -> (i32, i32) {
    %c0_i32 = arith.constant 0 : i32
    %c0_i32_0 = arith.constant 0 : i32
    %c0_i32_1 = arith.constant 0 : i32
    return %c0_i32, %c0_i32_0 : i32, i32
  }
  func.func @transform_6(%arg0: i32) -> (i32, i32) {
    %c0_i32 = arith.constant 0 : i32
    %c0_i32_0 = arith.constant 0 : i32
    %c0_i32_1 = arith.constant 0 : i32
    return %c0_i32, %c0_i32_0 : i32, i32
  }
  func.func @transform_7(%arg0: i32) -> (i32, i32) {
    %c0_i32 = arith.constant 0 : i32
    %c0_i32_0 = arith.constant 0 : i32
    %c0_i32_1 = arith.constant 0 : i32
    return %c0_i32, %c0_i32_0 : i32, i32
  }
  func.func @transform_8(%arg0: i32) -> (i32, i32) {
    %c0_i32 = arith.constant 0 : i32
    %c0_i32_0 = arith.constant 0 : i32
    %c0_i32_1 = arith.constant 0 : i32
    return %c0_i32, %c0_i32_0 : i32, i32
  }
  func.func @transform_9(%arg0: i32) -> (i32, i32) {
    %c0_i32 = arith.constant 0 : i32
    %c0_i32_0 = arith.constant 0 : i32
    %c0_i32_1 = arith.constant 0 : i32
    return %c0_i32, %c0_i32_0 : i32, i32
  }
  func.func @transform_10(%arg0: i32) -> (i32, i32) {
    %c0_i32 = arith.constant 0 : i32
    %c0_i32_0 = arith.constant 0 : i32
    %c0_i32_1 = arith.constant 0 : i32
    return %c0_i32, %c0_i32_0 : i32, i32
  }
  func.func @transform_11(%arg0: i32) -> (i32, i32) {
    %c0_i32 = arith.constant 0 : i32
    %c0_i32_0 = arith.constant 0 : i32
    %c0_i32_1 = arith.constant 0 : i32
    return %c0_i32, %c0_i32_0 : i32, i32
  }
  func.func @transform_12(%arg0: i32) -> (i32, i32) {
    %c0_i32 = arith.constant 0 : i32
    %c0_i32_0 = arith.constant 0 : i32
    %c0_i32_1 = arith.constant 0 : i32
    return %c0_i32, %c0_i32_0 : i32, i32
  }
  func.func @transform_13(%arg0: i32) -> (i32, i32) {
    %c0_i32 = arith.constant 0 : i32
    %c0_i32_0 = arith.constant 0 : i32
    %c0_i32_1 = arith.constant 0 : i32
    return %c0_i32, %c0_i32_0 : i32, i32
  }
  func.func @transform_14(%arg0: i32) -> (i32, i32) {
    %c0_i32 = arith.constant 0 : i32
    %c0_i32_0 = arith.constant 0 : i32
    %c0_i32_1 = arith.constant 0 : i32
    return %c0_i32, %c0_i32_0 : i32, i32
  }
  func.func @transform_15(%arg0: i32) -> (i32, i32) {
    %c0_i32 = arith.constant 0 : i32
    %c0_i32_0 = arith.constant 0 : i32
    %c0_i32_1 = arith.constant 0 : i32
    return %c0_i32, %c0_i32_0 : i32, i32
  }
  func.func @transform_16(%arg0: i32) -> (i32, i32) {
    %c0_i32 = arith.constant 0 : i32
    %c0_i32_0 = arith.constant 0 : i32
    %c0_i32_1 = arith.constant 0 : i32
    return %c0_i32, %c0_i32_0 : i32, i32
  }
  func.func @transform_17(%arg0: i32) -> (i32, i32) {
    %c0_i32 = arith.constant 0 : i32
    %c0_i32_0 = arith.constant 0 : i32
    %c0_i32_1 = arith.constant 0 : i32
    return %c0_i32, %c0_i32_0 : i32, i32
  }
  func.func @transform_18(%arg0: i32) -> (i32, i32) {
    %c0_i32 = arith.constant 0 : i32
    %c0_i32_0 = arith.constant 0 : i32
    %c0_i32_1 = arith.constant 0 : i32
    return %c0_i32, %c0_i32_0 : i32, i32
  }
  func.func @transform_19(%arg0: i32) -> (i32, i32, i32) {
    %c0_i32 = arith.constant 0 : i32
    %c0_i32_0 = arith.constant 0 : i32
    %c0_i32_1 = arith.constant 0 : i32
    return %arg0, %c0_i32, %c0_i32_0 : i32, i32, i32
  }
}

module attributes {stable_mosaic.version = 11 : i64} {
  func.func @_encoder_seq_kernel(%arg0: i32, %arg1: memref<1x2x32xf32, #tpu.memory_space<vmem>>, %arg2: memref<1x2x32xf32, #tpu.memory_space<vmem>>, %arg3: memref<32x128xf32, #tpu.memory_space<vmem>>, %arg4: memref<32x128xf32, #tpu.memory_space<vmem>>, %arg5: memref<1x128xf32, #tpu.memory_space<vmem>>, %arg6: memref<32x128xf32, #tpu.memory_space<vmem>>, %arg7: memref<32x128xf32, #tpu.memory_space<vmem>>, %arg8: memref<1x128xf32, #tpu.memory_space<vmem>>, %arg9: memref<1x2x32xf32, #tpu.memory_space<vmem>>, %arg10: memref<1x2x32xf32, #tpu.memory_space<vmem>>, %arg11: memref<2x32xf32, #tpu.memory_space<vmem>>, %arg12: memref<2x32xf32, #tpu.memory_space<vmem>>, %arg13: memref<2x32xf32, #tpu.memory_space<vmem>>, %arg14: memref<2x32xf32, #tpu.memory_space<vmem>>, %arg15: memref<2x32xf32, #tpu.memory_space<vmem>>, %arg16: memref<2x32xf32, #tpu.memory_space<vmem>>, %arg17: memref<2x32xf32, #tpu.memory_space<vmem>>, %arg18: memref<2x32xf32, #tpu.memory_space<vmem>>) attributes {dimension_semantics = [#tpu.dimension_semantics<arbitrary>], iteration_bounds = array<i64: 8>, scalar_prefetch = 0 : i64, scratch_operands = 4 : i64, tpu.core_type = #tpu.core_type<tc>, window_params = [{transform_indices = @transform_0, window_bounds = array<i64: 1, 2, 32>}, {transform_indices = @transform_1, window_bounds = array<i64: 1, 2, 32>}, {pipeline_mode = #tpu.pipeline_mode<synchronous>, transform_indices = @transform_2, window_bounds = array<i64: 32, 128>}, {pipeline_mode = #tpu.pipeline_mode<synchronous>, transform_indices = @transform_3, window_bounds = array<i64: 32, 128>}, {pipeline_mode = #tpu.pipeline_mode<synchronous>, transform_indices = @transform_4, window_bounds = array<i64: 1, 128>}, {pipeline_mode = #tpu.pipeline_mode<synchronous>, transform_indices = @transform_5, window_bounds = array<i64: 32, 128>}, {pipeline_mode = #tpu.pipeline_mode<synchronous>, transform_indices = @transform_6, window_bounds = array<i64: 32, 128>}, {pipeline_mode = #tpu.pipeline_mode<synchronous>, transform_indices = @transform_7, window_bounds = array<i64: 1, 128>}, {transform_indices = @transform_8, window_bounds = array<i64: 1, 2, 32>}, {transform_indices = @transform_9, window_bounds = array<i64: 1, 2, 32>}, {pipeline_mode = #tpu.pipeline_mode<synchronous>, transform_indices = @transform_10, window_bounds = array<i64: 2, 32>}, {pipeline_mode = #tpu.pipeline_mode<synchronous>, transform_indices = @transform_11, window_bounds = array<i64: 2, 32>}, {pipeline_mode = #tpu.pipeline_mode<synchronous>, transform_indices = @transform_12, window_bounds = array<i64: 2, 32>}, {pipeline_mode = #tpu.pipeline_mode<synchronous>, transform_indices = @transform_13, window_bounds = array<i64: 2, 32>}]} {
    %c0_i32 = arith.constant 0 : i32
    %0 = arith.cmpi eq, %arg0, %c0_i32 : i32
    %1 = arith.extui %0 : i1 to i32
    %c0_i32_0 = arith.constant 0 : i32
    %2 = arith.cmpi ne, %1, %c0_i32_0 : i32
    scf.if %2 {
      %cst_57 = arith.constant 0.000000e+00 : f32
      %91 = vector.broadcast %cst_57 : f32 to vector<2x32xf32>
      %c0_58 = arith.constant 0 : index
      %c0_59 = arith.constant 0 : index
      %92 = vector.load %arg15[%c0_58, %c0_59] : memref<2x32xf32, #tpu.memory_space<vmem>>, vector<2x32xf32>
      tpu.vector_store %arg15[%c0_58, %c0_59], %91 {strides = array<i32>} : memref<2x32xf32, #tpu.memory_space<vmem>>, vector<2x32xf32>,
      %cst_60 = arith.constant 0.000000e+00 : f32
      %93 = vector.broadcast %cst_60 : f32 to vector<2x32xf32>
      %c0_61 = arith.constant 0 : index
      %c0_62 = arith.constant 0 : index
      %94 = vector.load %arg16[%c0_61, %c0_62] : memref<2x32xf32, #tpu.memory_space<vmem>>, vector<2x32xf32>
      tpu.vector_store %arg16[%c0_61, %c0_62], %93 {strides = array<i32>} : memref<2x32xf32, #tpu.memory_space<vmem>>, vector<2x32xf32>,
      %cst_63 = arith.constant 0.000000e+00 : f32
      %95 = vector.broadcast %cst_63 : f32 to vector<2x32xf32>
      %c0_64 = arith.constant 0 : index
      %c0_65 = arith.constant 0 : index
      %96 = vector.load %arg17[%c0_64, %c0_65] : memref<2x32xf32, #tpu.memory_space<vmem>>, vector<2x32xf32>
      tpu.vector_store %arg17[%c0_64, %c0_65], %95 {strides = array<i32>} : memref<2x32xf32, #tpu.memory_space<vmem>>, vector<2x32xf32>,
      %cst_66 = arith.constant 0.000000e+00 : f32
      %97 = vector.broadcast %cst_66 : f32 to vector<2x32xf32>
      %c0_67 = arith.constant 0 : index
      %c0_68 = arith.constant 0 : index
      %98 = vector.load %arg18[%c0_67, %c0_68] : memref<2x32xf32, #tpu.memory_space<vmem>>, vector<2x32xf32>
      tpu.vector_store %arg18[%c0_67, %c0_68], %97 {strides = array<i32>} : memref<2x32xf32, #tpu.memory_space<vmem>>, vector<2x32xf32>,
    } else {
    }
    %c0 = arith.constant 0 : index
    %c0_1 = arith.constant 0 : index
    %c0_2 = arith.constant 0 : index
    %3 = vector.load %arg1[%c0, %c0_1, %c0_2] : memref<1x2x32xf32, #tpu.memory_space<vmem>>, vector<1x2x32xf32>
    %4 = vector.shape_cast %3 : vector<1x2x32xf32> to vector<2x32xf32>
    %c0_3 = arith.constant 0 : index
    %c0_4 = arith.constant 0 : index
    %5 = vector.load %arg15[%c0_3, %c0_4] : memref<2x32xf32, #tpu.memory_space<vmem>>, vector<2x32xf32>
    %c0_5 = arith.constant 0 : index
    %c0_6 = arith.constant 0 : index
    %6 = vector.load %arg16[%c0_5, %c0_6] : memref<2x32xf32, #tpu.memory_space<vmem>>, vector<2x32xf32>
    %c0_7 = arith.constant 0 : index
    %c0_8 = arith.constant 0 : index
    %7 = vector.load %arg3[%c0_7, %c0_8] : memref<32x128xf32, #tpu.memory_space<vmem>>, vector<32x128xf32>
    %c0_9 = arith.constant 0 : index
    %c0_10 = arith.constant 0 : index
    %8 = vector.load %arg4[%c0_9, %c0_10] : memref<32x128xf32, #tpu.memory_space<vmem>>, vector<32x128xf32>
    %c0_11 = arith.constant 0 : index
    %c0_12 = arith.constant 0 : index
    %9 = vector.load %arg5[%c0_11, %c0_12] : memref<1x128xf32, #tpu.memory_space<vmem>>, vector<1x128xf32>
    %cst = arith.constant dense<0.000000e+00> : vector<2x128xf32>
    %10 = tpu.matmul %4, %7, %cst {dimension_numbers = #tpu.dot_dimension_numbers<[1], [0], [0], [1], [0, 0, 1, 1], [], []>} : vector<2x32xf32>, vector<32x128xf32>, vector<2x128xf32> -> vector<2x128xf32>
    %cst_13 = arith.constant dense<0.000000e+00> : vector<2x128xf32>
    %11 = tpu.matmul %5, %8, %cst_13 {dimension_numbers = #tpu.dot_dimension_numbers<[1], [0], [0], [1], [0, 0, 1, 1], [], []>} : vector<2x32xf32>, vector<32x128xf32>, vector<2x128xf32> -> vector<2x128xf32>
    %12 = arith.addf %10, %11 : vector<2x128xf32>
    %13 = vector.broadcast %9 : vector<1x128xf32> to vector<2x128xf32>
    %14 = arith.addf %12, %13 : vector<2x128xf32>
    %15 = vector.extract_strided_slice %14 {offsets = [0, 0], sizes = [2, 32], strides = [1, 1]} : vector<2x128xf32> to vector<2x32xf32>
    %16 = arith.negf %15 : vector<2x32xf32>
    %17 = math.exp %16 : vector<2x32xf32>
    %cst_14 = arith.constant 1.000000e+00 : f32
    %18 = vector.broadcast %cst_14 : f32 to vector<2x32xf32>
    %19 = arith.addf %18, %17 : vector<2x32xf32>
    %20 = arith.divf %18, %19 : vector<2x32xf32>
    %21 = vector.extract_strided_slice %14 {offsets = [0, 32], sizes = [2, 32], strides = [1, 1]} : vector<2x128xf32> to vector<2x32xf32>
    %22 = arith.negf %21 : vector<2x32xf32>
    %23 = math.exp %22 : vector<2x32xf32>
    %cst_15 = arith.constant 1.000000e+00 : f32
    %24 = vector.broadcast %cst_15 : f32 to vector<2x32xf32>
    %25 = arith.addf %24, %23 : vector<2x32xf32>
    %26 = arith.divf %24, %25 : vector<2x32xf32>
    %27 = vector.extract_strided_slice %14 {offsets = [0, 64], sizes = [2, 32], strides = [1, 1]} : vector<2x128xf32> to vector<2x32xf32>
    %28 = math.tanh %27 : vector<2x32xf32>
    %29 = vector.extract_strided_slice %14 {offsets = [0, 96], sizes = [2, 32], strides = [1, 1]} : vector<2x128xf32> to vector<2x32xf32>
    %30 = arith.negf %29 : vector<2x32xf32>
    %31 = math.exp %30 : vector<2x32xf32>
    %cst_16 = arith.constant 1.000000e+00 : f32
    %32 = vector.broadcast %cst_16 : f32 to vector<2x32xf32>
    %33 = arith.addf %32, %31 : vector<2x32xf32>
    %34 = arith.divf %32, %33 : vector<2x32xf32>
    %35 = arith.mulf %26, %6 : vector<2x32xf32>
    %36 = arith.mulf %20, %28 : vector<2x32xf32>
    %37 = arith.addf %35, %36 : vector<2x32xf32>
    %38 = math.tanh %37 : vector<2x32xf32>
    %39 = arith.mulf %34, %38 : vector<2x32xf32>
    %c0_17 = arith.constant 0 : index
    %c0_18 = arith.constant 0 : index
    %c0_19 = arith.constant 0 : index
    %40 = vector.load %arg2[%c0_17, %c0_18, %c0_19] : memref<1x2x32xf32, #tpu.memory_space<vmem>>, vector<1x2x32xf32>
    %41 = vector.shape_cast %40 : vector<1x2x32xf32> to vector<2x32xf32>
    %c0_20 = arith.constant 0 : index
    %c0_21 = arith.constant 0 : index
    %42 = vector.load %arg17[%c0_20, %c0_21] : memref<2x32xf32, #tpu.memory_space<vmem>>, vector<2x32xf32>
    %c0_22 = arith.constant 0 : index
    %c0_23 = arith.constant 0 : index
    %43 = vector.load %arg18[%c0_22, %c0_23] : memref<2x32xf32, #tpu.memory_space<vmem>>, vector<2x32xf32>
    %c0_24 = arith.constant 0 : index
    %c0_25 = arith.constant 0 : index
    %44 = vector.load %arg6[%c0_24, %c0_25] : memref<32x128xf32, #tpu.memory_space<vmem>>, vector<32x128xf32>
    %c0_26 = arith.constant 0 : index
    %c0_27 = arith.constant 0 : index
    %45 = vector.load %arg7[%c0_26, %c0_27] : memref<32x128xf32, #tpu.memory_space<vmem>>, vector<32x128xf32>
    %c0_28 = arith.constant 0 : index
    %c0_29 = arith.constant 0 : index
    %46 = vector.load %arg8[%c0_28, %c0_29] : memref<1x128xf32, #tpu.memory_space<vmem>>, vector<1x128xf32>
    %cst_30 = arith.constant dense<0.000000e+00> : vector<2x128xf32>
    %47 = tpu.matmul %41, %44, %cst_30 {dimension_numbers = #tpu.dot_dimension_numbers<[1], [0], [0], [1], [0, 0, 1, 1], [], []>} : vector<2x32xf32>, vector<32x128xf32>, vector<2x128xf32> -> vector<2x128xf32>
    %cst_31 = arith.constant dense<0.000000e+00> : vector<2x128xf32>
    %48 = tpu.matmul %42, %45, %cst_31 {dimension_numbers = #tpu.dot_dimension_numbers<[1], [0], [0], [1], [0, 0, 1, 1], [], []>} : vector<2x32xf32>, vector<32x128xf32>, vector<2x128xf32> -> vector<2x128xf32>
    %49 = arith.addf %47, %48 : vector<2x128xf32>
    %50 = vector.broadcast %46 : vector<1x128xf32> to vector<2x128xf32>
    %51 = arith.addf %49, %50 : vector<2x128xf32>
    %52 = vector.extract_strided_slice %51 {offsets = [0, 0], sizes = [2, 32], strides = [1, 1]} : vector<2x128xf32> to vector<2x32xf32>
    %53 = arith.negf %52 : vector<2x32xf32>
    %54 = math.exp %53 : vector<2x32xf32>
    %cst_32 = arith.constant 1.000000e+00 : f32
    %55 = vector.broadcast %cst_32 : f32 to vector<2x32xf32>
    %56 = arith.addf %55, %54 : vector<2x32xf32>
    %57 = arith.divf %55, %56 : vector<2x32xf32>
    %58 = vector.extract_strided_slice %51 {offsets = [0, 32], sizes = [2, 32], strides = [1, 1]} : vector<2x128xf32> to vector<2x32xf32>
    %59 = arith.negf %58 : vector<2x32xf32>
    %60 = math.exp %59 : vector<2x32xf32>
    %cst_33 = arith.constant 1.000000e+00 : f32
    %61 = vector.broadcast %cst_33 : f32 to vector<2x32xf32>
    %62 = arith.addf %61, %60 : vector<2x32xf32>
    %63 = arith.divf %61, %62 : vector<2x32xf32>
    %64 = vector.extract_strided_slice %51 {offsets = [0, 64], sizes = [2, 32], strides = [1, 1]} : vector<2x128xf32> to vector<2x32xf32>
    %65 = math.tanh %64 : vector<2x32xf32>
    %66 = vector.extract_strided_slice %51 {offsets = [0, 96], sizes = [2, 32], strides = [1, 1]} : vector<2x128xf32> to vector<2x32xf32>
    %67 = arith.negf %66 : vector<2x32xf32>
    %68 = math.exp %67 : vector<2x32xf32>
    %cst_34 = arith.constant 1.000000e+00 : f32
    %69 = vector.broadcast %cst_34 : f32 to vector<2x32xf32>
    %70 = arith.addf %69, %68 : vector<2x32xf32>
    %71 = arith.divf %69, %70 : vector<2x32xf32>
    %72 = arith.mulf %63, %43 : vector<2x32xf32>
    %73 = arith.mulf %57, %65 : vector<2x32xf32>
    %74 = arith.addf %72, %73 : vector<2x32xf32>
    %75 = math.tanh %74 : vector<2x32xf32>
    %76 = arith.mulf %71, %75 : vector<2x32xf32>
    %c0_35 = arith.constant 0 : index
    %c0_36 = arith.constant 0 : index
    %77 = vector.load %arg15[%c0_35, %c0_36] : memref<2x32xf32, #tpu.memory_space<vmem>>, vector<2x32xf32>
    tpu.vector_store %arg15[%c0_35, %c0_36], %39 {strides = array<i32>} : memref<2x32xf32, #tpu.memory_space<vmem>>, vector<2x32xf32>,
    %c0_37 = arith.constant 0 : index
    %c0_38 = arith.constant 0 : index
    %78 = vector.load %arg16[%c0_37, %c0_38] : memref<2x32xf32, #tpu.memory_space<vmem>>, vector<2x32xf32>
    tpu.vector_store %arg16[%c0_37, %c0_38], %37 {strides = array<i32>} : memref<2x32xf32, #tpu.memory_space<vmem>>, vector<2x32xf32>,
    %c0_39 = arith.constant 0 : index
    %c0_40 = arith.constant 0 : index
    %79 = vector.load %arg17[%c0_39, %c0_40] : memref<2x32xf32, #tpu.memory_space<vmem>>, vector<2x32xf32>
    tpu.vector_store %arg17[%c0_39, %c0_40], %76 {strides = array<i32>} : memref<2x32xf32, #tpu.memory_space<vmem>>, vector<2x32xf32>,
    %c0_41 = arith.constant 0 : index
    %c0_42 = arith.constant 0 : index
    %80 = vector.load %arg18[%c0_41, %c0_42] : memref<2x32xf32, #tpu.memory_space<vmem>>, vector<2x32xf32>
    tpu.vector_store %arg18[%c0_41, %c0_42], %74 {strides = array<i32>} : memref<2x32xf32, #tpu.memory_space<vmem>>, vector<2x32xf32>,
    %c0_43 = arith.constant 0 : index
    %c0_44 = arith.constant 0 : index
    %c0_45 = arith.constant 0 : index
    %81 = vector.load %arg9[%c0_43, %c0_44, %c0_45] : memref<1x2x32xf32, #tpu.memory_space<vmem>>, vector<1x2x32xf32>
    %82 = vector.shape_cast %81 : vector<1x2x32xf32> to vector<2x32xf32>
    %83 = vector.shape_cast %39 : vector<2x32xf32> to vector<1x2x32xf32>
    tpu.vector_store %arg9[%c0_43, %c0_44, %c0_45], %83 {strides = array<i32>} : memref<1x2x32xf32, #tpu.memory_space<vmem>>, vector<1x2x32xf32>,
    %c0_46 = arith.constant 0 : index
    %c0_47 = arith.constant 0 : index
    %c0_48 = arith.constant 0 : index
    %84 = vector.load %arg10[%c0_46, %c0_47, %c0_48] : memref<1x2x32xf32, #tpu.memory_space<vmem>>, vector<1x2x32xf32>
    %85 = vector.shape_cast %84 : vector<1x2x32xf32> to vector<2x32xf32>
    %86 = vector.shape_cast %76 : vector<2x32xf32> to vector<1x2x32xf32>
    tpu.vector_store %arg10[%c0_46, %c0_47, %c0_48], %86 {strides = array<i32>} : memref<1x2x32xf32, #tpu.memory_space<vmem>>, vector<1x2x32xf32>,
    %c0_49 = arith.constant 0 : index
    %c0_50 = arith.constant 0 : index
    %87 = vector.load %arg11[%c0_49, %c0_50] : memref<2x32xf32, #tpu.memory_space<vmem>>, vector<2x32xf32>
    tpu.vector_store %arg11[%c0_49, %c0_50], %39 {strides = array<i32>} : memref<2x32xf32, #tpu.memory_space<vmem>>, vector<2x32xf32>,
    %c0_51 = arith.constant 0 : index
    %c0_52 = arith.constant 0 : index
    %88 = vector.load %arg12[%c0_51, %c0_52] : memref<2x32xf32, #tpu.memory_space<vmem>>, vector<2x32xf32>
    tpu.vector_store %arg12[%c0_51, %c0_52], %37 {strides = array<i32>} : memref<2x32xf32, #tpu.memory_space<vmem>>, vector<2x32xf32>,
    %c0_53 = arith.constant 0 : index
    %c0_54 = arith.constant 0 : index
    %89 = vector.load %arg13[%c0_53, %c0_54] : memref<2x32xf32, #tpu.memory_space<vmem>>, vector<2x32xf32>
    tpu.vector_store %arg13[%c0_53, %c0_54], %76 {strides = array<i32>} : memref<2x32xf32, #tpu.memory_space<vmem>>, vector<2x32xf32>,
    %c0_55 = arith.constant 0 : index
    %c0_56 = arith.constant 0 : index
    %90 = vector.load %arg14[%c0_55, %c0_56] : memref<2x32xf32, #tpu.memory_space<vmem>>, vector<2x32xf32>
    tpu.vector_store %arg14[%c0_55, %c0_56], %74 {strides = array<i32>} : memref<2x32xf32, #tpu.memory_space<vmem>>, vector<2x32xf32>,
    return
  }
  func.func @transform_0(%arg0: i32) -> (i32, i32, i32) {
    %c0_i32 = arith.constant 0 : i32
    %c0_i32_0 = arith.constant 0 : i32
    %c0_i32_1 = arith.constant 0 : i32
    return %arg0, %c0_i32, %c0_i32_0 : i32, i32, i32
  }
  func.func @transform_1(%arg0: i32) -> (i32, i32, i32) {
    %c7_i32 = arith.constant 7 : i32
    %0 = arith.subi %c7_i32, %arg0 : i32
    %c0_i32 = arith.constant 0 : i32
    %c0_i32_0 = arith.constant 0 : i32
    %c0_i32_1 = arith.constant 0 : i32
    return %0, %c0_i32, %c0_i32_0 : i32, i32, i32
  }
  func.func @transform_2(%arg0: i32) -> (i32, i32) {
    %c0_i32 = arith.constant 0 : i32
    %c0_i32_0 = arith.constant 0 : i32
    %c0_i32_1 = arith.constant 0 : i32
    return %c0_i32, %c0_i32_0 : i32, i32
  }
  func.func @transform_3(%arg0: i32) -> (i32, i32) {
    %c0_i32 = arith.constant 0 : i32
    %c0_i32_0 = arith.constant 0 : i32
    %c0_i32_1 = arith.constant 0 : i32
    return %c0_i32, %c0_i32_0 : i32, i32
  }
  func.func @transform_4(%arg0: i32) -> (i32, i32) {
    %c0_i32 = arith.constant 0 : i32
    %c0_i32_0 = arith.constant 0 : i32
    %c0_i32_1 = arith.constant 0 : i32
    return %c0_i32, %c0_i32_0 : i32, i32
  }
  func.func @transform_5(%arg0: i32) -> (i32, i32) {
    %c0_i32 = arith.constant 0 : i32
    %c0_i32_0 = arith.constant 0 : i32
    %c0_i32_1 = arith.constant 0 : i32
    return %c0_i32, %c0_i32_0 : i32, i32
  }
  func.func @transform_6(%arg0: i32) -> (i32, i32) {
    %c0_i32 = arith.constant 0 : i32
    %c0_i32_0 = arith.constant 0 : i32
    %c0_i32_1 = arith.constant 0 : i32
    return %c0_i32, %c0_i32_0 : i32, i32
  }
  func.func @transform_7(%arg0: i32) -> (i32, i32) {
    %c0_i32 = arith.constant 0 : i32
    %c0_i32_0 = arith.constant 0 : i32
    %c0_i32_1 = arith.constant 0 : i32
    return %c0_i32, %c0_i32_0 : i32, i32
  }
  func.func @transform_8(%arg0: i32) -> (i32, i32, i32) {
    %c0_i32 = arith.constant 0 : i32
    %c0_i32_0 = arith.constant 0 : i32
    %c0_i32_1 = arith.constant 0 : i32
    return %arg0, %c0_i32, %c0_i32_0 : i32, i32, i32
  }
  func.func @transform_9(%arg0: i32) -> (i32, i32, i32) {
    %c0_i32 = arith.constant 0 : i32
    %c0_i32_0 = arith.constant 0 : i32
    %c0_i32_1 = arith.constant 0 : i32
    return %arg0, %c0_i32, %c0_i32_0 : i32, i32, i32
  }
  func.func @transform_10(%arg0: i32) -> (i32, i32) {
    %c0_i32 = arith.constant 0 : i32
    %c0_i32_0 = arith.constant 0 : i32
    %c0_i32_1 = arith.constant 0 : i32
    return %c0_i32, %c0_i32_0 : i32, i32
  }
  func.func @transform_11(%arg0: i32) -> (i32, i32) {
    %c0_i32 = arith.constant 0 : i32
    %c0_i32_0 = arith.constant 0 : i32
    %c0_i32_1 = arith.constant 0 : i32
    return %c0_i32, %c0_i32_0 : i32, i32
  }
  func.func @transform_12(%arg0: i32) -> (i32, i32) {
    %c0_i32 = arith.constant 0 : i32
    %c0_i32_0 = arith.constant 0 : i32
    %c0_i32_1 = arith.constant 0 : i32
    return %c0_i32, %c0_i32_0 : i32, i32
  }
  func.func @transform_13(%arg0: i32) -> (i32, i32) {
    %c0_i32 = arith.constant 0 : i32
    %c0_i32_0 = arith.constant 0 : i32
    %c0_i32_1 = arith.constant 0 : i32
    return %c0_i32, %c0_i32_0 : i32, i32
  }
}

module attributes {stable_mosaic.version = 11 : i64} {
  func.func @_fc_logsoftmax_kernel(%arg0: i32, %arg1: memref<16x32xf32, #tpu.memory_space<vmem>>, %arg2: memref<32x128xf32, #tpu.memory_space<vmem>>, %arg3: memref<16x128xf32, #tpu.memory_space<vmem>>) attributes {dimension_semantics = [#tpu.dimension_semantics<arbitrary>], iteration_bounds = array<i64: 1>, scalar_prefetch = 0 : i64, scratch_operands = 0 : i64, tpu.core_type = #tpu.core_type<tc>, window_params = [{pipeline_mode = #tpu.pipeline_mode<synchronous>, transform_indices = @transform_0, window_bounds = array<i64: 16, 32>}, {pipeline_mode = #tpu.pipeline_mode<synchronous>, transform_indices = @transform_1, window_bounds = array<i64: 32, 128>}, {pipeline_mode = #tpu.pipeline_mode<synchronous>, transform_indices = @transform_2, window_bounds = array<i64: 16, 128>}]} {
    %c0 = arith.constant 0 : index
    %c0_0 = arith.constant 0 : index
    %0 = vector.load %arg1[%c0, %c0_0] : memref<16x32xf32, #tpu.memory_space<vmem>>, vector<16x32xf32>
    %c0_1 = arith.constant 0 : index
    %c0_2 = arith.constant 0 : index
    %1 = vector.load %arg2[%c0_1, %c0_2] : memref<32x128xf32, #tpu.memory_space<vmem>>, vector<32x128xf32>
    %cst = arith.constant dense<0.000000e+00> : vector<16x128xf32>
    %2 = tpu.matmul %0, %1, %cst {dimension_numbers = #tpu.dot_dimension_numbers<[1], [0], [0], [1], [0, 0, 1, 1], [], []>} : vector<16x32xf32>, vector<32x128xf32>, vector<16x128xf32> -> vector<16x128xf32>
    %3 = tpu.iota {dimensions = array<i32: 1>} : vector<16x128xi32>
    %c40_i32 = arith.constant 40 : i32
    %4 = vector.broadcast %c40_i32 : i32 to vector<16x128xi32>
    %5 = arith.cmpi slt, %3, %4 : vector<16x128xi32>
    %cst_3 = arith.constant -1.000000e+30 : f32
    %6 = vector.broadcast %cst_3 : f32 to vector<16x128xf32>
    %7 = arith.select %5, %2, %6 : vector<16x128xi1>, vector<16x128xf32>
    %cst_4 = arith.constant dense<0xFF800000> : vector<16xf32>
    %8 = vector.multi_reduction <maximumf>, %7, %cst_4 [1] : vector<16x128xf32> to vector<16xf32>
    %9 = vector.shape_cast %8 : vector<16xf32> to vector<16x1xf32>
    %10 = vector.broadcast %9 : vector<16x1xf32> to vector<16x128xf32>
    %11 = arith.subf %7, %10 : vector<16x128xf32>
    %12 = math.exp %11 : vector<16x128xf32>
    %cst_5 = arith.constant dense<0.000000e+00> : vector<16xf32>
    %13 = vector.multi_reduction <add>, %12, %cst_5 [1] : vector<16x128xf32> to vector<16xf32>
    %14 = vector.shape_cast %13 : vector<16xf32> to vector<16x1xf32>
    %15 = math.log %14 : vector<16x1xf32>
    %16 = vector.broadcast %15 : vector<16x1xf32> to vector<16x128xf32>
    %17 = arith.subf %11, %16 : vector<16x128xf32>
    %c0_6 = arith.constant 0 : index
    %c0_7 = arith.constant 0 : index
    %18 = vector.load %arg3[%c0_6, %c0_7] : memref<16x128xf32, #tpu.memory_space<vmem>>, vector<16x128xf32>
    tpu.vector_store %arg3[%c0_6, %c0_7], %17 {strides = array<i32>} : memref<16x128xf32, #tpu.memory_space<vmem>>, vector<16x128xf32>,
    return
  }
  func.func @transform_0(%arg0: i32) -> (i32, i32) {
    %c0_i32 = arith.constant 0 : i32
    %c0_i32_0 = arith.constant 0 : i32
    %c0_i32_1 = arith.constant 0 : i32
    return %c0_i32, %c0_i32_0 : i32, i32
  }
  func.func @transform_1(%arg0: i32) -> (i32, i32) {
    %c0_i32 = arith.constant 0 : i32
    %c0_i32_0 = arith.constant 0 : i32
    %c0_i32_1 = arith.constant 0 : i32
    return %c0_i32, %c0_i32_0 : i32, i32
  }
  func.func @transform_2(%arg0: i32) -> (i32, i32) {
    %c0_i32 = arith.constant 0 : i32
    %c0_i32_0 = arith.constant 0 : i32
    %c0_i32_1 = arith.constant 0 : i32
    return %c0_i32, %c0_i32_0 : i32, i32
  }
}

</mosaic_0001>

<llo_original>
// kernel: encoder_decoder_forward.5
$region0: #{encoder_decoder_forward.5}
  #allocation0 [shape = 'u32[]', space=smem, size = 0x4, offset = 0x4, fixed_abs, tag = 'smem constant byte address 0x4 - core index']
  #allocation1 [shape = 'u32[144,128]{1,0:T(1,128)}', space=vmem, size = 0x12000, scoped, tag = 'internal scratch']
  %s0 = inlined_call_operand.vmem [shape: f32[16,32], index: 0, kind: input, shape index: {}]
  %s1 = inlined_call_operand.vmem [shape: f32[32,128], index: 1, kind: input, shape index: {}]
  %s2 = inlined_call_operand.hbm [shape: f32[16,128], index: 2, kind: output, shape index: {}]
  %s3 = sld [smem:[#allocation0]]
  $region18: #{encoder_decoder_forward.5} parent=0
    _
  %s5 = ssub.s32 1, %s3
  %s6 = scalar_select 0, %s5, %s3
  $region1: #{encoder_decoder_forward.5} parent=0
    #allocation2 [shape = 'u8[8192]{0}', space=vmem, size = 0x2000, scoped, tag = 'output window, operand 0, single buffered']
    #allocation3 [shape = 's32[1]{0}', space=sflag, size = 0x4, scoped, tag = 'scoped memory for encoder_decoder_forward.5']
    %7 = vsyncpa [#allocation3], 0
    // Predicated region
    $region2: #{encoder_decoder_forward.5} parent=1 // pred_check
      _
    $region3: #{encoder_decoder_forward.5} parent=1 // pred_check_branch
      %9 = sbr.rel (0) target = $region5
    $region4: #{encoder_decoder_forward.5} parent=1 // pred_region
      _
    $region5: #{encoder_decoder_forward.5} parent=1 // pred_fallthru
      _
    // Predicated region
    $region6: #{encoder_decoder_forward.5} parent=1 // pred_check
      _
    $region7: #{encoder_decoder_forward.5} parent=1 // pred_check_branch
      %11 = sbr.rel (0) target = $region9
    $region8: #{encoder_decoder_forward.5} parent=1 // pred_region
      _
    $region9: #{encoder_decoder_forward.5} parent=1 // pred_fallthru
      _
    %v12 = vld [vmem:[%s0] sm:$0xff]
    %v13 = vld [vmem:[%s0 + $0x8] sm:$0xff]
    %v14 = vld [vmem:[%s1] sm:$0xff]
    %v15 = vld [vmem:[%s1 + $0x8] sm:$0xff]
    %v16 = vld [vmem:[%s1 + $0x10] sm:$0xff]
    %v17 = vld [vmem:[%s1 + $0x18] sm:$0xff]
    %vm18 = vcmask 261120
    %v20 = vsel %vm18, %v12, 0
    %v23 = vsel %vm18, %v13, 0
    %25 = vmatprep.subr.mxu0 0.0
    %26 = vmatpush1.msra.mxu0 %v14
    %27 = vmatprep.subr.mxu0 0.0
    %28 = vmatpush1.msra.mxu0 %v15
    %29 = vmatprep.subr.mxu0 0.0
    %30 = vmatpush1.msra.mxu0 %v16
    %31 = vmatprep.subr.mxu0 0.0
    %32 = vmatpush1.msra.mxu0 %v17
    %33 = vmatprep.subr.mxu0 0.0
    %34 = vmatpush1.msra.mxu0 0.0
    %35 = vmatprep.subr.mxu0 0.0
    %36 = vmatpush1.msra.mxu0 0.0
    %37 = vmatprep.subr.mxu0 0.0
    %38 = vmatpush1.msra.mxu0 0.0
    %39 = vmatprep.subr.mxu0 0.0
    %40 = vmatpush1.msra.mxu0 0.0
    %41 = vmatprep.subr.mxu0 0.0
    %42 = vmatpush1.msra.mxu0 0.0
    %43 = vmatprep.subr.mxu0 0.0
    %44 = vmatpush1.msra.mxu0 0.0
    %45 = vmatprep.subr.mxu0 0.0
    %46 = vmatpush1.msra.mxu0 0.0
    %47 = vmatprep.subr.mxu0 0.0
    %48 = vmatpush1.msra.mxu0 0.0
    %49 = vmatprep.subr.mxu0 0.0
    %50 = vmatpush1.msra.mxu0 0.0
    %51 = vmatprep.subr.mxu0 0.0
    %52 = vmatpush1.msra.mxu0 0.0
    %53 = vmatprep.subr.mxu0 0.0
    %54 = vmatpush1.msra.mxu0 0.0
    %55 = vmatprep.subr.mxu0 0.0
    %56 = vmatpush1.msra.mxu0 0.0
    %57 = vmatprep.subr.mxu0 0.0
    %58 = vmatpush1.msra.mxu0 0.0
    %59 = vmatprep.subr.mxu0 0.0
    %60 = vmatpush1.msra.mxu0 0.0
    %61 = vmatprep.subr.mxu0 0.0
    %62 = vmatpush1.msra.mxu0 0.0
    %63 = vmatprep.subr.mxu0 0.0
    %64 = vmatpush1.msra.mxu0 0.0
    %65 = vmatprep.subr.mxu0 0.0
    %66 = vmatpush1.msra.mxu0 0.0
    %67 = vmatprep.subr.mxu0 0.0
    %68 = vmatpush1.msra.mxu0 0.0
    %69 = vmatprep.subr.mxu0 0.0
    %70 = vmatpush1.msra.mxu0 0.0
    %71 = vmatprep.subr.mxu0 0.0
    %72 = vmatpush1.msra.mxu0 0.0
    %73 = vmatprep.subr.mxu0 0.0
    %74 = vmatpush1.msra.mxu0 0.0
    %75 = vmatprep.subr.mxu0 0.0
    %76 = vmatpush1.msra.mxu0 0.0
    %77 = vmatprep.subr.mxu0 0.0
    %78 = vmatpush1.msra.mxu0 0.0
    %79 = vmatprep.subr.mxu0 0.0
    %80 = vmatpush1.msra.mxu0 0.0
    %81 = vmatprep.subr.mxu0 0.0
    %82 = vmatpush1.msra.mxu0 0.0
    %83 = vmatprep.subr.mxu0 0.0
    %84 = vmatpush1.msra.mxu0 0.0
    %85 = vmatprep.subr.mxu0 0.0
    %86 = vmatpush1.msra.mxu0 0.0
    %87 = vmatprep.subr.mxu0 0.0
    %88 = vmatpush1.msra.mxu0 0.0
    %89 = vmatprep.mubr.f32.mxu0 0.0
    %90 = vmatmul.mubr.f32.gmra.mrb[0].mxu0 %v20
    %v91 = vpop.f32.mrb[0].mxu0
    %v92 = vadd.f32 0.0, %v91
    %v93 = vpop.f32.mrb[0].mxu0
    %94 = vmatprep.mubr.f32.mxu0 0.0
    %95 = vmatmul.mubr.f32.gmra.mrb[0].mxu0 %v23
    %v96 = vpop.f32.mrb[0].mxu0
    %v97 = vadd.f32 0.0, %v96
    %v98 = vpop.f32.mrb[0].mxu0
    %99 = vdwg.mxu0
    %v100 = vlaneseq
    %v101 = vand.u32 %v100, 127
    %vm102 = vcmp.lt.s32.totalorder %v101, 40
    %v103 = vsel %vm102, %v92, -1e+30
    %v104 = vsel %vm102, %v97, -1e+30
    %105 = vmax.xlane.f32.xlu0 %v103
    %v106 = vpop.xlane.xlu0 %105
    %107 = vmax.xlane.f32.xlu0 %v104
    %v108 = vpop.xlane.xlu0 %107
    %v109 = vsub.f32 %v103, %v106
    %v110 = vsub.f32 %v104, %v108
    %v111 = vmul.f32 %v109, 1.442695
    %v112 = vpow.pop %v111
    %v113 = vmul.f32 %v110, 1.442695
    %v114 = vpow.pop %v113
    %115 = vadd.xlane.f32.xlu0 %v112
    %v116 = vpop.xlane.xlu0 %115
    %117 = vadd.xlane.f32.xlu0 %v114
    %v118 = vpop.xlane.xlu0 %117
    %v119 = vlog2.pop %v116
    %v120 = vmul.f32 %v119, 0.6931472
    %v121 = vlog2.pop %v118
    %v122 = vmul.f32 %v121, 0.6931472
    %v123 = vsub.f32 %v109, %v120
    %v124 = vsub.f32 %v110, %v122
    %125 = vst [vmem:[#allocation2] sm:$0xff] %v123
    %126 = vst [vmem:[#allocation2 + $0x8] sm:$0xff] %v124
    // Predicated region
    $region10: #{encoder_decoder_forward.5} parent=1 // pred_check
      _
    $region11: #{encoder_decoder_forward.5} parent=1 // pred_check_branch
      %128 = sbr.rel (0) target = $region13
    $region12: #{encoder_decoder_forward.5} parent=1 // pred_region
      %s130 = ssub.s32 256, 256
      %131 = vsyncadd [#allocation3], %s130
      %s132 = sshll.u32 [#allocation2], 4
      %s133 = int_to_ptr.vmem [resolvable:$true] %s132
      %138 = dma.vmem_to_hbm [thread:$0]  %s133, 256, %s2, [#allocation3], 128, 128, 8
    $region13: #{encoder_decoder_forward.5} parent=1 // pred_fallthru
      _
    // Predicated region
    $region14: #{encoder_decoder_forward.5} parent=1 // pred_check
      _
    $region15: #{encoder_decoder_forward.5} parent=1 // pred_check_branch
      %140 = sbr.rel (0) target = $region17
    $region16: #{encoder_decoder_forward.5} parent=1 // pred_region
      %141 = dma.done [#allocation3], 256
    $region17: #{encoder_decoder_forward.5} parent=1 // pred_fallthru
      _
    %142 = vsyncpa [#allocation3], 1

// kernel: encoder_decoder_forward.3
$region0: #{encoder_decoder_forward.3}
  #allocation0 [shape = 'u32[]', space=smem, size = 0x4, offset = 0x4, fixed_abs, tag = 'smem constant byte address 0x4 - core index']
  #allocation1 [shape = 'u32[144,128]{1,0:T(1,128)}', space=vmem, size = 0x12000, scoped, tag = 'internal scratch']
  #allocation2 [shape = 'f32[2,32]{1,0:T(2,128)}', space=vmem, size = 0x400, scoped, tag = 'scratch operand']
  #allocation3 [shape = 'f32[2,32]{1,0:T(2,128)}', space=vmem, size = 0x400, scoped, tag = 'scratch operand']
  #allocation4 [shape = 'f32[2,32]{1,0:T(2,128)}', space=vmem, size = 0x400, scoped, tag = 'scratch operand']
  #allocation5 [shape = 'f32[2,32]{1,0:T(2,128)}', space=vmem, size = 0x400, scoped, tag = 'scratch operand']
  %s0 = inlined_call_operand.vmem [shape: f32[8,2,32], index: 0, kind: input, shape index: {}, may-alias: {0,1}]
  %s1 = inlined_call_operand.vmem [shape: f32[8,2,32], index: 1, kind: input, shape index: {}, may-alias: {0,1}]
  %s2 = inlined_call_operand.vmem [shape: f32[32,128], index: 2, kind: input, shape index: {}]
  %s3 = inlined_call_operand.vmem [shape: f32[32,128], index: 3, kind: input, shape index: {}]
  %s4 = inlined_call_operand.vmem [shape: f32[1,128], index: 4, kind: input, shape index: {}]
  %s5 = inlined_call_operand.vmem [shape: f32[32,128], index: 5, kind: input, shape index: {}]
  %s6 = inlined_call_operand.vmem [shape: f32[32,128], index: 6, kind: input, shape index: {}]
  %s7 = inlined_call_operand.vmem [shape: f32[1,128], index: 7, kind: input, shape index: {}]
  %s8 = inlined_call_operand.vmem [shape: f32[8,2,32], index: 8, kind: output, shape index: {0}]
  %s9 = inlined_call_operand.vmem [shape: f32[8,2,32], index: 9, kind: output, shape index: {1}]
  %s10 = inlined_call_operand.vmem [shape: f32[2,32], index: 10, kind: output, shape index: {2}]
  %s11 = inlined_call_operand.vmem [shape: f32[2,32], index: 11, kind: output, shape index: {3}]
  %s12 = inlined_call_operand.vmem [shape: f32[2,32], index: 12, kind: output, shape index: {4}]
  %s13 = inlined_call_operand.vmem [shape: f32[2,32], index: 13, kind: output, shape index: {5}]
  %14 = xla_tuple %s8, %s9, %s10, %s11, %s12, %s13
  %s15 = sld [smem:[#allocation0]]
  $region109: #{encoder_decoder_forward.3} parent=0
    _
  %s17 = ssub.s32 1, %s15
  %s18 = scalar_select 0, %s17, %s15
  loop: start=0, step=1, limit=10
  $region2: #{encoder_decoder_forward.3} parent=0 // loop_pre_header
    _
  $region3: #{encoder_decoder_forward.3} parent=0 // loop_header
    %s20 = sphi 0, %s24
    %p21 = scmp.ge.s32.totalorder %s20, 10
    %s30 = sphi 0, %s32
    %s33 = sphi 0, %s30
    %s34 = sphi 0, %s33
    %s50 = sphi 0, %s34
    %s58 = sphi 0, %s60
    %s61 = sphi 0, %s58
    %s62 = sphi 0, %s61
    %s78 = sphi 0, %s62
    %s82 = sphi 0, %s82
    %s84 = sphi 0, %s82
    %s85 = sphi 0, %s84
    %s99 = sphi 0, %s85
    %s103 = sphi 0, %s103
    %s105 = sphi 0, %s103
    %s106 = sphi 0, %s105
    %s120 = sphi 0, %s106
    %s124 = sphi 0, %s124
    %s126 = sphi 0, %s124
    %s127 = sphi 0, %s126
    %s141 = sphi 0, %s127
    %s145 = sphi 0, %s145
    %s147 = sphi 0, %s145
    %s148 = sphi 0, %s147
    %s162 = sphi 0, %s148
    %s166 = sphi 0, %s166
    %s168 = sphi 0, %s166
    %s169 = sphi 0, %s168
    %s183 = sphi 0, %s169
    %s187 = sphi 0, %s187
    %s189 = sphi 0, %s187
    %s190 = sphi 0, %s189
    %s204 = sphi 0, %s190
    %s210 = sphi 0, %s212
    %s213 = sphi 0, %s210
    %s214 = sphi 0, %s213
    %s230 = sphi 0, %s214
    %s236 = sphi 0, %s238
    %s239 = sphi 0, %s236
    %s240 = sphi 0, %s239
    %s256 = sphi 0, %s240
    %s260 = sphi 0, %s260
    %s262 = sphi 0, %s260
    %s263 = sphi 0, %s262
    %s277 = sphi 0, %s263
    %s281 = sphi 0, %s281
    %s283 = sphi 0, %s281
    %s284 = sphi 0, %s283
    %s298 = sphi 0, %s284
    %s302 = sphi 0, %s302
    %s304 = sphi 0, %s302
    %s305 = sphi 0, %s304
    %s319 = sphi 0, %s305
    %s323 = sphi 0, %s323
    %s325 = sphi 0, %s323
    %s326 = sphi 0, %s325
    %s340 = sphi 0, %s326
  $region4: #{encoder_decoder_forward.3} parent=0 // loop_header_branch
    %23 = sbr.rel (%p21) target = $region8
  $region5: #{encoder_decoder_forward.3} parent=0 // loop_body
    %s25 = ssub.s32 %s20, 1
    %s26 = ssub.s32 %s20, 2
    %s27 = sadd.s32 %s20, 1
    %s28 = ssub.s32 %s20, %s27
    %p29 = scmp.eq.s32.totalorder %s28, 0
    %s31 = sadd.s32 %s30, 1
    %s32 = scalar_select %p29, %s30, %s31
    %p35 = pneg %p29
    %p36 = scmp.eq.s32.totalorder %s20, 7
    %p37 = por %p35, %p36
    %p38 = scmp.ne.s32.totalorder %s30, %s33
    %p39 = scmp.eq.s32.totalorder %s20, 0
    %p40 = por %p38, %p39
    %p41 = scmp.ne.s32.totalorder %s30, %s33
    %p42 = scmp.eq.s32.totalorder %s25, 7
    %p43 = por %p41, %p42
    %p44 = scmp.ne.s32.totalorder %s33, %s34
    %p45 = scmp.eq.s32.totalorder %s25, 0
    %p46 = por %p44, %p45
    %p47 = scmp.ne.s32.totalorder %s33, %s34
    %p48 = scmp.eq.s32.totalorder %s26, 7
    %p49 = por %p47, %p48
    %p51 = scmp.ne.s32.totalorder %s34, %s50
    %p52 = scmp.eq.s32.totalorder %s26, 0
    %p53 = por %p51, %p52
    %s54 = ssub.s32 7, %s20
    %s55 = ssub.s32 7, %s27
    %s56 = ssub.s32 %s54, %s55
    %p57 = scmp.eq.s32.totalorder %s56, 0
    %s59 = sadd.s32 %s58, 1
    %s60 = scalar_select %p57, %s58, %s59
    %p63 = pneg %p57
    %p64 = scmp.eq.s32.totalorder %s20, 7
    %p65 = por %p63, %p64
    %p66 = scmp.ne.s32.totalorder %s58, %s61
    %p67 = scmp.eq.s32.totalorder %s20, 0
    %p68 = por %p66, %p67
    %p69 = scmp.ne.s32.totalorder %s58, %s61
    %p70 = scmp.eq.s32.totalorder %s25, 7
    %p71 = por %p69, %p70
    %p72 = scmp.ne.s32.totalorder %s61, %s62
    %p73 = scmp.eq.s32.totalorder %s25, 0
    %p74 = por %p72, %p73
    %p75 = scmp.ne.s32.totalorder %s61, %s62
    %p76 = scmp.eq.s32.totalorder %s26, 7
    %p77 = por %p75, %p76
    %p79 = scmp.ne.s32.totalorder %s62, %s78
    %p80 = scmp.eq.s32.totalorder %s26, 0
    %p81 = por %p79, %p80
    %s83 = sadd.s32 %s82, 1
    %p86 = scmp.eq.s32.totalorder %s20, 7
    %p87 = scmp.ne.s32.totalorder %s82, %s84
    %p88 = scmp.eq.s32.totalorder %s20, 0
    %p89 = por %p87, %p88
    %p90 = scmp.ne.s32.totalorder %s82, %s84
    %p91 = scmp.eq.s32.totalorder %s25, 7
    %p92 = por %p90, %p91
    %p93 = scmp.ne.s32.totalorder %s84, %s85
    %p94 = scmp.eq.s32.totalorder %s25, 0
    %p95 = por %p93, %p94
    %p96 = scmp.ne.s32.totalorder %s84, %s85
    %p97 = scmp.eq.s32.totalorder %s26, 7
    %p98 = por %p96, %p97
    %p100 = scmp.ne.s32.totalorder %s85, %s99
    %p101 = scmp.eq.s32.totalorder %s26, 0
    %p102 = por %p100, %p101
    %s104 = sadd.s32 %s103, 1
    %p107 = scmp.eq.s32.totalorder %s20, 7
    %p108 = scmp.ne.s32.totalorder %s103, %s105
    %p109 = scmp.eq.s32.totalorder %s20, 0
    %p110 = por %p108, %p109
    %p111 = scmp.ne.s32.totalorder %s103, %s105
    %p112 = scmp.eq.s32.totalorder %s25, 7
    %p113 = por %p111, %p112
    %p114 = scmp.ne.s32.totalorder %s105, %s106
    %p115 = scmp.eq.s32.totalorder %s25, 0
    %p116 = por %p114, %p115
    %p117 = scmp.ne.s32.totalorder %s105, %s106
    %p118 = scmp.eq.s32.totalorder %s26, 7
    %p119 = por %p117, %p118
    %p121 = scmp.ne.s32.totalorder %s106, %s120
    %p122 = scmp.eq.s32.totalorder %s26, 0
    %p123 = por %p121, %p122
    %s125 = sadd.s32 %s124, 1
    %p128 = scmp.eq.s32.totalorder %s20, 7
    %p129 = scmp.ne.s32.totalorder %s124, %s126
    %p130 = scmp.eq.s32.totalorder %s20, 0
    %p131 = por %p129, %p130
    %p132 = scmp.ne.s32.totalorder %s124, %s126
    %p133 = scmp.eq.s32.totalorder %s25, 7
    %p134 = por %p132, %p133
    %p135 = scmp.ne.s32.totalorder %s126, %s127
    %p136 = scmp.eq.s32.totalorder %s25, 0
    %p137 = por %p135, %p136
    %p138 = scmp.ne.s32.totalorder %s126, %s127
    %p139 = scmp.eq.s32.totalorder %s26, 7
    %p140 = por %p138, %p139
    %p142 = scmp.ne.s32.totalorder %s127, %s141
    %p143 = scmp.eq.s32.totalorder %s26, 0
    %p144 = por %p142, %p143
    %s146 = sadd.s32 %s145, 1
    %p149 = scmp.eq.s32.totalorder %s20, 7
    %p150 = scmp.ne.s32.totalorder %s145, %s147
    %p151 = scmp.eq.s32.totalorder %s20, 0
    %p152 = por %p150, %p151
    %p153 = scmp.ne.s32.totalorder %s145, %s147
    %p154 = scmp.eq.s32.totalorder %s25, 7
    %p155 = por %p153, %p154
    %p156 = scmp.ne.s32.totalorder %s147, %s148
    %p157 = scmp.eq.s32.totalorder %s25, 0
    %p158 = por %p156, %p157
    %p159 = scmp.ne.s32.totalorder %s147, %s148
    %p160 = scmp.eq.s32.totalorder %s26, 7
    %p161 = por %p159, %p160
    %p163 = scmp.ne.s32.totalorder %s148, %s162
    %p164 = scmp.eq.s32.totalorder %s26, 0
    %p165 = por %p163, %p164
    %s167 = sadd.s32 %s166, 1
    %p170 = scmp.eq.s32.totalorder %s20, 7
    %p171 = scmp.ne.s32.totalorder %s166, %s168
    %p172 = scmp.eq.s32.totalorder %s20, 0
    %p173 = por %p171, %p172
    %p174 = scmp.ne.s32.totalorder %s166, %s168
    %p175 = scmp.eq.s32.totalorder %s25, 7
    %p176 = por %p174, %p175
    %p177 = scmp.ne.s32.totalorder %s168, %s169
    %p178 = scmp.eq.s32.totalorder %s25, 0
    %p179 = por %p177, %p178
    %p180 = scmp.ne.s32.totalorder %s168, %s169
    %p181 = scmp.eq.s32.totalorder %s26, 7
    %p182 = por %p180, %p181
    %p184 = scmp.ne.s32.totalorder %s169, %s183
    %p185 = scmp.eq.s32.totalorder %s26, 0
    %p186 = por %p184, %p185
    %s188 = sadd.s32 %s187, 1
    %p191 = scmp.eq.s32.totalorder %s20, 7
    %p192 = scmp.ne.s32.totalorder %s187, %s189
    %p193 = scmp.eq.s32.totalorder %s20, 0
    %p194 = por %p192, %p193
    %p195 = scmp.ne.s32.totalorder %s187, %s189
    %p196 = scmp.eq.s32.totalorder %s25, 7
    %p197 = por %p195, %p196
    %p198 = scmp.ne.s32.totalorder %s189, %s190
    %p199 = scmp.eq.s32.totalorder %s25, 0
    %p200 = por %p198, %p199
    %p201 = scmp.ne.s32.totalorder %s189, %s190
    %p202 = scmp.eq.s32.totalorder %s26, 7
    %p203 = por %p201, %p202
    %p205 = scmp.ne.s32.totalorder %s190, %s204
    %p206 = scmp.eq.s32.totalorder %s26, 0
    %p207 = por %p205, %p206
    %s208 = ssub.s32 %s20, %s27
    %p209 = scmp.eq.s32.totalorder %s208, 0
    %s211 = sadd.s32 %s210, 1
    %s212 = scalar_select %p209, %s210, %s211
    %p215 = pneg %p209
    %p216 = scmp.eq.s32.totalorder %s20, 7
    %p217 = por %p215, %p216
    %p218 = scmp.ne.s32.totalorder %s210, %s213
    %p219 = scmp.eq.s32.totalorder %s20, 0
    %p220 = por %p218, %p219
    %p221 = scmp.ne.s32.totalorder %s210, %s213
    %p222 = scmp.eq.s32.totalorder %s25, 7
    %p223 = por %p221, %p222
    %p224 = scmp.ne.s32.totalorder %s213, %s214
    %p225 = scmp.eq.s32.totalorder %s25, 0
    %p226 = por %p224, %p225
    %p227 = scmp.ne.s32.totalorder %s213, %s214
    %p228 = scmp.eq.s32.totalorder %s26, 7
    %p229 = por %p227, %p228
    %p231 = scmp.ne.s32.totalorder %s214, %s230
    %p232 = scmp.eq.s32.totalorder %s26, 0
    %p233 = por %p231, %p232
    %s234 = ssub.s32 %s20, %s27
    %p235 = scmp.eq.s32.totalorder %s234, 0
    %s237 = sadd.s32 %s236, 1
    %s238 = scalar_select %p235, %s236, %s237
    %p241 = pneg %p235
    %p242 = scmp.eq.s32.totalorder %s20, 7
    %p243 = por %p241, %p242
    %p244 = scmp.ne.s32.totalorder %s236, %s239
    %p245 = scmp.eq.s32.totalorder %s20, 0
    %p246 = por %p244, %p245
    %p247 = scmp.ne.s32.totalorder %s236, %s239
    %p248 = scmp.eq.s32.totalorder %s25, 7
    %p249 = por %p247, %p248
    %p250 = scmp.ne.s32.totalorder %s239, %s240
    %p251 = scmp.eq.s32.totalorder %s25, 0
    %p252 = por %p250, %p251
    %p253 = scmp.ne.s32.totalorder %s239, %s240
    %p254 = scmp.eq.s32.totalorder %s26, 7
    %p255 = por %p253, %p254
    %p257 = scmp.ne.s32.totalorder %s240, %s256
    %p258 = scmp.eq.s32.totalorder %s26, 0
    %p259 = por %p257, %p258
    %s261 = sadd.s32 %s260, 1
    %p264 = scmp.eq.s32.totalorder %s20, 7
    %p265 = scmp.ne.s32.totalorder %s260, %s262
    %p266 = scmp.eq.s32.totalorder %s20, 0
    %p267 = por %p265, %p266
    %p268 = scmp.ne.s32.totalorder %s260, %s262
    %p269 = scmp.eq.s32.totalorder %s25, 7
    %p270 = por %p268, %p269
    %p271 = scmp.ne.s32.totalorder %s262, %s263
    %p272 = scmp.eq.s32.totalorder %s25, 0
    %p273 = por %p271, %p272
    %p274 = scmp.ne.s32.totalorder %s262, %s263
    %p275 = scmp.eq.s32.totalorder %s26, 7
    %p276 = por %p274, %p275
    %p278 = scmp.ne.s32.totalorder %s263, %s277
    %p279 = scmp.eq.s32.totalorder %s26, 0
    %p280 = por %p278, %p279
    %s282 = sadd.s32 %s281, 1
    %p285 = scmp.eq.s32.totalorder %s20, 7
    %p286 = scmp.ne.s32.totalorder %s281, %s283
    %p287 = scmp.eq.s32.totalorder %s20, 0
    %p288 = por %p286, %p287
    %p289 = scmp.ne.s32.totalorder %s281, %s283
    %p290 = scmp.eq.s32.totalorder %s25, 7
    %p291 = por %p289, %p290
    %p292 = scmp.ne.s32.totalorder %s283, %s284
    %p293 = scmp.eq.s32.totalorder %s25, 0
    %p294 = por %p292, %p293
    %p295 = scmp.ne.s32.totalorder %s283, %s284
    %p296 = scmp.eq.s32.totalorder %s26, 7
    %p297 = por %p295, %p296
    %p299 = scmp.ne.s32.totalorder %s284, %s298
    %p300 = scmp.eq.s32.totalorder %s26, 0
    %p301 = por %p299, %p300
    %s303 = sadd.s32 %s302, 1
    %p306 = scmp.eq.s32.totalorder %s20, 7
    %p307 = scmp.ne.s32.totalorder %s302, %s304
    %p308 = scmp.eq.s32.totalorder %s20, 0
    %p309 = por %p307, %p308
    %p310 = scmp.ne.s32.totalorder %s302, %s304
    %p311 = scmp.eq.s32.totalorder %s25, 7
    %p312 = por %p310, %p311
    %p313 = scmp.ne.s32.totalorder %s304, %s305
    %p314 = scmp.eq.s32.totalorder %s25, 0
    %p315 = por %p313, %p314
    %p316 = scmp.ne.s32.totalorder %s304, %s305
    %p317 = scmp.eq.s32.totalorder %s26, 7
    %p318 = por %p316, %p317
    %p320 = scmp.ne.s32.totalorder %s305, %s319
    %p321 = scmp.eq.s32.totalorder %s26, 0
    %p322 = por %p320, %p321
    %s324 = sadd.s32 %s323, 1
    %p327 = scmp.eq.s32.totalorder %s20, 7
    %p328 = scmp.ne.s32.totalorder %s323, %s325
    %p329 = scmp.eq.s32.totalorder %s20, 0
    %p330 = por %p328, %p329
    %p331 = scmp.ne.s32.totalorder %s323, %s325
    %p332 = scmp.eq.s32.totalorder %s25, 7
    %p333 = por %p331, %p332
    %p334 = scmp.ne.s32.totalorder %s325, %s326
    %p335 = scmp.eq.s32.totalorder %s25, 0
    %p336 = por %p334, %p335
    %p337 = scmp.ne.s32.totalorder %s325, %s326
    %p338 = scmp.eq.s32.totalorder %s26, 7
    %p339 = por %p337, %p338
    %p341 = scmp.ne.s32.totalorder %s326, %s340
    %p342 = scmp.eq.s32.totalorder %s26, 0
    %p343 = por %p341, %p342
    %p344 = scmp.le.s32.totalorder 1, %s20
    %p345 = scmp.lt.s32.totalorder %s20, 9
    %p346 = pnand %p344, %p345
    %p347 = pneg %p346
    // Predicated region
    $region9: #{encoder_decoder_forward.3} parent=5 // pred_check
      _
    $region10: #{encoder_decoder_forward.3} parent=5 // pred_check_branch
      %349 = sbr.rel (%p346) target = $region12
    $region11: #{encoder_decoder_forward.3} parent=5 // pred_region
      %s350 = ssub.s32 %s20, 1
      // Predicated region
      $region13: #{encoder_decoder_forward.3} parent=11 // pred_check
        %p351 = pneg %p95
      $region14: #{encoder_decoder_forward.3} parent=11 // pred_check_branch
        %353 = sbr.rel (%p351) target = $region16
      $region15: #{encoder_decoder_forward.3} parent=11 // pred_region
        _
      $region16: #{encoder_decoder_forward.3} parent=11 // pred_fallthru
        _
      // Predicated region
      $region17: #{encoder_decoder_forward.3} parent=11 // pred_check
        %p354 = pneg %p116
      $region18: #{encoder_decoder_forward.3} parent=11 // pred_check_branch
        %356 = sbr.rel (%p354) target = $region20
      $region19: #{encoder_decoder_forward.3} parent=11 // pred_region
        _
      $region20: #{encoder_decoder_forward.3} parent=11 // pred_fallthru
        _
      // Predicated region
      $region21: #{encoder_decoder_forward.3} parent=11 // pred_check
        %p357 = pneg %p137
      $region22: #{encoder_decoder_forward.3} parent=11 // pred_check_branch
        %359 = sbr.rel (%p357) target = $region24
      $region23: #{encoder_decoder_forward.3} parent=11 // pred_region
        _
      $region24: #{encoder_decoder_forward.3} parent=11 // pred_fallthru
        _
      // Predicated region
      $region25: #{encoder_decoder_forward.3} parent=11 // pred_check
        %p360 = pneg %p158
      $region26: #{encoder_decoder_forward.3} parent=11 // pred_check_branch
        %362 = sbr.rel (%p360) target = $region28
      $region27: #{encoder_decoder_forward.3} parent=11 // pred_region
        _
      $region28: #{encoder_decoder_forward.3} parent=11 // pred_fallthru
        _
      // Predicated region
      $region29: #{encoder_decoder_forward.3} parent=11 // pred_check
        %p363 = pneg %p179
      $region30: #{encoder_decoder_forward.3} parent=11 // pred_check_branch
        %365 = sbr.rel (%p363) target = $region32
      $region31: #{encoder_decoder_forward.3} parent=11 // pred_region
        _
      $region32: #{encoder_decoder_forward.3} parent=11 // pred_fallthru
        _
      // Predicated region
      $region33: #{encoder_decoder_forward.3} parent=11 // pred_check
        %p366 = pneg %p200
      $region34: #{encoder_decoder_forward.3} parent=11 // pred_check_branch
        %368 = sbr.rel (%p366) target = $region36
      $region35: #{encoder_decoder_forward.3} parent=11 // pred_region
        _
      $region36: #{encoder_decoder_forward.3} parent=11 // pred_fallthru
        _
    $region12: #{encoder_decoder_forward.3} parent=5 // pred_fallthru
      _
    %p369 = scmp.lt.s32.totalorder %s20, 8
    // Predicated region
    $region37: #{encoder_decoder_forward.3} parent=5 // pred_check
      %p370 = pneg %p369
    $region38: #{encoder_decoder_forward.3} parent=5 // pred_check_branch
      %372 = sbr.rel (%p370) target = $region40
    $region39: #{encoder_decoder_forward.3} parent=5 // pred_region
      // Predicated region
      $region41: #{encoder_decoder_forward.3} parent=39 // pred_check
        %p373 = pneg %p40
      $region42: #{encoder_decoder_forward.3} parent=39 // pred_check_branch
        %375 = sbr.rel (%p373) target = $region44
      $region43: #{encoder_decoder_forward.3} parent=39 // pred_region
        %p376 = scmp.lt.s32.totalorder %s20, 7
        %s377 = scalar_select %p376, %s20, 7
        %s378 = smul.addr %s377, 2
        %s379 = scalar_lea.vmem %s0, %s378
      $region44: #{encoder_decoder_forward.3} parent=39 // pred_fallthru
        _
      // Predicated region
      $region45: #{encoder_decoder_forward.3} parent=39 // pred_check
        %p380 = pneg %p68
      $region46: #{encoder_decoder_forward.3} parent=39 // pred_check_branch
        %382 = sbr.rel (%p380) target = $region48
      $region47: #{encoder_decoder_forward.3} parent=39 // pred_region
        %s383 = ssub.s32 7, %s20
        %p384 = scmp.lt.s32.totalorder %s383, 7
        %s385 = scalar_select %p384, %s383, 7
        %s386 = smul.addr %s385, 2
        %s387 = scalar_lea.vmem %s1, %s386
        %s388 = ssub.s32 7, %s20
      $region48: #{encoder_decoder_forward.3} parent=39 // pred_fallthru
        _
    $region40: #{encoder_decoder_forward.3} parent=5 // pred_fallthru
      _
    %p389 = scmp.le.s32.totalorder 1, %s20
    %p390 = scmp.lt.s32.totalorder %s20, 9
    %p391 = pnand %p389, %p390
    %p392 = pneg %p391
    // Predicated region
    $region49: #{encoder_decoder_forward.3} parent=5 // pred_check
      _
    $region50: #{encoder_decoder_forward.3} parent=5 // pred_check_branch
      %394 = sbr.rel (%p391) target = $region52
    $region51: #{encoder_decoder_forward.3} parent=5 // pred_region
      %s395 = ssub.s32 %s20, 1
      %p396 = scmp.lt.s32.totalorder %s25, 7
      %s397 = scalar_select %p396, %s25, 7
      %s398 = smul.addr %s397, 2
      %s399 = scalar_lea.vmem %s0, %s398
      %p400 = pneg %p46
      %p401 = pneg %p43
      %s402 = ssub.s32 7, %s25
      %p403 = scmp.lt.s32.totalorder %s402, 7
      %s404 = scalar_select %p403, %s402, 7
      %s405 = smul.addr %s404, 2
      %s406 = scalar_lea.vmem %s1, %s405
      %p407 = pneg %p74
      %p408 = pneg %p71
      %p409 = pneg %p95
      %p410 = pneg %p92
      %p411 = pneg %p116
      %p412 = pneg %p113
      %p413 = pneg %p137
      %p414 = pneg %p134
      %p415 = pneg %p158
      %p416 = pneg %p155
      %p417 = pneg %p179
      %p418 = pneg %p176
      %p419 = pneg %p200
      %p420 = pneg %p197
      %p421 = pneg %p226
      %p422 = pneg %p223
      %p423 = scmp.lt.s32.totalorder %s25, 7
      %s424 = scalar_select %p423, %s25, 7
      %s425 = smul.addr %s424, 2
      %s426 = scalar_lea.vmem %s8, %s425
      %p427 = pneg %p252
      %p428 = pneg %p249
      %p429 = scmp.lt.s32.totalorder %s25, 7
      %s430 = scalar_select %p429, %s25, 7
      %s431 = smul.addr %s430, 2
      %s432 = scalar_lea.vmem %s9, %s431
      %p433 = pneg %p273
      %p434 = pneg %p270
      %p435 = pneg %p294
      %p436 = pneg %p291
      %p437 = pneg %p315
      %p438 = pneg %p312
      %p439 = pneg %p336
      %p440 = pneg %p333
      %p441 = scmp.lt.s32.totalorder %s25, 7
      %s442 = scalar_select %p441, %s25, 7
      %s443 = smul.addr %s442, 2
      %s444 = scalar_lea.vmem %s0, %s443
      %s445 = ssub.s32 7, %s25
      %p446 = scmp.lt.s32.totalorder %s445, 7
      %s447 = scalar_select %p446, %s445, 7
      %s448 = smul.addr %s447, 2
      %s449 = scalar_lea.vmem %s1, %s448
      %s450 = ssub.s32 7, %s25
      %p451 = scmp.lt.s32.totalorder %s25, 7
      %s452 = scalar_select %p451, %s25, 7
      %s453 = smul.addr %s452, 2
      %s454 = scalar_lea.vmem %s8, %s453
      %p455 = scmp.lt.s32.totalorder %s25, 7
      %s456 = scalar_select %p455, %s25, 7
      %s457 = smul.addr %s456, 2
      %s458 = scalar_lea.vmem %s9, %s457
      %p459 = scmp.eq.s32.totalorder %s25, 0
      // Predicated region
      $region53: #{encoder_decoder_forward.3} parent=51 // pred_check
        %p460 = pneg %p459
      $region54: #{encoder_decoder_forward.3} parent=51 // pred_check_branch
        %462 = sbr.rel (%p460) target = $region56
      $region55: #{encoder_decoder_forward.3} parent=51 // pred_region
        %vm463 = vcmask 254976
        %464 = vst.msk [vmem:[#allocation2] sm:$0x3] %vm463, 0.0
        %465 = vst.msk [vmem:[#allocation3] sm:$0x3] %vm463, 0.0
        %466 = vst.msk [vmem:[#allocation4] sm:$0x3] %vm463, 0.0
        %467 = vst.msk [vmem:[#allocation5] sm:$0x3] %vm463, 0.0
      $region56: #{encoder_decoder_forward.3} parent=51 // pred_fallthru
        _
      %v468 = vld [vmem:[%s444] sm:$0x3]
      %v469 = vld [vmem:[#allocation2] sm:$0x3]
      %v470 = vld [vmem:[#allocation3] sm:$0x3]
      %v471 = vld [vmem:[%s2] sm:$0xff]
      %v472 = vld [vmem:[%s2 + $0x8] sm:$0xff]
      %v473 = vld [vmem:[%s2 + $0x10] sm:$0xff]
      %v474 = vld [vmem:[%s2 + $0x18] sm:$0xff]
      %v475 = vld [vmem:[%s3] sm:$0xff]
      %v476 = vld [vmem:[%s3 + $0x8] sm:$0xff]
      %v477 = vld [vmem:[%s3 + $0x10] sm:$0xff]
      %v478 = vld [vmem:[%s3 + $0x18] sm:$0xff]
      %v479 = vld [vmem:[%s4] sm:$0x1]
      %vm480 = vcmask 261120
      %v482 = vsel %vm480, %v469, 0
      %484 = vmatprep.subr.mxu0 0.0
      %485 = vmatpush1.msra.mxu0 %v475
      %486 = vmatprep.subr.mxu0 0.0
      %487 = vmatpush1.msra.mxu0 %v476
      %488 = vmatprep.subr.mxu0 0.0
      %489 = vmatpush1.msra.mxu0 %v477
      %490 = vmatprep.subr.mxu0 0.0
      %491 = vmatpush1.msra.mxu0 %v478
      %492 = vmatprep.subr.mxu0 0.0
      %493 = vmatpush1.msra.mxu0 0.0
      %494 = vmatprep.subr.mxu0 0.0
      %495 = vmatpush1.msra.mxu0 0.0
      %496 = vmatprep.subr.mxu0 0.0
      %497 = vmatpush1.msra.mxu0 0.0
      %498 = vmatprep.subr.mxu0 0.0
      %499 = vmatpush1.msra.mxu0 0.0
      %500 = vmatprep.subr.mxu0 0.0
      %501 = vmatpush1.msra.mxu0 0.0
      %502 = vmatprep.subr.mxu0 0.0
      %503 = vmatpush1.msra.mxu0 0.0
      %504 = vmatprep.subr.mxu0 0.0
      %505 = vmatpush1.msra.mxu0 0.0
      %506 = vmatprep.subr.mxu0 0.0
      %507 = vmatpush1.msra.mxu0 0.0
      %508 = vmatprep.subr.mxu0 0.0
      %509 = vmatpush1.msra.mxu0 0.0
      %510 = vmatprep.subr.mxu0 0.0
      %511 = vmatpush1.msra.mxu0 0.0
      %512 = vmatprep.subr.mxu0 0.0
      %513 = vmatpush1.msra.mxu0 0.0
      %514 = vmatprep.subr.mxu0 0.0
      %515 = vmatpush1.msra.mxu0 0.0
      %516 = vmatprep.subr.mxu0 0.0
      %517 = vmatpush1.msra.mxu0 0.0
      %518 = vmatprep.subr.mxu0 0.0
      %519 = vmatpush1.msra.mxu0 0.0
      %520 = vmatprep.subr.mxu0 0.0
      %521 = vmatpush1.msra.mxu0 0.0
      %522 = vmatprep.subr.mxu0 0.0
      %523 = vmatpush1.msra.mxu0 0.0
      %524 = vmatprep.subr.mxu0 0.0
      %525 = vmatpush1.msra.mxu0 0.0
      %526 = vmatprep.subr.mxu0 0.0
      %527 = vmatpush1.msra.mxu0 0.0
      %528 = vmatprep.subr.mxu0 0.0
      %529 = vmatpush1.msra.mxu0 0.0
      %530 = vmatprep.subr.mxu0 0.0
      %531 = vmatpush1.msra.mxu0 0.0
      %532 = vmatprep.subr.mxu0 0.0
      %533 = vmatpush1.msra.mxu0 0.0
      %534 = vmatprep.subr.mxu0 0.0
      %535 = vmatpush1.msra.mxu0 0.0
      %536 = vmatprep.subr.mxu0 0.0
      %537 = vmatpush1.msra.mxu0 0.0
      %538 = vmatprep.subr.mxu0 0.0
      %539 = vmatpush1.msra.mxu0 0.0
      %540 = vmatprep.subr.mxu0 0.0
      %541 = vmatpush1.msra.mxu0 0.0
      %542 = vmatprep.subr.mxu0 0.0
      %543 = vmatpush1.msra.mxu0 0.0
      %544 = vmatprep.subr.mxu0 0.0
      %545 = vmatpush1.msra.mxu0 0.0
      %546 = vmatprep.subr.mxu0 0.0
      %547 = vmatpush1.msra.mxu0 0.0
      %548 = vmatprep.mubr.f32.mxu0 0.0
      %549 = vmatmul.mubr.f32.gmra.mrb[0].mxu0 %v482
      %v550 = vpop.f32.mrb[0].mxu0
      %v551 = vadd.f32 0.0, %v550
      %v552 = vpop.f32.mrb[0].mxu0
      %553 = vdwg.mxu0
      %v555 = vsel %vm480, %v468, 0
      %557 = vmatprep.subr.mxu0 0.0
      %558 = vmatpush1.msra.mxu0 %v471
      %559 = vmatprep.subr.mxu0 0.0
      %560 = vmatpush1.msra.mxu0 %v472
      %561 = vmatprep.subr.mxu0 0.0
      %562 = vmatpush1.msra.mxu0 %v473
      %563 = vmatprep.subr.mxu0 0.0
      %564 = vmatpush1.msra.mxu0 %v474
      %565 = vmatprep.subr.mxu0 0.0
      %566 = vmatpush1.msra.mxu0 0.0
      %567 = vmatprep.subr.mxu0 0.0
      %568 = vmatpush1.msra.mxu0 0.0
      %569 = vmatprep.subr.mxu0 0.0
      %570 = vmatpush1.msra.mxu0 0.0
      %571 = vmatprep.subr.mxu0 0.0
      %572 = vmatpush1.msra.mxu0 0.0
      %573 = vmatprep.subr.mxu0 0.0
      %574 = vmatpush1.msra.mxu0 0.0
      %575 = vmatprep.subr.mxu0 0.0
      %576 = vmatpush1.msra.mxu0 0.0
      %577 = vmatprep.subr.mxu0 0.0
      %578 = vmatpush1.msra.mxu0 0.0
      %579 = vmatprep.subr.mxu0 0.0
      %580 = vmatpush1.msra.mxu0 0.0
      %581 = vmatprep.subr.mxu0 0.0
      %582 = vmatpush1.msra.mxu0 0.0
      %583 = vmatprep.subr.mxu0 0.0
      %584 = vmatpush1.msra.mxu0 0.0
      %585 = vmatprep.subr.mxu0 0.0
      %586 = vmatpush1.msra.mxu0 0.0
      %587 = vmatprep.subr.mxu0 0.0
      %588 = vmatpush1.msra.mxu0 0.0
      %589 = vmatprep.subr.mxu0 0.0
      %590 = vmatpush1.msra.mxu0 0.0
      %591 = vmatprep.subr.mxu0 0.0
      %592 = vmatpush1.msra.mxu0 0.0
      %593 = vmatprep.subr.mxu0 0.0
      %594 = vmatpush1.msra.mxu0 0.0
      %595 = vmatprep.subr.mxu0 0.0
      %596 = vmatpush1.msra.mxu0 0.0
      %597 = vmatprep.subr.mxu0 0.0
      %598 = vmatpush1.msra.mxu0 0.0
      %599 = vmatprep.subr.mxu0 0.0
      %600 = vmatpush1.msra.mxu0 0.0
      %601 = vmatprep.subr.mxu0 0.0
      %602 = vmatpush1.msra.mxu0 0.0
      %603 = vmatprep.subr.mxu0 0.0
      %604 = vmatpush1.msra.mxu0 0.0
      %605 = vmatprep.subr.mxu0 0.0
      %606 = vmatpush1.msra.mxu0 0.0
      %607 = vmatprep.subr.mxu0 0.0
      %608 = vmatpush1.msra.mxu0 0.0
      %609 = vmatprep.subr.mxu0 0.0
      %610 = vmatpush1.msra.mxu0 0.0
      %611 = vmatprep.subr.mxu0 0.0
      %612 = vmatpush1.msra.mxu0 0.0
      %613 = vmatprep.subr.mxu0 0.0
      %614 = vmatpush1.msra.mxu0 0.0
      %615 = vmatprep.subr.mxu0 0.0
      %616 = vmatpush1.msra.mxu0 0.0
      %617 = vmatprep.subr.mxu0 0.0
      %618 = vmatpush1.msra.mxu0 0.0
      %619 = vmatprep.subr.mxu0 0.0
      %620 = vmatpush1.msra.mxu0 0.0
      %621 = vmatprep.mubr.f32.mxu0 0.0
      %622 = vmatmul.mubr.f32.gmra.mrb[0].mxu0 %v555
      %v623 = vpop.f32.mrb[0].mxu0
      %v624 = vadd.f32 %v551, %v623
      %v625 = vpop.f32.mrb[0].mxu0
      %626 = vdwg.mxu0
      %v628 = vlaneseq
      %v629 = vshrl.u32 %v628, 7
      %v630 = vsub.s32 0, %v629
      %v631 = vrot.slane %v479, %v630
      %v633 = vadd.f32 %v624, %v631
      %v634 = vxor.u32 %v633, 2147483648
      %v635 = vmul.f32 %v634, 1.442695
      %v636 = vpow.pop %v635
      %v637 = vadd.f32 %v636, 1.0
      %v638 = vrcp.pop %v637
      %v639 = vmul.f32 1.0, %v638
      %v640 = vtanh.pop %v633
      %642 = vrot.lane.b32.xlu0 %v470, 32
      %v643 = vpop.permute.xlu0 %642
      %v645 = vmul.f32 %v639, %v643
      %647 = vrot.lane.b32.xlu0 %v640, 64
      %v648 = vpop.permute.xlu0 %647
      %v650 = vmul.f32 %v639, %v648
      %652 = vrot.lane.b32.xlu0 %v650, 32
      %v653 = vpop.permute.xlu0 %652
      %v655 = vadd.f32 %v645, %v653
      %v656 = vtanh.pop %v655
      %658 = vrot.lane.b32.xlu0 %v656, 64
      %v659 = vpop.permute.xlu0 %658
      %v661 = vmul.f32 %v639, %v659
      %v662 = vld [vmem:[%s449] sm:$0x3]
      %v663 = vld [vmem:[#allocation4] sm:$0x3]
      %v664 = vld [vmem:[#allocation5] sm:$0x3]
      %v665 = vld [vmem:[%s5] sm:$0xff]
      %v666 = vld [vmem:[%s5 + $0x8] sm:$0xff]
      %v667 = vld [vmem:[%s5 + $0x10] sm:$0xff]
      %v668 = vld [vmem:[%s5 + $0x18] sm:$0xff]
      %v669 = vld [vmem:[%s6] sm:$0xff]
      %v670 = vld [vmem:[%s6 + $0x8] sm:$0xff]
      %v671 = vld [vmem:[%s6 + $0x10] sm:$0xff]
      %v672 = vld [vmem:[%s6 + $0x18] sm:$0xff]
      %v673 = vld [vmem:[%s7] sm:$0x1]
      %v675 = vsel %vm480, %v663, 0
      %677 = vmatprep.subr.mxu0 0.0
      %678 = vmatpush1.msra.mxu0 %v669
      %679 = vmatprep.subr.mxu0 0.0
      %680 = vmatpush1.msra.mxu0 %v670
      %681 = vmatprep.subr.mxu0 0.0
      %682 = vmatpush1.msra.mxu0 %v671
      %683 = vmatprep.subr.mxu0 0.0
      %684 = vmatpush1.msra.mxu0 %v672
      %685 = vmatprep.subr.mxu0 0.0
      %686 = vmatpush1.msra.mxu0 0.0
      %687 = vmatprep.subr.mxu0 0.0
      %688 = vmatpush1.msra.mxu0 0.0
      %689 = vmatprep.subr.mxu0 0.0
      %690 = vmatpush1.msra.mxu0 0.0
      %691 = vmatprep.subr.mxu0 0.0
      %692 = vmatpush1.msra.mxu0 0.0
      %693 = vmatprep.subr.mxu0 0.0
      %694 = vmatpush1.msra.mxu0 0.0
      %695 = vmatprep.subr.mxu0 0.0
      %696 = vmatpush1.msra.mxu0 0.0
      %697 = vmatprep.subr.mxu0 0.0
      %698 = vmatpush1.msra.mxu0 0.0
      %699 = vmatprep.subr.mxu0 0.0
      %700 = vmatpush1.msra.mxu0 0.0
      %701 = vmatprep.subr.mxu0 0.0
      %702 = vmatpush1.msra.mxu0 0.0
      %703 = vmatprep.subr.mxu0 0.0
      %704 = vmatpush1.msra.mxu0 0.0
      %705 = vmatprep.subr.mxu0 0.0
      %706 = vmatpush1.msra.mxu0 0.0
      %707 = vmatprep.subr.mxu0 0.0
      %708 = vmatpush1.msra.mxu0 0.0
      %709 = vmatprep.subr.mxu0 0.0
      %710 = vmatpush1.msra.mxu0 0.0
      %711 = vmatprep.subr.mxu0 0.0
      %712 = vmatpush1.msra.mxu0 0.0
      %713 = vmatprep.subr.mxu0 0.0
      %714 = vmatpush1.msra.mxu0 0.0
      %715 = vmatprep.subr.mxu0 0.0
      %716 = vmatpush1.msra.mxu0 0.0
      %717 = vmatprep.subr.mxu0 0.0
      %718 = vmatpush1.msra.mxu0 0.0
      %719 = vmatprep.subr.mxu0 0.0
      %720 = vmatpush1.msra.mxu0 0.0
      %721 = vmatprep.subr.mxu0 0.0
      %722 = vmatpush1.msra.mxu0 0.0
      %723 = vmatprep.subr.mxu0 0.0
      %724 = vmatpush1.msra.mxu0 0.0
      %725 = vmatprep.subr.mxu0 0.0
      %726 = vmatpush1.msra.mxu0 0.0
      %727 = vmatprep.subr.mxu0 0.0
      %728 = vmatpush1.msra.mxu0 0.0
      %729 = vmatprep.subr.mxu0 0.0
      %730 = vmatpush1.msra.mxu0 0.0
      %731 = vmatprep.subr.mxu0 0.0
      %732 = vmatpush1.msra.mxu0 0.0
      %733 = vmatprep.subr.mxu0 0.0
      %734 = vmatpush1.msra.mxu0 0.0
      %735 = vmatprep.subr.mxu0 0.0
      %736 = vmatpush1.msra.mxu0 0.0
      %737 = vmatprep.subr.mxu0 0.0
      %738 = vmatpush1.msra.mxu0 0.0
      %739 = vmatprep.subr.mxu0 0.0
      %740 = vmatpush1.msra.mxu0 0.0
      %741 = vmatprep.mubr.f32.mxu0 0.0
      %742 = vmatmul.mubr.f32.gmra.mrb[0].mxu0 %v675
      %v743 = vpop.f32.mrb[0].mxu0
      %v744 = vadd.f32 0.0, %v743
      %v745 = vpop.f32.mrb[0].mxu0
      %746 = vdwg.mxu0
      %v748 = vsel %vm480, %v662, 0
      %750 = vmatprep.subr.mxu0 0.0
      %751 = vmatpush1.msra.mxu0 %v665
      %752 = vmatprep.subr.mxu0 0.0
      %753 = vmatpush1.msra.mxu0 %v666
      %754 = vmatprep.subr.mxu0 0.0
      %755 = vmatpush1.msra.mxu0 %v667
      %756 = vmatprep.subr.mxu0 0.0
      %757 = vmatpush1.msra.mxu0 %v668
      %758 = vmatprep.subr.mxu0 0.0
      %759 = vmatpush1.msra.mxu0 0.0
      %760 = vmatprep.subr.mxu0 0.0
      %761 = vmatpush1.msra.mxu0 0.0
      %762 = vmatprep.subr.mxu0 0.0
      %763 = vmatpush1.msra.mxu0 0.0
      %764 = vmatprep.subr.mxu0 0.0
      %765 = vmatpush1.msra.mxu0 0.0
      %766 = vmatprep.subr.mxu0 0.0
      %767 = vmatpush1.msra.mxu0 0.0
      %768 = vmatprep.subr.mxu0 0.0
      %769 = vmatpush1.msra.mxu0 0.0
      %770 = vmatprep.subr.mxu0 0.0
      %771 = vmatpush1.msra.mxu0 0.0
      %772 = vmatprep.subr.mxu0 0.0
      %773 = vmatpush1.msra.mxu0 0.0
      %774 = vmatprep.subr.mxu0 0.0
      %775 = vmatpush1.msra.mxu0 0.0
      %776 = vmatprep.subr.mxu0 0.0
      %777 = vmatpush1.msra.mxu0 0.0
      %778 = vmatprep.subr.mxu0 0.0
      %779 = vmatpush1.msra.mxu0 0.0
      %780 = vmatprep.subr.mxu0 0.0
      %781 = vmatpush1.msra.mxu0 0.0
      %782 = vmatprep.subr.mxu0 0.0
      %783 = vmatpush1.msra.mxu0 0.0
      %784 = vmatprep.subr.mxu0 0.0
      %785 = vmatpush1.msra.mxu0 0.0
      %786 = vmatprep.subr.mxu0 0.0
      %787 = vmatpush1.msra.mxu0 0.0
      %788 = vmatprep.subr.mxu0 0.0
      %789 = vmatpush1.msra.mxu0 0.0
      %790 = vmatprep.subr.mxu0 0.0
      %791 = vmatpush1.msra.mxu0 0.0
      %792 = vmatprep.subr.mxu0 0.0
      %793 = vmatpush1.msra.mxu0 0.0
      %794 = vmatprep.subr.mxu0 0.0
      %795 = vmatpush1.msra.mxu0 0.0
      %796 = vmatprep.subr.mxu0 0.0
      %797 = vmatpush1.msra.mxu0 0.0
      %798 = vmatprep.subr.mxu0 0.0
      %799 = vmatpush1.msra.mxu0 0.0
      %800 = vmatprep.subr.mxu0 0.0
      %801 = vmatpush1.msra.mxu0 0.0
      %802 = vmatprep.subr.mxu0 0.0
      %803 = vmatpush1.msra.mxu0 0.0
      %804 = vmatprep.subr.mxu0 0.0
      %805 = vmatpush1.msra.mxu0 0.0
      %806 = vmatprep.subr.mxu0 0.0
      %807 = vmatpush1.msra.mxu0 0.0
      %808 = vmatprep.subr.mxu0 0.0
      %809 = vmatpush1.msra.mxu0 0.0
      %810 = vmatprep.subr.mxu0 0.0
      %811 = vmatpush1.msra.mxu0 0.0
      %812 = vmatprep.subr.mxu0 0.0
      %813 = vmatpush1.msra.mxu0 0.0
      %814 = vmatprep.mubr.f32.mxu0 0.0
      %815 = vmatmul.mubr.f32.gmra.mrb[0].mxu0 %v748
      %v816 = vpop.f32.mrb[0].mxu0
      %v817 = vadd.f32 %v744, %v816
      %v818 = vpop.f32.mrb[0].mxu0
      %819 = vdwg.mxu0
      %v821 = vlaneseq
      %v822 = vshrl.u32 %v821, 7
      %v823 = vsub.s32 0, %v822
      %v824 = vrot.slane %v673, %v823
      %v826 = vadd.f32 %v817, %v824
      %v827 = vxor.u32 %v826, 2147483648
      %v828 = vmul.f32 %v827, 1.442695
      %v829 = vpow.pop %v828
      %v830 = vadd.f32 %v829, 1.0
      %v831 = vrcp.pop %v830
      %v832 = vmul.f32 1.0, %v831
      %v833 = vtanh.pop %v826
      %835 = vrot.lane.b32.xlu0 %v664, 32
      %v836 = vpop.permute.xlu0 %835
      %v838 = vmul.f32 %v832, %v836
      %840 = vrot.lane.b32.xlu0 %v833, 64
      %v841 = vpop.permute.xlu0 %840
      %v843 = vmul.f32 %v832, %v841
      %845 = vrot.lane.b32.xlu0 %v843, 32
      %v846 = vpop.permute.xlu0 %845
      %v848 = vadd.f32 %v838, %v846
      %v849 = vtanh.pop %v848
      %851 = vrot.lane.b32.xlu0 %v849, 64
      %v852 = vpop.permute.xlu0 %851
      %v854 = vmul.f32 %v832, %v852
      %856 = vrot.lane.b32.xlu0 %v661, 32
      %v857 = vpop.permute.xlu0 %856
      %vm859 = vcmask 254976
      %860 = vst.msk [vmem:[#allocation2] sm:$0x3] %vm859, %v857
      %862 = vrot.lane.b32.xlu0 %v655, 96
      %v863 = vpop.permute.xlu0 %862
      %865 = vst.msk [vmem:[#allocation3] sm:$0x3] %vm859, %v863
      %867 = vrot.lane.b32.xlu0 %v854, 32
      %v868 = vpop.permute.xlu0 %867
      %870 = vst.msk [vmem:[#allocation4] sm:$0x3] %vm859, %v868
      %872 = vrot.lane.b32.xlu0 %v848, 96
      %v873 = vpop.permute.xlu0 %872
      %875 = vst.msk [vmem:[#allocation5] sm:$0x3] %vm859, %v873
      %876 = vst.msk [vmem:[%s454] sm:$0x3] %vm859, %v857
      %877 = vst.msk [vmem:[%s458] sm:$0x3] %vm859, %v868
      %878 = vst.msk [vmem:[%s10] sm:$0x3] %vm859, %v857
      %879 = vst.msk [vmem:[%s11] sm:$0x3] %vm859, %v863
      %880 = vst.msk [vmem:[%s12] sm:$0x3] %vm859, %v868
      %881 = vst.msk [vmem:[%s13] sm:$0x3] %vm859, %v873
      %p882 = scmp.lt.s32.totalorder %s25, 7
      %s883 = scalar_select %p882, %s25, 7
      %s884 = smul.addr %s883, 2
      %s885 = scalar_lea.vmem %s8, %s884
      %p886 = scmp.lt.s32.totalorder %s25, 7
      %s887 = scalar_select %p886, %s25, 7
      %s888 = smul.addr %s887, 2
      %s889 = scalar_lea.vmem %s9, %s888
      // Predicated region
      $region57: #{encoder_decoder_forward.3} parent=51 // pred_check
        %p890 = pneg %p223
      $region58: #{encoder_decoder_forward.3} parent=51 // pred_check_branch
        %892 = sbr.rel (%p890) target = $region60
      $region59: #{encoder_decoder_forward.3} parent=51 // pred_region
        _
      $region60: #{encoder_decoder_forward.3} parent=51 // pred_fallthru
        _
      // Predicated region
      $region61: #{encoder_decoder_forward.3} parent=51 // pred_check
        %p893 = pneg %p249
      $region62: #{encoder_decoder_forward.3} parent=51 // pred_check_branch
        %895 = sbr.rel (%p893) target = $region64
      $region63: #{encoder_decoder_forward.3} parent=51 // pred_region
        _
      $region64: #{encoder_decoder_forward.3} parent=51 // pred_fallthru
        _
      // Predicated region
      $region65: #{encoder_decoder_forward.3} parent=51 // pred_check
        %p896 = pneg %p270
      $region66: #{encoder_decoder_forward.3} parent=51 // pred_check_branch
        %898 = sbr.rel (%p896) target = $region68
      $region67: #{encoder_decoder_forward.3} parent=51 // pred_region
        _
      $region68: #{encoder_decoder_forward.3} parent=51 // pred_fallthru
        _
      // Predicated region
      $region69: #{encoder_decoder_forward.3} parent=51 // pred_check
        %p899 = pneg %p291
      $region70: #{encoder_decoder_forward.3} parent=51 // pred_check_branch
        %901 = sbr.rel (%p899) target = $region72
      $region71: #{encoder_decoder_forward.3} parent=51 // pred_region
        _
      $region72: #{encoder_decoder_forward.3} parent=51 // pred_fallthru
        _
      // Predicated region
      $region73: #{encoder_decoder_forward.3} parent=51 // pred_check
        %p902 = pneg %p312
      $region74: #{encoder_decoder_forward.3} parent=51 // pred_check_branch
        %904 = sbr.rel (%p902) target = $region76
      $region75: #{encoder_decoder_forward.3} parent=51 // pred_region
        _
      $region76: #{encoder_decoder_forward.3} parent=51 // pred_fallthru
        _
      // Predicated region
      $region77: #{encoder_decoder_forward.3} parent=51 // pred_check
        %p905 = pneg %p333
      $region78: #{encoder_decoder_forward.3} parent=51 // pred_check_branch
        %907 = sbr.rel (%p905) target = $region80
      $region79: #{encoder_decoder_forward.3} parent=51 // pred_region
        _
      $region80: #{encoder_decoder_forward.3} parent=51 // pred_fallthru
        _
      // Predicated region
      $region81: #{encoder_decoder_forward.3} parent=51 // pred_check
        %p908 = pneg %p270
      $region82: #{encoder_decoder_forward.3} parent=51 // pred_check_branch
        %910 = sbr.rel (%p908) target = $region84
      $region83: #{encoder_decoder_forward.3} parent=51 // pred_region
        _
      $region84: #{encoder_decoder_forward.3} parent=51 // pred_fallthru
        _
      // Predicated region
      $region85: #{encoder_decoder_forward.3} parent=51 // pred_check
        %p911 = pneg %p291
      $region86: #{encoder_decoder_forward.3} parent=51 // pred_check_branch
        %913 = sbr.rel (%p911) target = $region88
      $region87: #{encoder_decoder_forward.3} parent=51 // pred_region
        _
      $region88: #{encoder_decoder_forward.3} parent=51 // pred_fallthru
        _
      // Predicated region
      $region89: #{encoder_decoder_forward.3} parent=51 // pred_check
        %p914 = pneg %p312
      $region90: #{encoder_decoder_forward.3} parent=51 // pred_check_branch
        %916 = sbr.rel (%p914) target = $region92
      $region91: #{encoder_decoder_forward.3} parent=51 // pred_region
        _
      $region92: #{encoder_decoder_forward.3} parent=51 // pred_fallthru
        _
      // Predicated region
      $region93: #{encoder_decoder_forward.3} parent=51 // pred_check
        %p917 = pneg %p333
      $region94: #{encoder_decoder_forward.3} parent=51 // pred_check_branch
        %919 = sbr.rel (%p917) target = $region96
      $region95: #{encoder_decoder_forward.3} parent=51 // pred_region
        _
      $region96: #{encoder_decoder_forward.3} parent=51 // pred_fallthru
        _
    $region52: #{encoder_decoder_forward.3} parent=5 // pred_fallthru
      _
    %p920 = scmp.le.s32.totalorder 2, %s20
    // Predicated region
    $region97: #{encoder_decoder_forward.3} parent=5 // pred_check
      %p921 = pneg %p920
    $region98: #{encoder_decoder_forward.3} parent=5 // pred_check_branch
      %923 = sbr.rel (%p921) target = $region100
    $region99: #{encoder_decoder_forward.3} parent=5 // pred_region
      %s924 = ssub.s32 %s20, 2
      // Predicated region
      $region101: #{encoder_decoder_forward.3} parent=99 // pred_check
        %p925 = pneg %p229
      $region102: #{encoder_decoder_forward.3} parent=99 // pred_check_branch
        %927 = sbr.rel (%p925) target = $region104
      $region103: #{encoder_decoder_forward.3} parent=99 // pred_region
        %p928 = scmp.lt.s32.totalorder %s26, 7
        %s929 = scalar_select %p928, %s26, 7
        %s930 = smul.addr %s929, 2
        %s931 = scalar_lea.vmem %s8, %s930
      $region104: #{encoder_decoder_forward.3} parent=99 // pred_fallthru
        _
      // Predicated region
      $region105: #{encoder_decoder_forward.3} parent=99 // pred_check
        %p932 = pneg %p255
      $region106: #{encoder_decoder_forward.3} parent=99 // pred_check_branch
        %934 = sbr.rel (%p932) target = $region108
      $region107: #{encoder_decoder_forward.3} parent=99 // pred_region
        %p935 = scmp.lt.s32.totalorder %s26, 7
        %s936 = scalar_select %p935, %s26, 7
        %s937 = smul.addr %s936, 2
        %s938 = scalar_lea.vmem %s9, %s937
      $region108: #{encoder_decoder_forward.3} parent=99 // pred_fallthru
        _
    $region100: #{encoder_decoder_forward.3} parent=5 // pred_fallthru
      _
  $region6: #{encoder_decoder_forward.3} parent=0 // loop_footer
    %s24 = sadd.s32 1, %s20
  $region7: #{encoder_decoder_forward.3} parent=0 // loop_footer_branch
    %19 = sbr.rel target = $region3
  $region8: #{encoder_decoder_forward.3} parent=0 // loop_exit
    _

// kernel: encoder_decoder_forward.4
$region0: #{encoder_decoder_forward.4}
  #allocation0 [shape = 'u32[]', space=smem, size = 0x4, offset = 0x4, fixed_abs, tag = 'smem constant byte address 0x4 - core index']
  #allocation1 [shape = 'u32[144,128]{1,0:T(1,128)}', space=vmem, size = 0x12000, scoped, tag = 'internal scratch']
  #allocation2 [shape = 'f32[2,32]{1,0:T(2,128)}', space=vmem, size = 0x400, scoped, tag = 'scratch operand']
  #allocation3 [shape = 'f32[2,32]{1,0:T(2,128)}', space=vmem, size = 0x400, scoped, tag = 'scratch operand']
  #allocation4 [shape = 'f32[2,8,32]{2,1,0:T(8,128)}', space=vmem, size = 0x2000, scoped, tag = 'scratch operand']
  %s0 = inlined_call_operand.vmem [shape: f32[8,2,32], index: 0, kind: input, shape index: {}]
  %s1 = inlined_call_operand.vmem [shape: f32[2,8,64], index: 1, kind: input, shape index: {}]
  %s2 = inlined_call_operand.vmem [shape: f32[2,8], index: 2, kind: input, shape index: {}]
  %s3 = inlined_call_operand.vmem [shape: f32[2,64], index: 3, kind: input, shape index: {}]
  %s4 = inlined_call_operand.vmem [shape: f32[2,64], index: 4, kind: input, shape index: {}]
  %s5 = inlined_call_operand.vmem [shape: f32[64,32], index: 5, kind: input, shape index: {}]
  %s6 = inlined_call_operand.vmem [shape: f32[1,32], index: 6, kind: input, shape index: {}]
  %s7 = inlined_call_operand.vmem [shape: f32[64,32], index: 7, kind: input, shape index: {}]
  %s8 = inlined_call_operand.vmem [shape: f32[1,32], index: 8, kind: input, shape index: {}]
  %s9 = inlined_call_operand.vmem [shape: f32[64,32], index: 9, kind: input, shape index: {}]
  %s10 = inlined_call_operand.vmem [shape: f32[32,32], index: 10, kind: input, shape index: {}]
  %s11 = inlined_call_operand.vmem [shape: f32[1,32], index: 11, kind: input, shape index: {}]
  %s12 = inlined_call_operand.vmem [shape: f32[32,128], index: 12, kind: input, shape index: {}]
  %s13 = inlined_call_operand.vmem [shape: f32[64,128], index: 13, kind: input, shape index: {}]
  %s14 = inlined_call_operand.vmem [shape: f32[32,128], index: 14, kind: input, shape index: {}]
  %s15 = inlined_call_operand.vmem [shape: f32[1,128], index: 15, kind: input, shape index: {}]
  %s16 = inlined_call_operand.vmem [shape: f32[32,32], index: 16, kind: input, shape index: {}]
  %s17 = inlined_call_operand.vmem [shape: f32[32,32], index: 17, kind: input, shape index: {}]
  %s18 = inlined_call_operand.vmem [shape: f32[64,32], index: 18, kind: input, shape index: {}]
  %s19 = inlined_call_operand.vmem [shape: f32[8,2,32], index: 19, kind: output, shape index: {}]
  %s20 = sld [smem:[#allocation0]]
  $region113: #{encoder_decoder_forward.4} parent=0
    _
  %s22 = ssub.s32 1, %s20
  %s23 = scalar_select 0, %s22, %s20
  loop: start=0, step=1, limit=10
  $region2: #{encoder_decoder_forward.4} parent=0 // loop_pre_header
    _
  $region3: #{encoder_decoder_forward.4} parent=0 // loop_header
    %s25 = sphi 0, %s29
    %p26 = scmp.ge.s32.totalorder %s25, 10
    %s35 = sphi 0, %s37
    %s38 = sphi 0, %s35
    %s39 = sphi 0, %s38
    %s55 = sphi 0, %s39
    %s59 = sphi 0, %s59
    %s61 = sphi 0, %s59
    %s62 = sphi 0, %s61
    %s76 = sphi 0, %s62
    %s80 = sphi 0, %s80
    %s82 = sphi 0, %s80
    %s83 = sphi 0, %s82
    %s97 = sphi 0, %s83
    %s101 = sphi 0, %s101
    %s103 = sphi 0, %s101
    %s104 = sphi 0, %s103
    %s118 = sphi 0, %s104
    %s122 = sphi 0, %s122
    %s124 = sphi 0, %s122
    %s125 = sphi 0, %s124
    %s139 = sphi 0, %s125
    %s143 = sphi 0, %s143
    %s145 = sphi 0, %s143
    %s146 = sphi 0, %s145
    %s160 = sphi 0, %s146
    %s164 = sphi 0, %s164
    %s166 = sphi 0, %s164
    %s167 = sphi 0, %s166
    %s181 = sphi 0, %s167
    %s185 = sphi 0, %s185
    %s187 = sphi 0, %s185
    %s188 = sphi 0, %s187
    %s202 = sphi 0, %s188
    %s206 = sphi 0, %s206
    %s208 = sphi 0, %s206
    %s209 = sphi 0, %s208
    %s223 = sphi 0, %s209
    %s227 = sphi 0, %s227
    %s229 = sphi 0, %s227
    %s230 = sphi 0, %s229
    %s244 = sphi 0, %s230
    %s248 = sphi 0, %s248
    %s250 = sphi 0, %s248
    %s251 = sphi 0, %s250
    %s265 = sphi 0, %s251
    %s269 = sphi 0, %s269
    %s271 = sphi 0, %s269
    %s272 = sphi 0, %s271
    %s286 = sphi 0, %s272
    %s290 = sphi 0, %s290
    %s292 = sphi 0, %s290
    %s293 = sphi 0, %s292
    %s307 = sphi 0, %s293
    %s311 = sphi 0, %s311
    %s313 = sphi 0, %s311
    %s314 = sphi 0, %s313
    %s328 = sphi 0, %s314
    %s332 = sphi 0, %s332
    %s334 = sphi 0, %s332
    %s335 = sphi 0, %s334
    %s349 = sphi 0, %s335
    %s353 = sphi 0, %s353
    %s355 = sphi 0, %s353
    %s356 = sphi 0, %s355
    %s370 = sphi 0, %s356
    %s374 = sphi 0, %s374
    %s376 = sphi 0, %s374
    %s377 = sphi 0, %s376
    %s391 = sphi 0, %s377
    %s395 = sphi 0, %s395
    %s397 = sphi 0, %s395
    %s398 = sphi 0, %s397
    %s412 = sphi 0, %s398
    %s416 = sphi 0, %s416
    %s418 = sphi 0, %s416
    %s419 = sphi 0, %s418
    %s433 = sphi 0, %s419
    %s439 = sphi 0, %s441
    %s442 = sphi 0, %s439
    %s443 = sphi 0, %s442
    %s459 = sphi 0, %s443
  $region4: #{encoder_decoder_forward.4} parent=0 // loop_header_branch
    %28 = sbr.rel (%p26) target = $region8
  $region5: #{encoder_decoder_forward.4} parent=0 // loop_body
    %s30 = ssub.s32 %s25, 1
    %s31 = ssub.s32 %s25, 2
    %s32 = sadd.s32 %s25, 1
    %s33 = ssub.s32 %s25, %s32
    %p34 = scmp.eq.s32.totalorder %s33, 0
    %s36 = sadd.s32 %s35, 1
    %s37 = scalar_select %p34, %s35, %s36
    %p40 = pneg %p34
    %p41 = scmp.eq.s32.totalorder %s25, 7
    %p42 = por %p40, %p41
    %p43 = scmp.ne.s32.totalorder %s35, %s38
    %p44 = scmp.eq.s32.totalorder %s25, 0
    %p45 = por %p43, %p44
    %p46 = scmp.ne.s32.totalorder %s35, %s38
    %p47 = scmp.eq.s32.totalorder %s30, 7
    %p48 = por %p46, %p47
    %p49 = scmp.ne.s32.totalorder %s38, %s39
    %p50 = scmp.eq.s32.totalorder %s30, 0
    %p51 = por %p49, %p50
    %p52 = scmp.ne.s32.totalorder %s38, %s39
    %p53 = scmp.eq.s32.totalorder %s31, 7
    %p54 = por %p52, %p53
    %p56 = scmp.ne.s32.totalorder %s39, %s55
    %p57 = scmp.eq.s32.totalorder %s31, 0
    %p58 = por %p56, %p57
    %s60 = sadd.s32 %s59, 1
    %p63 = scmp.eq.s32.totalorder %s25, 7
    %p64 = scmp.ne.s32.totalorder %s59, %s61
    %p65 = scmp.eq.s32.totalorder %s25, 0
    %p66 = por %p64, %p65
    %p67 = scmp.ne.s32.totalorder %s59, %s61
    %p68 = scmp.eq.s32.totalorder %s30, 7
    %p69 = por %p67, %p68
    %p70 = scmp.ne.s32.totalorder %s61, %s62
    %p71 = scmp.eq.s32.totalorder %s30, 0
    %p72 = por %p70, %p71
    %p73 = scmp.ne.s32.totalorder %s61, %s62
    %p74 = scmp.eq.s32.totalorder %s31, 7
    %p75 = por %p73, %p74
    %p77 = scmp.ne.s32.totalorder %s62, %s76
    %p78 = scmp.eq.s32.totalorder %s31, 0
    %p79 = por %p77, %p78
    %s81 = sadd.s32 %s80, 1
    %p84 = scmp.eq.s32.totalorder %s25, 7
    %p85 = scmp.ne.s32.totalorder %s80, %s82
    %p86 = scmp.eq.s32.totalorder %s25, 0
    %p87 = por %p85, %p86
    %p88 = scmp.ne.s32.totalorder %s80, %s82
    %p89 = scmp.eq.s32.totalorder %s30, 7
    %p90 = por %p88, %p89
    %p91 = scmp.ne.s32.totalorder %s82, %s83
    %p92 = scmp.eq.s32.totalorder %s30, 0
    %p93 = por %p91, %p92
    %p94 = scmp.ne.s32.totalorder %s82, %s83
    %p95 = scmp.eq.s32.totalorder %s31, 7
    %p96 = por %p94, %p95
    %p98 = scmp.ne.s32.totalorder %s83, %s97
    %p99 = scmp.eq.s32.totalorder %s31, 0
    %p100 = por %p98, %p99
    %s102 = sadd.s32 %s101, 1
    %p105 = scmp.eq.s32.totalorder %s25, 7
    %p106 = scmp.ne.s32.totalorder %s101, %s103
    %p107 = scmp.eq.s32.totalorder %s25, 0
    %p108 = por %p106, %p107
    %p109 = scmp.ne.s32.totalorder %s101, %s103
    %p110 = scmp.eq.s32.totalorder %s30, 7
    %p111 = por %p109, %p110
    %p112 = scmp.ne.s32.totalorder %s103, %s104
    %p113 = scmp.eq.s32.totalorder %s30, 0
    %p114 = por %p112, %p113
    %p115 = scmp.ne.s32.totalorder %s103, %s104
    %p116 = scmp.eq.s32.totalorder %s31, 7
    %p117 = por %p115, %p116
    %p119 = scmp.ne.s32.totalorder %s104, %s118
    %p120 = scmp.eq.s32.totalorder %s31, 0
    %p121 = por %p119, %p120
    %s123 = sadd.s32 %s122, 1
    %p126 = scmp.eq.s32.totalorder %s25, 7
    %p127 = scmp.ne.s32.totalorder %s122, %s124
    %p128 = scmp.eq.s32.totalorder %s25, 0
    %p129 = por %p127, %p128
    %p130 = scmp.ne.s32.totalorder %s122, %s124
    %p131 = scmp.eq.s32.totalorder %s30, 7
    %p132 = por %p130, %p131
    %p133 = scmp.ne.s32.totalorder %s124, %s125
    %p134 = scmp.eq.s32.totalorder %s30, 0
    %p135 = por %p133, %p134
    %p136 = scmp.ne.s32.totalorder %s124, %s125
    %p137 = scmp.eq.s32.totalorder %s31, 7
    %p138 = por %p136, %p137
    %p140 = scmp.ne.s32.totalorder %s125, %s139
    %p141 = scmp.eq.s32.totalorder %s31, 0
    %p142 = por %p140, %p141
    %s144 = sadd.s32 %s143, 1
    %p147 = scmp.eq.s32.totalorder %s25, 7
    %p148 = scmp.ne.s32.totalorder %s143, %s145
    %p149 = scmp.eq.s32.totalorder %s25, 0
    %p150 = por %p148, %p149
    %p151 = scmp.ne.s32.totalorder %s143, %s145
    %p152 = scmp.eq.s32.totalorder %s30, 7
    %p153 = por %p151, %p152
    %p154 = scmp.ne.s32.totalorder %s145, %s146
    %p155 = scmp.eq.s32.totalorder %s30, 0
    %p156 = por %p154, %p155
    %p157 = scmp.ne.s32.totalorder %s145, %s146
    %p158 = scmp.eq.s32.totalorder %s31, 7
    %p159 = por %p157, %p158
    %p161 = scmp.ne.s32.totalorder %s146, %s160
    %p162 = scmp.eq.s32.totalorder %s31, 0
    %p163 = por %p161, %p162
    %s165 = sadd.s32 %s164, 1
    %p168 = scmp.eq.s32.totalorder %s25, 7
    %p169 = scmp.ne.s32.totalorder %s164, %s166
    %p170 = scmp.eq.s32.totalorder %s25, 0
    %p171 = por %p169, %p170
    %p172 = scmp.ne.s32.totalorder %s164, %s166
    %p173 = scmp.eq.s32.totalorder %s30, 7
    %p174 = por %p172, %p173
    %p175 = scmp.ne.s32.totalorder %s166, %s167
    %p176 = scmp.eq.s32.totalorder %s30, 0
    %p177 = por %p175, %p176
    %p178 = scmp.ne.s32.totalorder %s166, %s167
    %p179 = scmp.eq.s32.totalorder %s31, 7
    %p180 = por %p178, %p179
    %p182 = scmp.ne.s32.totalorder %s167, %s181
    %p183 = scmp.eq.s32.totalorder %s31, 0
    %p184 = por %p182, %p183
    %s186 = sadd.s32 %s185, 1
    %p189 = scmp.eq.s32.totalorder %s25, 7
    %p190 = scmp.ne.s32.totalorder %s185, %s187
    %p191 = scmp.eq.s32.totalorder %s25, 0
    %p192 = por %p190, %p191
    %p193 = scmp.ne.s32.totalorder %s185, %s187
    %p194 = scmp.eq.s32.totalorder %s30, 7
    %p195 = por %p193, %p194
    %p196 = scmp.ne.s32.totalorder %s187, %s188
    %p197 = scmp.eq.s32.totalorder %s30, 0
    %p198 = por %p196, %p197
    %p199 = scmp.ne.s32.totalorder %s187, %s188
    %p200 = scmp.eq.s32.totalorder %s31, 7
    %p201 = por %p199, %p200
    %p203 = scmp.ne.s32.totalorder %s188, %s202
    %p204 = scmp.eq.s32.totalorder %s31, 0
    %p205 = por %p203, %p204
    %s207 = sadd.s32 %s206, 1
    %p210 = scmp.eq.s32.totalorder %s25, 7
    %p211 = scmp.ne.s32.totalorder %s206, %s208
    %p212 = scmp.eq.s32.totalorder %s25, 0
    %p213 = por %p211, %p212
    %p214 = scmp.ne.s32.totalorder %s206, %s208
    %p215 = scmp.eq.s32.totalorder %s30, 7
    %p216 = por %p214, %p215
    %p217 = scmp.ne.s32.totalorder %s208, %s209
    %p218 = scmp.eq.s32.totalorder %s30, 0
    %p219 = por %p217, %p218
    %p220 = scmp.ne.s32.totalorder %s208, %s209
    %p221 = scmp.eq.s32.totalorder %s31, 7
    %p222 = por %p220, %p221
    %p224 = scmp.ne.s32.totalorder %s209, %s223
    %p225 = scmp.eq.s32.totalorder %s31, 0
    %p226 = por %p224, %p225
    %s228 = sadd.s32 %s227, 1
    %p231 = scmp.eq.s32.totalorder %s25, 7
    %p232 = scmp.ne.s32.totalorder %s227, %s229
    %p233 = scmp.eq.s32.totalorder %s25, 0
    %p234 = por %p232, %p233
    %p235 = scmp.ne.s32.totalorder %s227, %s229
    %p236 = scmp.eq.s32.totalorder %s30, 7
    %p237 = por %p235, %p236
    %p238 = scmp.ne.s32.totalorder %s229, %s230
    %p239 = scmp.eq.s32.totalorder %s30, 0
    %p240 = por %p238, %p239
    %p241 = scmp.ne.s32.totalorder %s229, %s230
    %p242 = scmp.eq.s32.totalorder %s31, 7
    %p243 = por %p241, %p242
    %p245 = scmp.ne.s32.totalorder %s230, %s244
    %p246 = scmp.eq.s32.totalorder %s31, 0
    %p247 = por %p245, %p246
    %s249 = sadd.s32 %s248, 1
    %p252 = scmp.eq.s32.totalorder %s25, 7
    %p253 = scmp.ne.s32.totalorder %s248, %s250
    %p254 = scmp.eq.s32.totalorder %s25, 0
    %p255 = por %p253, %p254
    %p256 = scmp.ne.s32.totalorder %s248, %s250
    %p257 = scmp.eq.s32.totalorder %s30, 7
    %p258 = por %p256, %p257
    %p259 = scmp.ne.s32.totalorder %s250, %s251
    %p260 = scmp.eq.s32.totalorder %s30, 0
    %p261 = por %p259, %p260
    %p262 = scmp.ne.s32.totalorder %s250, %s251
    %p263 = scmp.eq.s32.totalorder %s31, 7
    %p264 = por %p262, %p263
    %p266 = scmp.ne.s32.totalorder %s251, %s265
    %p267 = scmp.eq.s32.totalorder %s31, 0
    %p268 = por %p266, %p267
    %s270 = sadd.s32 %s269, 1
    %p273 = scmp.eq.s32.totalorder %s25, 7
    %p274 = scmp.ne.s32.totalorder %s269, %s271
    %p275 = scmp.eq.s32.totalorder %s25, 0
    %p276 = por %p274, %p275
    %p277 = scmp.ne.s32.totalorder %s269, %s271
    %p278 = scmp.eq.s32.totalorder %s30, 7
    %p279 = por %p277, %p278
    %p280 = scmp.ne.s32.totalorder %s271, %s272
    %p281 = scmp.eq.s32.totalorder %s30, 0
    %p282 = por %p280, %p281
    %p283 = scmp.ne.s32.totalorder %s271, %s272
    %p284 = scmp.eq.s32.totalorder %s31, 7
    %p285 = por %p283, %p284
    %p287 = scmp.ne.s32.totalorder %s272, %s286
    %p288 = scmp.eq.s32.totalorder %s31, 0
    %p289 = por %p287, %p288
    %s291 = sadd.s32 %s290, 1
    %p294 = scmp.eq.s32.totalorder %s25, 7
    %p295 = scmp.ne.s32.totalorder %s290, %s292
    %p296 = scmp.eq.s32.totalorder %s25, 0
    %p297 = por %p295, %p296
    %p298 = scmp.ne.s32.totalorder %s290, %s292
    %p299 = scmp.eq.s32.totalorder %s30, 7
    %p300 = por %p298, %p299
    %p301 = scmp.ne.s32.totalorder %s292, %s293
    %p302 = scmp.eq.s32.totalorder %s30, 0
    %p303 = por %p301, %p302
    %p304 = scmp.ne.s32.totalorder %s292, %s293
    %p305 = scmp.eq.s32.totalorder %s31, 7
    %p306 = por %p304, %p305
    %p308 = scmp.ne.s32.totalorder %s293, %s307
    %p309 = scmp.eq.s32.totalorder %s31, 0
    %p310 = por %p308, %p309
    %s312 = sadd.s32 %s311, 1
    %p315 = scmp.eq.s32.totalorder %s25, 7
    %p316 = scmp.ne.s32.totalorder %s311, %s313
    %p317 = scmp.eq.s32.totalorder %s25, 0
    %p318 = por %p316, %p317
    %p319 = scmp.ne.s32.totalorder %s311, %s313
    %p320 = scmp.eq.s32.totalorder %s30, 7
    %p321 = por %p319, %p320
    %p322 = scmp.ne.s32.totalorder %s313, %s314
    %p323 = scmp.eq.s32.totalorder %s30, 0
    %p324 = por %p322, %p323
    %p325 = scmp.ne.s32.totalorder %s313, %s314
    %p326 = scmp.eq.s32.totalorder %s31, 7
    %p327 = por %p325, %p326
    %p329 = scmp.ne.s32.totalorder %s314, %s328
    %p330 = scmp.eq.s32.totalorder %s31, 0
    %p331 = por %p329, %p330
    %s333 = sadd.s32 %s332, 1
    %p336 = scmp.eq.s32.totalorder %s25, 7
    %p337 = scmp.ne.s32.totalorder %s332, %s334
    %p338 = scmp.eq.s32.totalorder %s25, 0
    %p339 = por %p337, %p338
    %p340 = scmp.ne.s32.totalorder %s332, %s334
    %p341 = scmp.eq.s32.totalorder %s30, 7
    %p342 = por %p340, %p341
    %p343 = scmp.ne.s32.totalorder %s334, %s335
    %p344 = scmp.eq.s32.totalorder %s30, 0
    %p345 = por %p343, %p344
    %p346 = scmp.ne.s32.totalorder %s334, %s335
    %p347 = scmp.eq.s32.totalorder %s31, 7
    %p348 = por %p346, %p347
    %p350 = scmp.ne.s32.totalorder %s335, %s349
    %p351 = scmp.eq.s32.totalorder %s31, 0
    %p352 = por %p350, %p351
    %s354 = sadd.s32 %s353, 1
    %p357 = scmp.eq.s32.totalorder %s25, 7
    %p358 = scmp.ne.s32.totalorder %s353, %s355
    %p359 = scmp.eq.s32.totalorder %s25, 0
    %p360 = por %p358, %p359
    %p361 = scmp.ne.s32.totalorder %s353, %s355
    %p362 = scmp.eq.s32.totalorder %s30, 7
    %p363 = por %p361, %p362
    %p364 = scmp.ne.s32.totalorder %s355, %s356
    %p365 = scmp.eq.s32.totalorder %s30, 0
    %p366 = por %p364, %p365
    %p367 = scmp.ne.s32.totalorder %s355, %s356
    %p368 = scmp.eq.s32.totalorder %s31, 7
    %p369 = por %p367, %p368
    %p371 = scmp.ne.s32.totalorder %s356, %s370
    %p372 = scmp.eq.s32.totalorder %s31, 0
    %p373 = por %p371, %p372
    %s375 = sadd.s32 %s374, 1
    %p378 = scmp.eq.s32.totalorder %s25, 7
    %p379 = scmp.ne.s32.totalorder %s374, %s376
    %p380 = scmp.eq.s32.totalorder %s25, 0
    %p381 = por %p379, %p380
    %p382 = scmp.ne.s32.totalorder %s374, %s376
    %p383 = scmp.eq.s32.totalorder %s30, 7
    %p384 = por %p382, %p383
    %p385 = scmp.ne.s32.totalorder %s376, %s377
    %p386 = scmp.eq.s32.totalorder %s30, 0
    %p387 = por %p385, %p386
    %p388 = scmp.ne.s32.totalorder %s376, %s377
    %p389 = scmp.eq.s32.totalorder %s31, 7
    %p390 = por %p388, %p389
    %p392 = scmp.ne.s32.totalorder %s377, %s391
    %p393 = scmp.eq.s32.totalorder %s31, 0
    %p394 = por %p392, %p393
    %s396 = sadd.s32 %s395, 1
    %p399 = scmp.eq.s32.totalorder %s25, 7
    %p400 = scmp.ne.s32.totalorder %s395, %s397
    %p401 = scmp.eq.s32.totalorder %s25, 0
    %p402 = por %p400, %p401
    %p403 = scmp.ne.s32.totalorder %s395, %s397
    %p404 = scmp.eq.s32.totalorder %s30, 7
    %p405 = por %p403, %p404
    %p406 = scmp.ne.s32.totalorder %s397, %s398
    %p407 = scmp.eq.s32.totalorder %s30, 0
    %p408 = por %p406, %p407
    %p409 = scmp.ne.s32.totalorder %s397, %s398
    %p410 = scmp.eq.s32.totalorder %s31, 7
    %p411 = por %p409, %p410
    %p413 = scmp.ne.s32.totalorder %s398, %s412
    %p414 = scmp.eq.s32.totalorder %s31, 0
    %p415 = por %p413, %p414
    %s417 = sadd.s32 %s416, 1
    %p420 = scmp.eq.s32.totalorder %s25, 7
    %p421 = scmp.ne.s32.totalorder %s416, %s418
    %p422 = scmp.eq.s32.totalorder %s25, 0
    %p423 = por %p421, %p422
    %p424 = scmp.ne.s32.totalorder %s416, %s418
    %p425 = scmp.eq.s32.totalorder %s30, 7
    %p426 = por %p424, %p425
    %p427 = scmp.ne.s32.totalorder %s418, %s419
    %p428 = scmp.eq.s32.totalorder %s30, 0
    %p429 = por %p427, %p428
    %p430 = scmp.ne.s32.totalorder %s418, %s419
    %p431 = scmp.eq.s32.totalorder %s31, 7
    %p432 = por %p430, %p431
    %p434 = scmp.ne.s32.totalorder %s419, %s433
    %p435 = scmp.eq.s32.totalorder %s31, 0
    %p436 = por %p434, %p435
    %s437 = ssub.s32 %s25, %s32
    %p438 = scmp.eq.s32.totalorder %s437, 0
    %s440 = sadd.s32 %s439, 1
    %s441 = scalar_select %p438, %s439, %s440
    %p444 = pneg %p438
    %p445 = scmp.eq.s32.totalorder %s25, 7
    %p446 = por %p444, %p445
    %p447 = scmp.ne.s32.totalorder %s439, %s442
    %p448 = scmp.eq.s32.totalorder %s25, 0
    %p449 = por %p447, %p448
    %p450 = scmp.ne.s32.totalorder %s439, %s442
    %p451 = scmp.eq.s32.totalorder %s30, 7
    %p452 = por %p450, %p451
    %p453 = scmp.ne.s32.totalorder %s442, %s443
    %p454 = scmp.eq.s32.totalorder %s30, 0
    %p455 = por %p453, %p454
    %p456 = scmp.ne.s32.totalorder %s442, %s443
    %p457 = scmp.eq.s32.totalorder %s31, 7
    %p458 = por %p456, %p457
    %p460 = scmp.ne.s32.totalorder %s443, %s459
    %p461 = scmp.eq.s32.totalorder %s31, 0
    %p462 = por %p460, %p461
    %p463 = scmp.le.s32.totalorder 1, %s25
    %p464 = scmp.lt.s32.totalorder %s25, 9
    %p465 = pnand %p463, %p464
    %p466 = pneg %p465
    // Predicated region
    $region9: #{encoder_decoder_forward.4} parent=5 // pred_check
      _
    $region10: #{encoder_decoder_forward.4} parent=5 // pred_check_branch
      %468 = sbr.rel (%p465) target = $region12
    $region11: #{encoder_decoder_forward.4} parent=5 // pred_region
      %s469 = ssub.s32 %s25, 1
      // Predicated region
      $region13: #{encoder_decoder_forward.4} parent=11 // pred_check
        %p470 = pneg %p72
      $region14: #{encoder_decoder_forward.4} parent=11 // pred_check_branch
        %472 = sbr.rel (%p470) target = $region16
      $region15: #{encoder_decoder_forward.4} parent=11 // pred_region
        _
      $region16: #{encoder_decoder_forward.4} parent=11 // pred_fallthru
        _
      // Predicated region
      $region17: #{encoder_decoder_forward.4} parent=11 // pred_check
        %p473 = pneg %p93
      $region18: #{encoder_decoder_forward.4} parent=11 // pred_check_branch
        %475 = sbr.rel (%p473) target = $region20
      $region19: #{encoder_decoder_forward.4} parent=11 // pred_region
        _
      $region20: #{encoder_decoder_forward.4} parent=11 // pred_fallthru
        _
      // Predicated region
      $region21: #{encoder_decoder_forward.4} parent=11 // pred_check
        %p476 = pneg %p114
      $region22: #{encoder_decoder_forward.4} parent=11 // pred_check_branch
        %478 = sbr.rel (%p476) target = $region24
      $region23: #{encoder_decoder_forward.4} parent=11 // pred_region
        _
      $region24: #{encoder_decoder_forward.4} parent=11 // pred_fallthru
        _
      // Predicated region
      $region25: #{encoder_decoder_forward.4} parent=11 // pred_check
        %p479 = pneg %p135
      $region26: #{encoder_decoder_forward.4} parent=11 // pred_check_branch
        %481 = sbr.rel (%p479) target = $region28
      $region27: #{encoder_decoder_forward.4} parent=11 // pred_region
        _
      $region28: #{encoder_decoder_forward.4} parent=11 // pred_fallthru
        _
      // Predicated region
      $region29: #{encoder_decoder_forward.4} parent=11 // pred_check
        %p482 = pneg %p156
      $region30: #{encoder_decoder_forward.4} parent=11 // pred_check_branch
        %484 = sbr.rel (%p482) target = $region32
      $region31: #{encoder_decoder_forward.4} parent=11 // pred_region
        _
      $region32: #{encoder_decoder_forward.4} parent=11 // pred_fallthru
        _
      // Predicated region
      $region33: #{encoder_decoder_forward.4} parent=11 // pred_check
        %p485 = pneg %p177
      $region34: #{encoder_decoder_forward.4} parent=11 // pred_check_branch
        %487 = sbr.rel (%p485) target = $region36
      $region35: #{encoder_decoder_forward.4} parent=11 // pred_region
        _
      $region36: #{encoder_decoder_forward.4} parent=11 // pred_fallthru
        _
      // Predicated region
      $region37: #{encoder_decoder_forward.4} parent=11 // pred_check
        %p488 = pneg %p198
      $region38: #{encoder_decoder_forward.4} parent=11 // pred_check_branch
        %490 = sbr.rel (%p488) target = $region40
      $region39: #{encoder_decoder_forward.4} parent=11 // pred_region
        _
      $region40: #{encoder_decoder_forward.4} parent=11 // pred_fallthru
        _
      // Predicated region
      $region41: #{encoder_decoder_forward.4} parent=11 // pred_check
        %p491 = pneg %p219
      $region42: #{encoder_decoder_forward.4} parent=11 // pred_check_branch
        %493 = sbr.rel (%p491) target = $region44
      $region43: #{encoder_decoder_forward.4} parent=11 // pred_region
        _
      $region44: #{encoder_decoder_forward.4} parent=11 // pred_fallthru
        _
      // Predicated region
      $region45: #{encoder_decoder_forward.4} parent=11 // pred_check
        %p494 = pneg %p240
      $region46: #{encoder_decoder_forward.4} parent=11 // pred_check_branch
        %496 = sbr.rel (%p494) target = $region48
      $region47: #{encoder_decoder_forward.4} parent=11 // pred_region
        _
      $region48: #{encoder_decoder_forward.4} parent=11 // pred_fallthru
        _
      // Predicated region
      $region49: #{encoder_decoder_forward.4} parent=11 // pred_check
        %p497 = pneg %p261
      $region50: #{encoder_decoder_forward.4} parent=11 // pred_check_branch
        %499 = sbr.rel (%p497) target = $region52
      $region51: #{encoder_decoder_forward.4} parent=11 // pred_region
        _
      $region52: #{encoder_decoder_forward.4} parent=11 // pred_fallthru
        _
      // Predicated region
      $region53: #{encoder_decoder_forward.4} parent=11 // pred_check
        %p500 = pneg %p282
      $region54: #{encoder_decoder_forward.4} parent=11 // pred_check_branch
        %502 = sbr.rel (%p500) target = $region56
      $region55: #{encoder_decoder_forward.4} parent=11 // pred_region
        _
      $region56: #{encoder_decoder_forward.4} parent=11 // pred_fallthru
        _
      // Predicated region
      $region57: #{encoder_decoder_forward.4} parent=11 // pred_check
        %p503 = pneg %p303
      $region58: #{encoder_decoder_forward.4} parent=11 // pred_check_branch
        %505 = sbr.rel (%p503) target = $region60
      $region59: #{encoder_decoder_forward.4} parent=11 // pred_region
        _
      $region60: #{encoder_decoder_forward.4} parent=11 // pred_fallthru
        _
      // Predicated region
      $region61: #{encoder_decoder_forward.4} parent=11 // pred_check
        %p506 = pneg %p324
      $region62: #{encoder_decoder_forward.4} parent=11 // pred_check_branch
        %508 = sbr.rel (%p506) target = $region64
      $region63: #{encoder_decoder_forward.4} parent=11 // pred_region
        _
      $region64: #{encoder_decoder_forward.4} parent=11 // pred_fallthru
        _
      // Predicated region
      $region65: #{encoder_decoder_forward.4} parent=11 // pred_check
        %p509 = pneg %p345
      $region66: #{encoder_decoder_forward.4} parent=11 // pred_check_branch
        %511 = sbr.rel (%p509) target = $region68
      $region67: #{encoder_decoder_forward.4} parent=11 // pred_region
        _
      $region68: #{encoder_decoder_forward.4} parent=11 // pred_fallthru
        _
      // Predicated region
      $region69: #{encoder_decoder_forward.4} parent=11 // pred_check
        %p512 = pneg %p366
      $region70: #{encoder_decoder_forward.4} parent=11 // pred_check_branch
        %514 = sbr.rel (%p512) target = $region72
      $region71: #{encoder_decoder_forward.4} parent=11 // pred_region
        _
      $region72: #{encoder_decoder_forward.4} parent=11 // pred_fallthru
        _
      // Predicated region
      $region73: #{encoder_decoder_forward.4} parent=11 // pred_check
        %p515 = pneg %p387
      $region74: #{encoder_decoder_forward.4} parent=11 // pred_check_branch
        %517 = sbr.rel (%p515) target = $region76
      $region75: #{encoder_decoder_forward.4} parent=11 // pred_region
        _
      $region76: #{encoder_decoder_forward.4} parent=11 // pred_fallthru
        _
      // Predicated region
      $region77: #{encoder_decoder_forward.4} parent=11 // pred_check
        %p518 = pneg %p408
      $region78: #{encoder_decoder_forward.4} parent=11 // pred_check_branch
        %520 = sbr.rel (%p518) target = $region80
      $region79: #{encoder_decoder_forward.4} parent=11 // pred_region
        _
      $region80: #{encoder_decoder_forward.4} parent=11 // pred_fallthru
        _
      // Predicated region
      $region81: #{encoder_decoder_forward.4} parent=11 // pred_check
        %p521 = pneg %p429
      $region82: #{encoder_decoder_forward.4} parent=11 // pred_check_branch
        %523 = sbr.rel (%p521) target = $region84
      $region83: #{encoder_decoder_forward.4} parent=11 // pred_region
        _
      $region84: #{encoder_decoder_forward.4} parent=11 // pred_fallthru
        _
    $region12: #{encoder_decoder_forward.4} parent=5 // pred_fallthru
      _
    %p524 = scmp.lt.s32.totalorder %s25, 8
    // Predicated region
    $region85: #{encoder_decoder_forward.4} parent=5 // pred_check
      %p525 = pneg %p524
    $region86: #{encoder_decoder_forward.4} parent=5 // pred_check_branch
      %527 = sbr.rel (%p525) target = $region88
    $region87: #{encoder_decoder_forward.4} parent=5 // pred_region
      // Predicated region
      $region89: #{encoder_decoder_forward.4} parent=87 // pred_check
        %p528 = pneg %p45
      $region90: #{encoder_decoder_forward.4} parent=87 // pred_check_branch
        %530 = sbr.rel (%p528) target = $region92
      $region91: #{encoder_decoder_forward.4} parent=87 // pred_region
        %p531 = scmp.lt.s32.totalorder %s25, 7
        %s532 = scalar_select %p531, %s25, 7
        %s533 = smul.addr %s532, 2
        %s534 = scalar_lea.vmem %s0, %s533
      $region92: #{encoder_decoder_forward.4} parent=87 // pred_fallthru
        _
    $region88: #{encoder_decoder_forward.4} parent=5 // pred_fallthru
      _
    %p535 = scmp.le.s32.totalorder 1, %s25
    %p536 = scmp.lt.s32.totalorder %s25, 9
    %p537 = pnand %p535, %p536
    %p538 = pneg %p537
    // Predicated region
    $region93: #{encoder_decoder_forward.4} parent=5 // pred_check
      _
    $region94: #{encoder_decoder_forward.4} parent=5 // pred_check_branch
      %540 = sbr.rel (%p537) target = $region96
    $region95: #{encoder_decoder_forward.4} parent=5 // pred_region
      %s541 = ssub.s32 %s25, 1
      %p542 = scmp.lt.s32.totalorder %s30, 7
      %s543 = scalar_select %p542, %s30, 7
      %s544 = smul.addr %s543, 2
      %s545 = scalar_lea.vmem %s0, %s544
      %p546 = pneg %p51
      %p547 = pneg %p48
      %p548 = pneg %p72
      %p549 = pneg %p69
      %p550 = pneg %p93
      %p551 = pneg %p90
      %p552 = pneg %p114
      %p553 = pneg %p111
      %p554 = pneg %p135
      %p555 = pneg %p132
      %p556 = pneg %p156
      %p557 = pneg %p153
      %p558 = pneg %p177
      %p559 = pneg %p174
      %p560 = pneg %p198
      %p561 = pneg %p195
      %p562 = pneg %p219
      %p563 = pneg %p216
      %p564 = pneg %p240
      %p565 = pneg %p237
      %p566 = pneg %p261
      %p567 = pneg %p258
      %p568 = pneg %p282
      %p569 = pneg %p279
      %p570 = pneg %p303
      %p571 = pneg %p300
      %p572 = pneg %p324
      %p573 = pneg %p321
      %p574 = pneg %p345
      %p575 = pneg %p342
      %p576 = pneg %p366
      %p577 = pneg %p363
      %p578 = pneg %p387
      %p579 = pneg %p384
      %p580 = pneg %p408
      %p581 = pneg %p405
      %p582 = pneg %p429
      %p583 = pneg %p426
      %p584 = pneg %p455
      %p585 = pneg %p452
      %p586 = scmp.lt.s32.totalorder %s30, 7
      %s587 = scalar_select %p586, %s30, 7
      %s588 = smul.addr %s587, 2
      %s589 = scalar_lea.vmem %s19, %s588
      %p590 = scmp.lt.s32.totalorder %s30, 7
      %s591 = scalar_select %p590, %s30, 7
      %s592 = smul.addr %s591, 2
      %s593 = scalar_lea.vmem %s0, %s592
      %p594 = scmp.lt.s32.totalorder %s30, 7
      %s595 = scalar_select %p594, %s30, 7
      %s596 = smul.addr %s595, 2
      %s597 = scalar_lea.vmem %s19, %s596
      %p598 = scmp.eq.s32.totalorder %s30, 0
      // Predicated region
      $region97: #{encoder_decoder_forward.4} parent=95 // pred_check
        %p599 = pneg %p598
      $region98: #{encoder_decoder_forward.4} parent=95 // pred_check_branch
        %601 = sbr.rel (%p599) target = $region100
      $region99: #{encoder_decoder_forward.4} parent=95 // pred_region
        %v602 = vld [vmem:[%s3] sm:$0x3]
        %v603 = vld [vmem:[%s5] sm:$0xff]
        %v604 = vld [vmem:[%s5 + $0x8] sm:$0xff]
        %v605 = vld [vmem:[%s5 + $0x10] sm:$0xff]
        %v606 = vld [vmem:[%s5 + $0x18] sm:$0xff]
        %v607 = vld [vmem:[%s5 + $0x20] sm:$0xff]
        %v608 = vld [vmem:[%s5 + $0x28] sm:$0xff]
        %v609 = vld [vmem:[%s5 + $0x30] sm:$0xff]
        %v610 = vld [vmem:[%s5 + $0x38] sm:$0xff]
        %v611 = vld [vmem:[%s6] sm:$0x1]
        %v613 = vlaneseq
        %v614 = vshrl.u32 %v613, 7
        %v615 = vsub.s32 0, %v614
        %v616 = vrot.slane %v611, %v615
        %vm618 = vcmask 523264
        %v620 = vsel %vm618, %v602, 0
        %622 = vmatprep.subr.mxu0 0.0
        %623 = vmatpush1.msra.mxu0 %v603
        %624 = vmatprep.subr.mxu0 0.0
        %625 = vmatpush1.msra.mxu0 %v604
        %626 = vmatprep.subr.mxu0 0.0
        %627 = vmatpush1.msra.mxu0 %v605
        %628 = vmatprep.subr.mxu0 0.0
        %629 = vmatpush1.msra.mxu0 %v606
        %630 = vmatprep.subr.mxu0 0.0
        %631 = vmatpush1.msra.mxu0 %v607
        %632 = vmatprep.subr.mxu0 0.0
        %633 = vmatpush1.msra.mxu0 %v608
        %634 = vmatprep.subr.mxu0 0.0
        %635 = vmatpush1.msra.mxu0 %v609
        %636 = vmatprep.subr.mxu0 0.0
        %637 = vmatpush1.msra.mxu0 %v610
        %638 = vmatprep.subr.mxu0 0.0
        %639 = vmatpush1.msra.mxu0 0.0
        %640 = vmatprep.subr.mxu0 0.0
        %641 = vmatpush1.msra.mxu0 0.0
        %642 = vmatprep.subr.mxu0 0.0
        %643 = vmatpush1.msra.mxu0 0.0
        %644 = vmatprep.subr.mxu0 0.0
        %645 = vmatpush1.msra.mxu0 0.0
        %646 = vmatprep.subr.mxu0 0.0
        %647 = vmatpush1.msra.mxu0 0.0
        %648 = vmatprep.subr.mxu0 0.0
        %649 = vmatpush1.msra.mxu0 0.0
        %650 = vmatprep.subr.mxu0 0.0
        %651 = vmatpush1.msra.mxu0 0.0
        %652 = vmatprep.subr.mxu0 0.0
        %653 = vmatpush1.msra.mxu0 0.0
        %654 = vmatprep.subr.mxu0 0.0
        %655 = vmatpush1.msra.mxu0 0.0
        %656 = vmatprep.subr.mxu0 0.0
        %657 = vmatpush1.msra.mxu0 0.0
        %658 = vmatprep.subr.mxu0 0.0
        %659 = vmatpush1.msra.mxu0 0.0
        %660 = vmatprep.subr.mxu0 0.0
        %661 = vmatpush1.msra.mxu0 0.0
        %662 = vmatprep.subr.mxu0 0.0
        %663 = vmatpush1.msra.mxu0 0.0
        %664 = vmatprep.subr.mxu0 0.0
        %665 = vmatpush1.msra.mxu0 0.0
        %666 = vmatprep.subr.mxu0 0.0
        %667 = vmatpush1.msra.mxu0 0.0
        %668 = vmatprep.subr.mxu0 0.0
        %669 = vmatpush1.msra.mxu0 0.0
        %670 = vmatprep.subr.mxu0 0.0
        %671 = vmatpush1.msra.mxu0 0.0
        %672 = vmatprep.subr.mxu0 0.0
        %673 = vmatpush1.msra.mxu0 0.0
        %674 = vmatprep.subr.mxu0 0.0
        %675 = vmatpush1.msra.mxu0 0.0
        %676 = vmatprep.subr.mxu0 0.0
        %677 = vmatpush1.msra.mxu0 0.0
        %678 = vmatprep.subr.mxu0 0.0
        %679 = vmatpush1.msra.mxu0 0.0
        %680 = vmatprep.subr.mxu0 0.0
        %681 = vmatpush1.msra.mxu0 0.0
        %682 = vmatprep.subr.mxu0 0.0
        %683 = vmatpush1.msra.mxu0 0.0
        %684 = vmatprep.subr.mxu0 0.0
        %685 = vmatpush1.msra.mxu0 0.0
        %686 = vmatprep.mubr.f32.mxu0 0.0
        %687 = vmatmul.mubr.f32.gmra.mrb[0].mxu0 %v620
        %v688 = vpop.f32.mrb[0].mxu0
        %v689 = vadd.f32 %v616, %v688
        %v690 = vpop.f32.mrb[0].mxu0
        %691 = vdwg.mxu0
        %v692 = vtanh.pop %v689
        %vm693 = vcmask 254976
        %694 = vst.msk [vmem:[#allocation2] sm:$0x3] %vm693, %v692
        %v695 = vld [vmem:[%s4] sm:$0x3]
        %v696 = vld [vmem:[%s7] sm:$0xff]
        %v697 = vld [vmem:[%s7 + $0x8] sm:$0xff]
        %v698 = vld [vmem:[%s7 + $0x10] sm:$0xff]
        %v699 = vld [vmem:[%s7 + $0x18] sm:$0xff]
        %v700 = vld [vmem:[%s7 + $0x20] sm:$0xff]
        %v701 = vld [vmem:[%s7 + $0x28] sm:$0xff]
        %v702 = vld [vmem:[%s7 + $0x30] sm:$0xff]
        %v703 = vld [vmem:[%s7 + $0x38] sm:$0xff]
        %v704 = vld [vmem:[%s8] sm:$0x1]
        %v706 = vlaneseq
        %v707 = vshrl.u32 %v706, 7
        %v708 = vsub.s32 0, %v707
        %v709 = vrot.slane %v704, %v708
        %v712 = vsel %vm618, %v695, 0
        %714 = vmatprep.subr.mxu0 0.0
        %715 = vmatpush1.msra.mxu0 %v696
        %716 = vmatprep.subr.mxu0 0.0
        %717 = vmatpush1.msra.mxu0 %v697
        %718 = vmatprep.subr.mxu0 0.0
        %719 = vmatpush1.msra.mxu0 %v698
        %720 = vmatprep.subr.mxu0 0.0
        %721 = vmatpush1.msra.mxu0 %v699
        %722 = vmatprep.subr.mxu0 0.0
        %723 = vmatpush1.msra.mxu0 %v700
        %724 = vmatprep.subr.mxu0 0.0
        %725 = vmatpush1.msra.mxu0 %v701
        %726 = vmatprep.subr.mxu0 0.0
        %727 = vmatpush1.msra.mxu0 %v702
        %728 = vmatprep.subr.mxu0 0.0
        %729 = vmatpush1.msra.mxu0 %v703
        %730 = vmatprep.subr.mxu0 0.0
        %731 = vmatpush1.msra.mxu0 0.0
        %732 = vmatprep.subr.mxu0 0.0
        %733 = vmatpush1.msra.mxu0 0.0
        %734 = vmatprep.subr.mxu0 0.0
        %735 = vmatpush1.msra.mxu0 0.0
        %736 = vmatprep.subr.mxu0 0.0
        %737 = vmatpush1.msra.mxu0 0.0
        %738 = vmatprep.subr.mxu0 0.0
        %739 = vmatpush1.msra.mxu0 0.0
        %740 = vmatprep.subr.mxu0 0.0
        %741 = vmatpush1.msra.mxu0 0.0
        %742 = vmatprep.subr.mxu0 0.0
        %743 = vmatpush1.msra.mxu0 0.0
        %744 = vmatprep.subr.mxu0 0.0
        %745 = vmatpush1.msra.mxu0 0.0
        %746 = vmatprep.subr.mxu0 0.0
        %747 = vmatpush1.msra.mxu0 0.0
        %748 = vmatprep.subr.mxu0 0.0
        %749 = vmatpush1.msra.mxu0 0.0
        %750 = vmatprep.subr.mxu0 0.0
        %751 = vmatpush1.msra.mxu0 0.0
        %752 = vmatprep.subr.mxu0 0.0
        %753 = vmatpush1.msra.mxu0 0.0
        %754 = vmatprep.subr.mxu0 0.0
        %755 = vmatpush1.msra.mxu0 0.0
        %756 = vmatprep.subr.mxu0 0.0
        %757 = vmatpush1.msra.mxu0 0.0
        %758 = vmatprep.subr.mxu0 0.0
        %759 = vmatpush1.msra.mxu0 0.0
        %760 = vmatprep.subr.mxu0 0.0
        %761 = vmatpush1.msra.mxu0 0.0
        %762 = vmatprep.subr.mxu0 0.0
        %763 = vmatpush1.msra.mxu0 0.0
        %764 = vmatprep.subr.mxu0 0.0
        %765 = vmatpush1.msra.mxu0 0.0
        %766 = vmatprep.subr.mxu0 0.0
        %767 = vmatpush1.msra.mxu0 0.0
        %768 = vmatprep.subr.mxu0 0.0
        %769 = vmatpush1.msra.mxu0 0.0
        %770 = vmatprep.subr.mxu0 0.0
        %771 = vmatpush1.msra.mxu0 0.0
        %772 = vmatprep.subr.mxu0 0.0
        %773 = vmatpush1.msra.mxu0 0.0
        %774 = vmatprep.subr.mxu0 0.0
        %775 = vmatpush1.msra.mxu0 0.0
        %776 = vmatprep.subr.mxu0 0.0
        %777 = vmatpush1.msra.mxu0 0.0
        %778 = vmatprep.mubr.f32.mxu0 0.0
        %779 = vmatmul.mubr.f32.gmra.mrb[0].mxu0 %v712
        %v780 = vpop.f32.mrb[0].mxu0
        %v781 = vadd.f32 %v709, %v780
        %v782 = vpop.f32.mrb[0].mxu0
        %783 = vdwg.mxu0
        %v784 = vtanh.pop %v781
        %785 = vst.msk [vmem:[#allocation3] sm:$0x3] %vm693, %v784
        %v786 = vld [vmem:[%s1] sm:$0xff]
        %v787 = vld [vmem:[%s1 + $0x8] sm:$0xff]
        %v788 = vld [vmem:[%s9] sm:$0xff]
        %v789 = vld [vmem:[%s9 + $0x8] sm:$0xff]
        %v790 = vld [vmem:[%s9 + $0x10] sm:$0xff]
        %v791 = vld [vmem:[%s9 + $0x18] sm:$0xff]
        %v792 = vld [vmem:[%s9 + $0x20] sm:$0xff]
        %v793 = vld [vmem:[%s9 + $0x28] sm:$0xff]
        %v794 = vld [vmem:[%s9 + $0x30] sm:$0xff]
        %v795 = vld [vmem:[%s9 + $0x38] sm:$0xff]
        %v797 = vsel %vm618, %v786, 0
        %v800 = vsel %vm618, %v787, 0
        %802 = vmatprep.subr.mxu0 0.0
        %803 = vmatpush1.msra.mxu0 %v788
        %804 = vmatprep.subr.mxu0 0.0
        %805 = vmatpush1.msra.mxu0 %v789
        %806 = vmatprep.subr.mxu0 0.0
        %807 = vmatpush1.msra.mxu0 %v790
        %808 = vmatprep.subr.mxu0 0.0
        %809 = vmatpush1.msra.mxu0 %v791
        %810 = vmatprep.subr.mxu0 0.0
        %811 = vmatpush1.msra.mxu0 %v792
        %812 = vmatprep.subr.mxu0 0.0
        %813 = vmatpush1.msra.mxu0 %v793
        %814 = vmatprep.subr.mxu0 0.0
        %815 = vmatpush1.msra.mxu0 %v794
        %816 = vmatprep.subr.mxu0 0.0
        %817 = vmatpush1.msra.mxu0 %v795
        %818 = vmatprep.subr.mxu0 0.0
        %819 = vmatpush1.msra.mxu0 0.0
        %820 = vmatprep.subr.mxu0 0.0
        %821 = vmatpush1.msra.mxu0 0.0
        %822 = vmatprep.subr.mxu0 0.0
        %823 = vmatpush1.msra.mxu0 0.0
        %824 = vmatprep.subr.mxu0 0.0
        %825 = vmatpush1.msra.mxu0 0.0
        %826 = vmatprep.subr.mxu0 0.0
        %827 = vmatpush1.msra.mxu0 0.0
        %828 = vmatprep.subr.mxu0 0.0
        %829 = vmatpush1.msra.mxu0 0.0
        %830 = vmatprep.subr.mxu0 0.0
        %831 = vmatpush1.msra.mxu0 0.0
        %832 = vmatprep.subr.mxu0 0.0
        %833 = vmatpush1.msra.mxu0 0.0
        %834 = vmatprep.subr.mxu0 0.0
        %835 = vmatpush1.msra.mxu0 0.0
        %836 = vmatprep.subr.mxu0 0.0
        %837 = vmatpush1.msra.mxu0 0.0
        %838 = vmatprep.subr.mxu0 0.0
        %839 = vmatpush1.msra.mxu0 0.0
        %840 = vmatprep.subr.mxu0 0.0
        %841 = vmatpush1.msra.mxu0 0.0
        %842 = vmatprep.subr.mxu0 0.0
        %843 = vmatpush1.msra.mxu0 0.0
        %844 = vmatprep.subr.mxu0 0.0
        %845 = vmatpush1.msra.mxu0 0.0
        %846 = vmatprep.subr.mxu0 0.0
        %847 = vmatpush1.msra.mxu0 0.0
        %848 = vmatprep.subr.mxu0 0.0
        %849 = vmatpush1.msra.mxu0 0.0
        %850 = vmatprep.subr.mxu0 0.0
        %851 = vmatpush1.msra.mxu0 0.0
        %852 = vmatprep.subr.mxu0 0.0
        %853 = vmatpush1.msra.mxu0 0.0
        %854 = vmatprep.subr.mxu0 0.0
        %855 = vmatpush1.msra.mxu0 0.0
        %856 = vmatprep.subr.mxu0 0.0
        %857 = vmatpush1.msra.mxu0 0.0
        %858 = vmatprep.subr.mxu0 0.0
        %859 = vmatpush1.msra.mxu0 0.0
        %860 = vmatprep.subr.mxu0 0.0
        %861 = vmatpush1.msra.mxu0 0.0
        %862 = vmatprep.subr.mxu0 0.0
        %863 = vmatpush1.msra.mxu0 0.0
        %864 = vmatprep.subr.mxu0 0.0
        %865 = vmatpush1.msra.mxu0 0.0
        %866 = vmatprep.mubr.f32.mxu0 0.0
        %867 = vmatmul.mubr.f32.gmra.mrb[0].mxu0 %v797
        %v868 = vpop.f32.mrb[0].mxu0
        %v869 = vadd.f32 0.0, %v868
        %v870 = vpop.f32.mrb[0].mxu0
        %871 = vmatprep.mubr.f32.mxu0 0.0
        %872 = vmatmul.mubr.f32.gmra.mrb[0].mxu0 %v800
        %v873 = vpop.f32.mrb[0].mxu0
        %v874 = vadd.f32 0.0, %v873
        %v875 = vpop.f32.mrb[0].mxu0
        %876 = vdwg.mxu0
        %vm877 = vcmask 261120
        %878 = vst.msk [vmem:[#allocation4] sm:$0xff] %vm877, %v869
        %879 = vst.msk [vmem:[#allocation4 + $0x8] sm:$0xff] %vm877, %v874
      $region100: #{encoder_decoder_forward.4} parent=95 // pred_fallthru
        _
      %v880 = vld [vmem:[#allocation2] sm:$0x3]
      %v881 = vld [vmem:[#allocation3] sm:$0x3]
      %v882 = vld [vmem:[%s593] sm:$0x3]
      %v883 = vld [vmem:[%s10] sm:$0xff]
      %v884 = vld [vmem:[%s10 + $0x8] sm:$0xff]
      %v885 = vld [vmem:[%s10 + $0x10] sm:$0xff]
      %v886 = vld [vmem:[%s10 + $0x18] sm:$0xff]
      %vm887 = vcmask 261120
      %v889 = vsel %vm887, %v880, 0
      %891 = vmatprep.subr.mxu0 0.0
      %892 = vmatpush1.msra.mxu0 %v883
      %893 = vmatprep.subr.mxu0 0.0
      %894 = vmatpush1.msra.mxu0 %v884
      %895 = vmatprep.subr.mxu0 0.0
      %896 = vmatpush1.msra.mxu0 %v885
      %897 = vmatprep.subr.mxu0 0.0
      %898 = vmatpush1.msra.mxu0 %v886
      %899 = vmatprep.subr.mxu0 0.0
      %900 = vmatpush1.msra.mxu0 0.0
      %901 = vmatprep.subr.mxu0 0.0
      %902 = vmatpush1.msra.mxu0 0.0
      %903 = vmatprep.subr.mxu0 0.0
      %904 = vmatpush1.msra.mxu0 0.0
      %905 = vmatprep.subr.mxu0 0.0
      %906 = vmatpush1.msra.mxu0 0.0
      %907 = vmatprep.subr.mxu0 0.0
      %908 = vmatpush1.msra.mxu0 0.0
      %909 = vmatprep.subr.mxu0 0.0
      %910 = vmatpush1.msra.mxu0 0.0
      %911 = vmatprep.subr.mxu0 0.0
      %912 = vmatpush1.msra.mxu0 0.0
      %913 = vmatprep.subr.mxu0 0.0
      %914 = vmatpush1.msra.mxu0 0.0
      %915 = vmatprep.subr.mxu0 0.0
      %916 = vmatpush1.msra.mxu0 0.0
      %917 = vmatprep.subr.mxu0 0.0
      %918 = vmatpush1.msra.mxu0 0.0
      %919 = vmatprep.subr.mxu0 0.0
      %920 = vmatpush1.msra.mxu0 0.0
      %921 = vmatprep.subr.mxu0 0.0
      %922 = vmatpush1.msra.mxu0 0.0
      %923 = vmatprep.subr.mxu0 0.0
      %924 = vmatpush1.msra.mxu0 0.0
      %925 = vmatprep.subr.mxu0 0.0
      %926 = vmatpush1.msra.mxu0 0.0
      %927 = vmatprep.subr.mxu0 0.0
      %928 = vmatpush1.msra.mxu0 0.0
      %929 = vmatprep.subr.mxu0 0.0
      %930 = vmatpush1.msra.mxu0 0.0
      %931 = vmatprep.subr.mxu0 0.0
      %932 = vmatpush1.msra.mxu0 0.0
      %933 = vmatprep.subr.mxu0 0.0
      %934 = vmatpush1.msra.mxu0 0.0
      %935 = vmatprep.subr.mxu0 0.0
      %936 = vmatpush1.msra.mxu0 0.0
      %937 = vmatprep.subr.mxu0 0.0
      %938 = vmatpush1.msra.mxu0 0.0
      %939 = vmatprep.subr.mxu0 0.0
      %940 = vmatpush1.msra.mxu0 0.0
      %941 = vmatprep.subr.mxu0 0.0
      %942 = vmatpush1.msra.mxu0 0.0
      %943 = vmatprep.subr.mxu0 0.0
      %944 = vmatpush1.msra.mxu0 0.0
      %945 = vmatprep.subr.mxu0 0.0
      %946 = vmatpush1.msra.mxu0 0.0
      %947 = vmatprep.subr.mxu0 0.0
      %948 = vmatpush1.msra.mxu0 0.0
      %949 = vmatprep.subr.mxu0 0.0
      %950 = vmatpush1.msra.mxu0 0.0
      %951 = vmatprep.subr.mxu0 0.0
      %952 = vmatpush1.msra.mxu0 0.0
      %953 = vmatprep.subr.mxu0 0.0
      %954 = vmatpush1.msra.mxu0 0.0
      %955 = vmatprep.mubr.f32.mxu0 0.0
      %956 = vmatmul.mubr.f32.gmra.mrb[0].mxu0 %v889
      %v957 = vpop.f32.mrb[0].mxu0
      %v958 = vadd.f32 0.0, %v957
      %v959 = vpop.f32.mrb[0].mxu0
      %960 = vdwg.mxu0
      %v963 = vunpack.c.l.s4 1966171168
      %v964 = vunpack.c.0.s8 %v963
      %v965 = vlaneseq
      %v966 = vshrl.u32 %v965, 7
      %v967 = vsub.s32 %v964, %v966
      %v968 = vrot.slane %v958, %v967
      %v969 = vcombine.high %v968, %v968
      %v971 = vunpack.c.l.s4 1966171168
      %v972 = vunpack.c.0.s8 %v971
      %v973 = vlaneseq
      %v974 = vshrl.u32 %v973, 7
      %v975 = vsub.s32 %v972, %v974
      %v976 = vrot.slane %v968, %v975
      %v978 = vunpack.c.l.s4 1966171168
      %v979 = vunpack.c.0.s8 %v978
      %v980 = vlaneseq
      %v981 = vshrl.u32 %v980, 7
      %v982 = vsub.s32 %v979, %v981
      %v983 = vrot.slane %v969, %v982
      %v984 = vld [vmem:[#allocation4] sm:$0xff]
      %v985 = vld [vmem:[#allocation4 + $0x8] sm:$0xff]
      %v986 = vlaneseq
      %v987 = vshrl.u32 %v986, 7
      %v988 = vsub.s32 0, %v987
      %v989 = vrot.slane %v976, %v988
      %v990 = vlaneseq
      %v991 = vshrl.u32 %v990, 7
      %v992 = vsub.s32 0, %v991
      %v993 = vrot.slane %v983, %v992
      %v996 = vadd.f32 %v989, %v984
      %v997 = vadd.f32 %v993, %v985
      %v998 = vtanh.pop %v996
      %v999 = vtanh.pop %v997
      %v1000 = vld [vmem:[%s11] sm:$0x1]
      %v1002 = vlaneseq
      %v1003 = vshrl.u32 %v1002, 7
      %v1004 = vsub.s32 0, %v1003
      %v1005 = vrot.slane %v1000, %v1004
      %v1007 = vmul.f32 %v998, %v1005
      %v1008 = vmul.f32 %v999, %v1005
      %v1009 = vsel %vm887, %v1007, 0.0
      %1010 = vadd.xlane.f32.xlu0 %v1009
      %v1011 = vpop.xlane.xlu0 %1010
      %v1012 = vsel %vm887, %v1008, 0.0
      %1013 = vadd.xlane.f32.xlu0 %v1012
      %v1014 = vpop.xlane.xlu0 %1013
      %v1015 = vld [vmem:[%s2] sm:$0x3]
      %vm1016 = vcmp.gt.f32.partialorder %v1015, 0.5
      %v1019 = vlaneseq
      %v1020 = vand.u32 %v1019, 127
      %v1021 = vlaneseq
      %v1022 = vshrl.u32 %v1021, 7
      %v1023 = vsub.s32 %v1020, %v1022
      %v1024 = vrot.slane %v1011, %v1023
      %v1025 = vlaneseq
      %v1026 = vshrl.u32 %v1025, 7
      %v1027 = vsub.s32 %v1020, %v1026
      %v1028 = vrot.slane %v1014, %v1027
      %vm1029 = vcmask 1041409
      %v1030 = vsel %vm1029, %v1028, %v1024
      %v1032 = vsel %vm1016, %v1030, -1e+30
      %vm1033 = vcmask 58368
      %v1034 = vsel %vm1033, %v1032, -inf
      %1035 = vmax.xlane.f32.xlu0 %v1034
      %v1036 = vpop.xlane.xlu0 %1035
      %v1037 = vsub.f32 %v1032, %v1036
      %v1038 = vmul.f32 %v1037, 1.442695
      %v1039 = vpow.pop %v1038
      %v1040 = vsel %vm1033, %v1039, 0.0
      %1041 = vadd.xlane.f32.xlu0 %v1040
      %v1042 = vpop.xlane.xlu0 %1041
      %v1043 = vrcp.pop %v1042
      %v1044 = vmul.f32 %v1039, %v1043
      %v1045 = vlaneseq
      %v1046 = vshrl.u32 %v1045, 7
      %v1047 = vsub.s32 0, %v1046
      %v1048 = vrot.slane %v1044, %v1047
      %1050 = vbcast.lane.b32.xlu0 %v1048, 256
      %v1051 = vpop.permute.xlu0 %1050
      %v1052 = vlaneseq
      %v1053 = vshrl.u32 %v1052, 7
      %v1054 = vsub.s32 1, %v1053
      %v1055 = vrot.slane %v1044, %v1054
      %1057 = vbcast.lane.b32.xlu0 %v1055, 256
      %v1058 = vpop.permute.xlu0 %1057
      %v1059 = vld [vmem:[%s1] sm:$0xff]
      %v1060 = vld [vmem:[%s1 + $0x8] sm:$0xff]
      %v1061 = vmul.f32 %v1051, %v1059
      %v1062 = vmul.f32 %v1058, %v1060
      %vm1063 = vcmask 523264
      %v1064 = vsel %vm1063, %v1061, 0.0
      %v1065 = vrot.slane %v1064, 4
      %v1066 = vadd.f32 %v1064, %v1065
      %v1067 = vrot.slane %v1066, 2
      %v1068 = vadd.f32 %v1066, %v1067
      %v1069 = vrot.slane %v1068, 1
      %v1070 = vadd.f32 %v1068, %v1069
      %v1071 = vsel %vm1063, %v1062, 0.0
      %v1072 = vrot.slane %v1071, 4
      %v1073 = vadd.f32 %v1071, %v1072
      %v1074 = vrot.slane %v1073, 2
      %v1075 = vadd.f32 %v1073, %v1074
      %v1076 = vrot.slane %v1075, 1
      %v1077 = vadd.f32 %v1075, %v1076
      %v1078 = vld [vmem:[%s12] sm:$0xff]
      %v1079 = vld [vmem:[%s12 + $0x8] sm:$0xff]
      %v1080 = vld [vmem:[%s12 + $0x10] sm:$0xff]
      %v1081 = vld [vmem:[%s12 + $0x18] sm:$0xff]
      %v1082 = vld [vmem:[%s13] sm:$0xff]
      %v1083 = vld [vmem:[%s13 + $0x8] sm:$0xff]
      %v1084 = vld [vmem:[%s13 + $0x10] sm:$0xff]
      %v1085 = vld [vmem:[%s13 + $0x18] sm:$0xff]
      %v1086 = vld [vmem:[%s13 + $0x20] sm:$0xff]
      %v1087 = vld [vmem:[%s13 + $0x28] sm:$0xff]
      %v1088 = vld [vmem:[%s13 + $0x30] sm:$0xff]
      %v1089 = vld [vmem:[%s13 + $0x38] sm:$0xff]
      %v1092 = vsel %vm1029, %v1077, %v1070
      %v1093 = vsel %vm1063, %v1092, 0
      %1095 = vmatprep.subr.mxu0 0.0
      %1096 = vmatpush1.msra.mxu0 %v1082
      %1097 = vmatprep.subr.mxu0 0.0
      %1098 = vmatpush1.msra.mxu0 %v1083
      %1099 = vmatprep.subr.mxu0 0.0
      %1100 = vmatpush1.msra.mxu0 %v1084
      %1101 = vmatprep.subr.mxu0 0.0
      %1102 = vmatpush1.msra.mxu0 %v1085
      %1103 = vmatprep.subr.mxu0 0.0
      %1104 = vmatpush1.msra.mxu0 %v1086
      %1105 = vmatprep.subr.mxu0 0.0
      %1106 = vmatpush1.msra.mxu0 %v1087
      %1107 = vmatprep.subr.mxu0 0.0
      %1108 = vmatpush1.msra.mxu0 %v1088
      %1109 = vmatprep.subr.mxu0 0.0
      %1110 = vmatpush1.msra.mxu0 %v1089
      %1111 = vmatprep.subr.mxu0 0.0
      %1112 = vmatpush1.msra.mxu0 0.0
      %1113 = vmatprep.subr.mxu0 0.0
      %1114 = vmatpush1.msra.mxu0 0.0
      %1115 = vmatprep.subr.mxu0 0.0
      %1116 = vmatpush1.msra.mxu0 0.0
      %1117 = vmatprep.subr.mxu0 0.0
      %1118 = vmatpush1.msra.mxu0 0.0
      %1119 = vmatprep.subr.mxu0 0.0
      %1120 = vmatpush1.msra.mxu0 0.0
      %1121 = vmatprep.subr.mxu0 0.0
      %1122 = vmatpush1.msra.mxu0 0.0
      %1123 = vmatprep.subr.mxu0 0.0
      %1124 = vmatpush1.msra.mxu0 0.0
      %1125 = vmatprep.subr.mxu0 0.0
      %1126 = vmatpush1.msra.mxu0 0.0
      %1127 = vmatprep.subr.mxu0 0.0
      %1128 = vmatpush1.msra.mxu0 0.0
      %1129 = vmatprep.subr.mxu0 0.0
      %1130 = vmatpush1.msra.mxu0 0.0
      %1131 = vmatprep.subr.mxu0 0.0
      %1132 = vmatpush1.msra.mxu0 0.0
      %1133 = vmatprep.subr.mxu0 0.0
      %1134 = vmatpush1.msra.mxu0 0.0
      %1135 = vmatprep.subr.mxu0 0.0
      %1136 = vmatpush1.msra.mxu0 0.0
      %1137 = vmatprep.subr.mxu0 0.0
      %1138 = vmatpush1.msra.mxu0 0.0
      %1139 = vmatprep.subr.mxu0 0.0
      %1140 = vmatpush1.msra.mxu0 0.0
      %1141 = vmatprep.subr.mxu0 0.0
      %1142 = vmatpush1.msra.mxu0 0.0
      %1143 = vmatprep.subr.mxu0 0.0
      %1144 = vmatpush1.msra.mxu0 0.0
      %1145 = vmatprep.subr.mxu0 0.0
      %1146 = vmatpush1.msra.mxu0 0.0
      %1147 = vmatprep.subr.mxu0 0.0
      %1148 = vmatpush1.msra.mxu0 0.0
      %1149 = vmatprep.subr.mxu0 0.0
      %1150 = vmatpush1.msra.mxu0 0.0
      %1151 = vmatprep.subr.mxu0 0.0
      %1152 = vmatpush1.msra.mxu0 0.0
      %1153 = vmatprep.subr.mxu0 0.0
      %1154 = vmatpush1.msra.mxu0 0.0
      %1155 = vmatprep.subr.mxu0 0.0
      %1156 = vmatpush1.msra.mxu0 0.0
      %1157 = vmatprep.subr.mxu0 0.0
      %1158 = vmatpush1.msra.mxu0 0.0
      %1159 = vmatprep.mubr.f32.mxu0 0.0
      %1160 = vmatmul.mubr.f32.gmra.mrb[0].mxu0 %v1093
      %v1161 = vpop.f32.mrb[0].mxu0
      %v1162 = vadd.f32 0.0, %v1161
      %v1163 = vpop.f32.mrb[0].mxu0
      %1164 = vdwg.mxu0
      %v1166 = vsel %vm887, %v882, 0
      %1168 = vmatprep.subr.mxu0 0.0
      %1169 = vmatpush1.msra.mxu0 %v1078
      %1170 = vmatprep.subr.mxu0 0.0
      %1171 = vmatpush1.msra.mxu0 %v1079
      %1172 = vmatprep.subr.mxu0 0.0
      %1173 = vmatpush1.msra.mxu0 %v1080
      %1174 = vmatprep.subr.mxu0 0.0
      %1175 = vmatpush1.msra.mxu0 %v1081
      %1176 = vmatprep.subr.mxu0 0.0
      %1177 = vmatpush1.msra.mxu0 0.0
      %1178 = vmatprep.subr.mxu0 0.0
      %1179 = vmatpush1.msra.mxu0 0.0
      %1180 = vmatprep.subr.mxu0 0.0
      %1181 = vmatpush1.msra.mxu0 0.0
      %1182 = vmatprep.subr.mxu0 0.0
      %1183 = vmatpush1.msra.mxu0 0.0
      %1184 = vmatprep.subr.mxu0 0.0
      %1185 = vmatpush1.msra.mxu0 0.0
      %1186 = vmatprep.subr.mxu0 0.0
      %1187 = vmatpush1.msra.mxu0 0.0
      %1188 = vmatprep.subr.mxu0 0.0
      %1189 = vmatpush1.msra.mxu0 0.0
      %1190 = vmatprep.subr.mxu0 0.0
      %1191 = vmatpush1.msra.mxu0 0.0
      %1192 = vmatprep.subr.mxu0 0.0
      %1193 = vmatpush1.msra.mxu0 0.0
      %1194 = vmatprep.subr.mxu0 0.0
      %1195 = vmatpush1.msra.mxu0 0.0
      %1196 = vmatprep.subr.mxu0 0.0
      %1197 = vmatpush1.msra.mxu0 0.0
      %1198 = vmatprep.subr.mxu0 0.0
      %1199 = vmatpush1.msra.mxu0 0.0
      %1200 = vmatprep.subr.mxu0 0.0
      %1201 = vmatpush1.msra.mxu0 0.0
      %1202 = vmatprep.subr.mxu0 0.0
      %1203 = vmatpush1.msra.mxu0 0.0
      %1204 = vmatprep.subr.mxu0 0.0
      %1205 = vmatpush1.msra.mxu0 0.0
      %1206 = vmatprep.subr.mxu0 0.0
      %1207 = vmatpush1.msra.mxu0 0.0
      %1208 = vmatprep.subr.mxu0 0.0
      %1209 = vmatpush1.msra.mxu0 0.0
      %1210 = vmatprep.subr.mxu0 0.0
      %1211 = vmatpush1.msra.mxu0 0.0
      %1212 = vmatprep.subr.mxu0 0.0
      %1213 = vmatpush1.msra.mxu0 0.0
      %1214 = vmatprep.subr.mxu0 0.0
      %1215 = vmatpush1.msra.mxu0 0.0
      %1216 = vmatprep.subr.mxu0 0.0
      %1217 = vmatpush1.msra.mxu0 0.0
      %1218 = vmatprep.subr.mxu0 0.0
      %1219 = vmatpush1.msra.mxu0 0.0
      %1220 = vmatprep.subr.mxu0 0.0
      %1221 = vmatpush1.msra.mxu0 0.0
      %1222 = vmatprep.subr.mxu0 0.0
      %1223 = vmatpush1.msra.mxu0 0.0
      %1224 = vmatprep.subr.mxu0 0.0
      %1225 = vmatpush1.msra.mxu0 0.0
      %1226 = vmatprep.subr.mxu0 0.0
      %1227 = vmatpush1.msra.mxu0 0.0
      %1228 = vmatprep.subr.mxu0 0.0
      %1229 = vmatpush1.msra.mxu0 0.0
      %1230 = vmatprep.subr.mxu0 0.0
      %1231 = vmatpush1.msra.mxu0 0.0
      %1232 = vmatprep.mubr.f32.mxu0 0.0
      %1233 = vmatmul.mubr.f32.gmra.mrb[0].mxu0 %v1166
      %v1234 = vpop.f32.mrb[0].mxu0
      %v1235 = vadd.f32 %v1162, %v1234
      %v1236 = vpop.f32.mrb[0].mxu0
      %1237 = vdwg.mxu0
      %v1238 = vld [vmem:[%s14] sm:$0xff]
      %v1239 = vld [vmem:[%s14 + $0x8] sm:$0xff]
      %v1240 = vld [vmem:[%s14 + $0x10] sm:$0xff]
      %v1241 = vld [vmem:[%s14 + $0x18] sm:$0xff]
      %1242 = vmatprep.subr.mxu0 0.0
      %1243 = vmatpush1.msra.mxu0 %v1238
      %1244 = vmatprep.subr.mxu0 0.0
      %1245 = vmatpush1.msra.mxu0 %v1239
      %1246 = vmatprep.subr.mxu0 0.0
      %1247 = vmatpush1.msra.mxu0 %v1240
      %1248 = vmatprep.subr.mxu0 0.0
      %1249 = vmatpush1.msra.mxu0 %v1241
      %1250 = vmatprep.subr.mxu0 0.0
      %1251 = vmatpush1.msra.mxu0 0.0
      %1252 = vmatprep.subr.mxu0 0.0
      %1253 = vmatpush1.msra.mxu0 0.0
      %1254 = vmatprep.subr.mxu0 0.0
      %1255 = vmatpush1.msra.mxu0 0.0
      %1256 = vmatprep.subr.mxu0 0.0
      %1257 = vmatpush1.msra.mxu0 0.0
      %1258 = vmatprep.subr.mxu0 0.0
      %1259 = vmatpush1.msra.mxu0 0.0
      %1260 = vmatprep.subr.mxu0 0.0
      %1261 = vmatpush1.msra.mxu0 0.0
      %1262 = vmatprep.subr.mxu0 0.0
      %1263 = vmatpush1.msra.mxu0 0.0
      %1264 = vmatprep.subr.mxu0 0.0
      %1265 = vmatpush1.msra.mxu0 0.0
      %1266 = vmatprep.subr.mxu0 0.0
      %1267 = vmatpush1.msra.mxu0 0.0
      %1268 = vmatprep.subr.mxu0 0.0
      %1269 = vmatpush1.msra.mxu0 0.0
      %1270 = vmatprep.subr.mxu0 0.0
      %1271 = vmatpush1.msra.mxu0 0.0
      %1272 = vmatprep.subr.mxu0 0.0
      %1273 = vmatpush1.msra.mxu0 0.0
      %1274 = vmatprep.subr.mxu0 0.0
      %1275 = vmatpush1.msra.mxu0 0.0
      %1276 = vmatprep.subr.mxu0 0.0
      %1277 = vmatpush1.msra.mxu0 0.0
      %1278 = vmatprep.subr.mxu0 0.0
      %1279 = vmatpush1.msra.mxu0 0.0
      %1280 = vmatprep.subr.mxu0 0.0
      %1281 = vmatpush1.msra.mxu0 0.0
      %1282 = vmatprep.subr.mxu0 0.0
      %1283 = vmatpush1.msra.mxu0 0.0
      %1284 = vmatprep.subr.mxu0 0.0
      %1285 = vmatpush1.msra.mxu0 0.0
      %1286 = vmatprep.subr.mxu0 0.0
      %1287 = vmatpush1.msra.mxu0 0.0
      %1288 = vmatprep.subr.mxu0 0.0
      %1289 = vmatpush1.msra.mxu0 0.0
      %1290 = vmatprep.subr.mxu0 0.0
      %1291 = vmatpush1.msra.mxu0 0.0
      %1292 = vmatprep.subr.mxu0 0.0
      %1293 = vmatpush1.msra.mxu0 0.0
      %1294 = vmatprep.subr.mxu0 0.0
      %1295 = vmatpush1.msra.mxu0 0.0
      %1296 = vmatprep.subr.mxu0 0.0
      %1297 = vmatpush1.msra.mxu0 0.0
      %1298 = vmatprep.subr.mxu0 0.0
      %1299 = vmatpush1.msra.mxu0 0.0
      %1300 = vmatprep.subr.mxu0 0.0
      %1301 = vmatpush1.msra.mxu0 0.0
      %1302 = vmatprep.subr.mxu0 0.0
      %1303 = vmatpush1.msra.mxu0 0.0
      %1304 = vmatprep.subr.mxu0 0.0
      %1305 = vmatpush1.msra.mxu0 0.0
      %1306 = vmatprep.mubr.f32.mxu0 0.0
      %1307 = vmatmul.mubr.f32.gmra.mrb[0].mxu0 %v889
      %v1308 = vpop.f32.mrb[0].mxu0
      %v1309 = vadd.f32 0.0, %v1308
      %v1310 = vpop.f32.mrb[0].mxu0
      %1311 = vdwg.mxu0
      %v1312 = vadd.f32 %v1235, %v1309
      %v1313 = vld [vmem:[%s15] sm:$0x1]
      %v1315 = vlaneseq
      %v1316 = vshrl.u32 %v1315, 7
      %v1317 = vsub.s32 0, %v1316
      %v1318 = vrot.slane %v1313, %v1317
      %v1320 = vadd.f32 %v1312, %v1318
      %v1321 = vxor.u32 %v1320, 2147483648
      %v1322 = vmul.f32 %v1321, 1.442695
      %v1323 = vpow.pop %v1322
      %v1324 = vadd.f32 %v1323, 1.0
      %v1325 = vrcp.pop %v1324
      %v1326 = vmul.f32 1.0, %v1325
      %v1327 = vtanh.pop %v1320
      %1329 = vrot.lane.b32.xlu0 %v881, 32
      %v1330 = vpop.permute.xlu0 %1329
      %v1332 = vmul.f32 %v1326, %v1330
      %1334 = vrot.lane.b32.xlu0 %v1327, 64
      %v1335 = vpop.permute.xlu0 %1334
      %v1337 = vmul.f32 %v1326, %v1335
      %1339 = vrot.lane.b32.xlu0 %v1337, 32
      %v1340 = vpop.permute.xlu0 %1339
      %v1342 = vadd.f32 %v1332, %v1340
      %v1343 = vtanh.pop %v1342
      %1345 = vrot.lane.b32.xlu0 %v1343, 64
      %v1346 = vpop.permute.xlu0 %1345
      %v1348 = vmul.f32 %v1326, %v1346
      %1350 = vrot.lane.b32.xlu0 %v1348, 32
      %v1351 = vpop.permute.xlu0 %1350
      %vm1353 = vcmask 254976
      %1354 = vst.msk [vmem:[#allocation2] sm:$0x3] %vm1353, %v1351
      %1356 = vrot.lane.b32.xlu0 %v1342, 96
      %v1357 = vpop.permute.xlu0 %1356
      %1359 = vst.msk [vmem:[#allocation3] sm:$0x3] %vm1353, %v1357
      %v1360 = vld [vmem:[%s16] sm:$0xff]
      %v1361 = vld [vmem:[%s16 + $0x8] sm:$0xff]
      %v1362 = vld [vmem:[%s16 + $0x10] sm:$0xff]
      %v1363 = vld [vmem:[%s16 + $0x18] sm:$0xff]
      %v1364 = vld [vmem:[%s17] sm:$0xff]
      %v1365 = vld [vmem:[%s17 + $0x8] sm:$0xff]
      %v1366 = vld [vmem:[%s17 + $0x10] sm:$0xff]
      %v1367 = vld [vmem:[%s17 + $0x18] sm:$0xff]
      %v1368 = vsel %vm887, %v1351, 0
      %1370 = vmatprep.subr.mxu0 0.0
      %1371 = vmatpush1.msra.mxu0 %v1364
      %1372 = vmatprep.subr.mxu0 0.0
      %1373 = vmatpush1.msra.mxu0 %v1365
      %1374 = vmatprep.subr.mxu0 0.0
      %1375 = vmatpush1.msra.mxu0 %v1366
      %1376 = vmatprep.subr.mxu0 0.0
      %1377 = vmatpush1.msra.mxu0 %v1367
      %1378 = vmatprep.subr.mxu0 0.0
      %1379 = vmatpush1.msra.mxu0 0.0
      %1380 = vmatprep.subr.mxu0 0.0
      %1381 = vmatpush1.msra.mxu0 0.0
      %1382 = vmatprep.subr.mxu0 0.0
      %1383 = vmatpush1.msra.mxu0 0.0
      %1384 = vmatprep.subr.mxu0 0.0
      %1385 = vmatpush1.msra.mxu0 0.0
      %1386 = vmatprep.subr.mxu0 0.0
      %1387 = vmatpush1.msra.mxu0 0.0
      %1388 = vmatprep.subr.mxu0 0.0
      %1389 = vmatpush1.msra.mxu0 0.0
      %1390 = vmatprep.subr.mxu0 0.0
      %1391 = vmatpush1.msra.mxu0 0.0
      %1392 = vmatprep.subr.mxu0 0.0
      %1393 = vmatpush1.msra.mxu0 0.0
      %1394 = vmatprep.subr.mxu0 0.0
      %1395 = vmatpush1.msra.mxu0 0.0
      %1396 = vmatprep.subr.mxu0 0.0
      %1397 = vmatpush1.msra.mxu0 0.0
      %1398 = vmatprep.subr.mxu0 0.0
      %1399 = vmatpush1.msra.mxu0 0.0
      %1400 = vmatprep.subr.mxu0 0.0
      %1401 = vmatpush1.msra.mxu0 0.0
      %1402 = vmatprep.subr.mxu0 0.0
      %1403 = vmatpush1.msra.mxu0 0.0
      %1404 = vmatprep.subr.mxu0 0.0
      %1405 = vmatpush1.msra.mxu0 0.0
      %1406 = vmatprep.subr.mxu0 0.0
      %1407 = vmatpush1.msra.mxu0 0.0
      %1408 = vmatprep.subr.mxu0 0.0
      %1409 = vmatpush1.msra.mxu0 0.0
      %1410 = vmatprep.subr.mxu0 0.0
      %1411 = vmatpush1.msra.mxu0 0.0
      %1412 = vmatprep.subr.mxu0 0.0
      %1413 = vmatpush1.msra.mxu0 0.0
      %1414 = vmatprep.subr.mxu0 0.0
      %1415 = vmatpush1.msra.mxu0 0.0
      %1416 = vmatprep.subr.mxu0 0.0
      %1417 = vmatpush1.msra.mxu0 0.0
      %1418 = vmatprep.subr.mxu0 0.0
      %1419 = vmatpush1.msra.mxu0 0.0
      %1420 = vmatprep.subr.mxu0 0.0
      %1421 = vmatpush1.msra.mxu0 0.0
      %1422 = vmatprep.subr.mxu0 0.0
      %1423 = vmatpush1.msra.mxu0 0.0
      %1424 = vmatprep.subr.mxu0 0.0
      %1425 = vmatpush1.msra.mxu0 0.0
      %1426 = vmatprep.subr.mxu0 0.0
      %1427 = vmatpush1.msra.mxu0 0.0
      %1428 = vmatprep.subr.mxu0 0.0
      %1429 = vmatpush1.msra.mxu0 0.0
      %1430 = vmatprep.subr.mxu0 0.0
      %1431 = vmatpush1.msra.mxu0 0.0
      %1432 = vmatprep.subr.mxu0 0.0
      %1433 = vmatpush1.msra.mxu0 0.0
      %1434 = vmatprep.mubr.f32.mxu0 0.0
      %1435 = vmatmul.mubr.f32.gmra.mrb[0].mxu0 %v1368
      %v1436 = vpop.f32.mrb[0].mxu0
      %v1437 = vadd.f32 0.0, %v1436
      %v1438 = vpop.f32.mrb[0].mxu0
      %1439 = vdwg.mxu0
      %1440 = vmatprep.subr.mxu0 0.0
      %1441 = vmatpush1.msra.mxu0 %v1360
      %1442 = vmatprep.subr.mxu0 0.0
      %1443 = vmatpush1.msra.mxu0 %v1361
      %1444 = vmatprep.subr.mxu0 0.0
      %1445 = vmatpush1.msra.mxu0 %v1362
      %1446 = vmatprep.subr.mxu0 0.0
      %1447 = vmatpush1.msra.mxu0 %v1363
      %1448 = vmatprep.subr.mxu0 0.0
      %1449 = vmatpush1.msra.mxu0 0.0
      %1450 = vmatprep.subr.mxu0 0.0
      %1451 = vmatpush1.msra.mxu0 0.0
      %1452 = vmatprep.subr.mxu0 0.0
      %1453 = vmatpush1.msra.mxu0 0.0
      %1454 = vmatprep.subr.mxu0 0.0
      %1455 = vmatpush1.msra.mxu0 0.0
      %1456 = vmatprep.subr.mxu0 0.0
      %1457 = vmatpush1.msra.mxu0 0.0
      %1458 = vmatprep.subr.mxu0 0.0
      %1459 = vmatpush1.msra.mxu0 0.0
      %1460 = vmatprep.subr.mxu0 0.0
      %1461 = vmatpush1.msra.mxu0 0.0
      %1462 = vmatprep.subr.mxu0 0.0
      %1463 = vmatpush1.msra.mxu0 0.0
      %1464 = vmatprep.subr.mxu0 0.0
      %1465 = vmatpush1.msra.mxu0 0.0
      %1466 = vmatprep.subr.mxu0 0.0
      %1467 = vmatpush1.msra.mxu0 0.0
      %1468 = vmatprep.subr.mxu0 0.0
      %1469 = vmatpush1.msra.mxu0 0.0
      %1470 = vmatprep.subr.mxu0 0.0
      %1471 = vmatpush1.msra.mxu0 0.0
      %1472 = vmatprep.subr.mxu0 0.0
      %1473 = vmatpush1.msra.mxu0 0.0
      %1474 = vmatprep.subr.mxu0 0.0
      %1475 = vmatpush1.msra.mxu0 0.0
      %1476 = vmatprep.subr.mxu0 0.0
      %1477 = vmatpush1.msra.mxu0 0.0
      %1478 = vmatprep.subr.mxu0 0.0
      %1479 = vmatpush1.msra.mxu0 0.0
      %1480 = vmatprep.subr.mxu0 0.0
      %1481 = vmatpush1.msra.mxu0 0.0
      %1482 = vmatprep.subr.mxu0 0.0
      %1483 = vmatpush1.msra.mxu0 0.0
      %1484 = vmatprep.subr.mxu0 0.0
      %1485 = vmatpush1.msra.mxu0 0.0
      %1486 = vmatprep.subr.mxu0 0.0
      %1487 = vmatpush1.msra.mxu0 0.0
      %1488 = vmatprep.subr.mxu0 0.0
      %1489 = vmatpush1.msra.mxu0 0.0
      %1490 = vmatprep.subr.mxu0 0.0
      %1491 = vmatpush1.msra.mxu0 0.0
      %1492 = vmatprep.subr.mxu0 0.0
      %1493 = vmatpush1.msra.mxu0 0.0
      %1494 = vmatprep.subr.mxu0 0.0
      %1495 = vmatpush1.msra.mxu0 0.0
      %1496 = vmatprep.subr.mxu0 0.0
      %1497 = vmatpush1.msra.mxu0 0.0
      %1498 = vmatprep.subr.mxu0 0.0
      %1499 = vmatpush1.msra.mxu0 0.0
      %1500 = vmatprep.subr.mxu0 0.0
      %1501 = vmatpush1.msra.mxu0 0.0
      %1502 = vmatprep.subr.mxu0 0.0
      %1503 = vmatpush1.msra.mxu0 0.0
      %1504 = vmatprep.mubr.f32.mxu0 0.0
      %1505 = vmatmul.mubr.f32.gmra.mrb[0].mxu0 %v1166
      %v1506 = vpop.f32.mrb[0].mxu0
      %v1507 = vadd.f32 %v1437, %v1506
      %v1508 = vpop.f32.mrb[0].mxu0
      %1509 = vdwg.mxu0
      %v1510 = vld [vmem:[%s18] sm:$0xff]
      %v1511 = vld [vmem:[%s18 + $0x8] sm:$0xff]
      %v1512 = vld [vmem:[%s18 + $0x10] sm:$0xff]
      %v1513 = vld [vmem:[%s18 + $0x18] sm:$0xff]
      %v1514 = vld [vmem:[%s18 + $0x20] sm:$0xff]
      %v1515 = vld [vmem:[%s18 + $0x28] sm:$0xff]
      %v1516 = vld [vmem:[%s18 + $0x30] sm:$0xff]
      %v1517 = vld [vmem:[%s18 + $0x38] sm:$0xff]
      %1518 = vmatprep.subr.mxu0 0.0
      %1519 = vmatpush1.msra.mxu0 %v1510
      %1520 = vmatprep.subr.mxu0 0.0
      %1521 = vmatpush1.msra.mxu0 %v1511
      %1522 = vmatprep.subr.mxu0 0.0
      %1523 = vmatpush1.msra.mxu0 %v1512
      %1524 = vmatprep.subr.mxu0 0.0
      %1525 = vmatpush1.msra.mxu0 %v1513
      %1526 = vmatprep.subr.mxu0 0.0
      %1527 = vmatpush1.msra.mxu0 %v1514
      %1528 = vmatprep.subr.mxu0 0.0
      %1529 = vmatpush1.msra.mxu0 %v1515
      %1530 = vmatprep.subr.mxu0 0.0
      %1531 = vmatpush1.msra.mxu0 %v1516
      %1532 = vmatprep.subr.mxu0 0.0
      %1533 = vmatpush1.msra.mxu0 %v1517
      %1534 = vmatprep.subr.mxu0 0.0
      %1535 = vmatpush1.msra.mxu0 0.0
      %1536 = vmatprep.subr.mxu0 0.0
      %1537 = vmatpush1.msra.mxu0 0.0
      %1538 = vmatprep.subr.mxu0 0.0
      %1539 = vmatpush1.msra.mxu0 0.0
      %1540 = vmatprep.subr.mxu0 0.0
      %1541 = vmatpush1.msra.mxu0 0.0
      %1542 = vmatprep.subr.mxu0 0.0
      %1543 = vmatpush1.msra.mxu0 0.0
      %1544 = vmatprep.subr.mxu0 0.0
      %1545 = vmatpush1.msra.mxu0 0.0
      %1546 = vmatprep.subr.mxu0 0.0
      %1547 = vmatpush1.msra.mxu0 0.0
      %1548 = vmatprep.subr.mxu0 0.0
      %1549 = vmatpush1.msra.mxu0 0.0
      %1550 = vmatprep.subr.mxu0 0.0
      %1551 = vmatpush1.msra.mxu0 0.0
      %1552 = vmatprep.subr.mxu0 0.0
      %1553 = vmatpush1.msra.mxu0 0.0
      %1554 = vmatprep.subr.mxu0 0.0
      %1555 = vmatpush1.msra.mxu0 0.0
      %1556 = vmatprep.subr.mxu0 0.0
      %1557 = vmatpush1.msra.mxu0 0.0
      %1558 = vmatprep.subr.mxu0 0.0
      %1559 = vmatpush1.msra.mxu0 0.0
      %1560 = vmatprep.subr.mxu0 0.0
      %1561 = vmatpush1.msra.mxu0 0.0
      %1562 = vmatprep.subr.mxu0 0.0
      %1563 = vmatpush1.msra.mxu0 0.0
      %1564 = vmatprep.subr.mxu0 0.0
      %1565 = vmatpush1.msra.mxu0 0.0
      %1566 = vmatprep.subr.mxu0 0.0
      %1567 = vmatpush1.msra.mxu0 0.0
      %1568 = vmatprep.subr.mxu0 0.0
      %1569 = vmatpush1.msra.mxu0 0.0
      %1570 = vmatprep.subr.mxu0 0.0
      %1571 = vmatpush1.msra.mxu0 0.0
      %1572 = vmatprep.subr.mxu0 0.0
      %1573 = vmatpush1.msra.mxu0 0.0
      %1574 = vmatprep.subr.mxu0 0.0
      %1575 = vmatpush1.msra.mxu0 0.0
      %1576 = vmatprep.subr.mxu0 0.0
      %1577 = vmatpush1.msra.mxu0 0.0
      %1578 = vmatprep.subr.mxu0 0.0
      %1579 = vmatpush1.msra.mxu0 0.0
      %1580 = vmatprep.subr.mxu0 0.0
      %1581 = vmatpush1.msra.mxu0 0.0
      %1582 = vmatprep.mubr.f32.mxu0 0.0
      %1583 = vmatmul.mubr.f32.gmra.mrb[0].mxu0 %v1093
      %v1584 = vpop.f32.mrb[0].mxu0
      %v1585 = vadd.f32 0.0, %v1584
      %v1586 = vpop.f32.mrb[0].mxu0
      %1587 = vdwg.mxu0
      %v1588 = vadd.f32 %v1507, %v1585
      %1589 = vst.msk [vmem:[%s597] sm:$0x3] %vm1353, %v1588
      %p1590 = scmp.lt.s32.totalorder %s30, 7
      %s1591 = scalar_select %p1590, %s30, 7
      %s1592 = smul.addr %s1591, 2
      %s1593 = scalar_lea.vmem %s19, %s1592
      // Predicated region
      $region101: #{encoder_decoder_forward.4} parent=95 // pred_check
        %p1594 = pneg %p452
      $region102: #{encoder_decoder_forward.4} parent=95 // pred_check_branch
        %1596 = sbr.rel (%p1594) target = $region104
      $region103: #{encoder_decoder_forward.4} parent=95 // pred_region
        _
      $region104: #{encoder_decoder_forward.4} parent=95 // pred_fallthru
        _
    $region96: #{encoder_decoder_forward.4} parent=5 // pred_fallthru
      _
    %p1597 = scmp.le.s32.totalorder 2, %s25
    // Predicated region
    $region105: #{encoder_decoder_forward.4} parent=5 // pred_check
      %p1598 = pneg %p1597
    $region106: #{encoder_decoder_forward.4} parent=5 // pred_check_branch
      %1600 = sbr.rel (%p1598) target = $region108
    $region107: #{encoder_decoder_forward.4} parent=5 // pred_region
      %s1601 = ssub.s32 %s25, 2
      // Predicated region
      $region109: #{encoder_decoder_forward.4} parent=107 // pred_check
        %p1602 = pneg %p458
      $region110: #{encoder_decoder_forward.4} parent=107 // pred_check_branch
        %1604 = sbr.rel (%p1602) target = $region112
      $region111: #{encoder_decoder_forward.4} parent=107 // pred_region
        %p1605 = scmp.lt.s32.totalorder %s31, 7
        %s1606 = scalar_select %p1605, %s31, 7
        %s1607 = smul.addr %s1606, 2
        %s1608 = scalar_lea.vmem %s19, %s1607
      $region112: #{encoder_decoder_forward.4} parent=107 // pred_fallthru
        _
    $region108: #{encoder_decoder_forward.4} parent=5 // pred_fallthru
      _
  $region6: #{encoder_decoder_forward.4} parent=0 // loop_footer
    %s29 = sadd.s32 1, %s25
  $region7: #{encoder_decoder_forward.4} parent=0 // loop_footer_branch
    %24 = sbr.rel target = $region3
  $region8: #{encoder_decoder_forward.4} parent=0 // loop_exit
    _

</llo_original>
